<compile_context>
chip_gen: v7x
topology: tpu7x:2x2x1
jax: 0.10.0
libtpu: 0.0.40
codegen_flags: <defaults>
</compile_context>

<pallas_src>
import jax
import jax.numpy as jnp
from jax.experimental import pallas as pl
from jax.experimental.pallas import tpu as pltpu

# -------- "opt" hyper-parameters (small, consistent with the module) --------
LATENT_DIM = 32
CHANNELS = 4
IMG_SIZE = 16
HIDDEN = 512
OUT_DIM = CHANNELS * IMG_SIZE * IMG_SIZE  # int(np.prod(img_shape)) = 1024
BATCH = 16
BN_EPS = 1e-5
LRELU_SLOPE = 0.2


def _leaky_relu(x):
    return jnp.where(x > 0, x, LRELU_SLOPE * x)


def decoder_kernel(z_ref,          # (TB, latent)  f32, batch tile
                   w1_ref,         # (latent, 512) bf16, constant block
                   vecs_ref,       # (3, 512)      f32: [b1; gamma; beta]
                   w2_ref,         # (512, 512)    bf16, constant block
                   w3_ref,         # (512, 1024)   bf16, constant block
                   b3_ref,         # (1, 1024)     f32
                   out_ref,        # (TB, 1024)    f32, batch tile
                   h2_ref,         # VMEM scratch (B, 512) f32  (whole batch)
                   bn_ref):        # VMEM scratch (2, 512) f32  (scale; shift)
    phase = pl.program_id(0)
    tile = pl.program_id(1)
    TB = z_ref.shape[0]
    row0 = pl.multiple_of(tile * TB, TB)

    # ---------------- phase 0: Linear1 + LReLU + Linear2, stash h2 ----------
    @pl.when(phase == 0)
    def _():
        b1 = vecs_ref[0:1, :]
        h1 = jnp.dot(z_ref[...].astype(jnp.bfloat16), w1_ref[...],
                     preferred_element_type=jnp.float32)
        h1 = _leaky_relu(h1 + b1)                              # (TB, 512) f32
        h2 = jnp.dot(h1.astype(jnp.bfloat16), w2_ref[...],
                     preferred_element_type=jnp.float32)       # (TB, 512) f32
        # Linear2 bias is omitted: training-mode BatchNorm subtracts the
        # per-batch mean, which cancels any constant bias exactly.
        h2_ref[pl.ds(row0, TB), :] = h2

    # ------------- phase 1, first tile: whole-batch BN statistics -----------
    @pl.when((phase == 1) & (tile == 0))
    def _():
        gamma = vecs_ref[1:2, :]
        beta = vecs_ref[2:3, :]
        h2_all = h2_ref[...]                                   # (B, 512) f32
        mean = jnp.mean(h2_all, axis=0, keepdims=True)         # (1, 512)
        d = h2_all - mean
        var = jnp.mean(d * d, axis=0, keepdims=True)           # two-pass var
        scale = gamma * jax.lax.rsqrt(var + BN_EPS)
        bn_ref[0:1, :] = scale
        bn_ref[1:2, :] = beta - mean * scale

    # ------------- phase 1: normalize + LReLU + Linear3 + Tanh --------------
    @pl.when(phase == 1)
    def _():
        h2 = h2_ref[pl.ds(row0, TB), :]
        h3 = _leaky_relu(h2 * bn_ref[0:1, :] + bn_ref[1:2, :])
        o = jnp.dot(h3.astype(jnp.bfloat16), w3_ref[...],
                    preferred_element_type=jnp.float32)
        out_ref[...] = jnp.tanh(o + b3_ref[...]).astype(out_ref.dtype)


def _pick_tile(batch):
    # Largest tile that divides B, capped at 256 so double-buffered
    # (TB, 1024) f32 output tiles stay small even on v7x (64 MiB VMEM).
    for cand in (256, 128, 64, 32, 16, 8):
        if batch % cand == 0:
            return cand
    return batch


def decoder_forward(z, params, tile_batch=None):
    """z: (B, latent_dim) f32 -> img: (B, C, H, W) f32 (NCHW, like PyTorch)."""
    B = z.shape[0]
    TB = tile_batch if tile_batch is not None else _pick_tile(B)
    assert B % TB == 0, (B, TB)
    num_tiles = B // TB

    in_specs = [
        pl.BlockSpec((TB, LATENT_DIM), lambda p, i: (i, 0)),     # z (per tile)
        pl.BlockSpec((LATENT_DIM, HIDDEN), lambda p, i: (0, 0)), # w1 (constant)
        pl.BlockSpec((3, HIDDEN), lambda p, i: (0, 0)),          # b1/gamma/beta
        pl.BlockSpec((HIDDEN, HIDDEN), lambda p, i: (0, 0)),     # w2 (constant)
        pl.BlockSpec((HIDDEN, OUT_DIM), lambda p, i: (0, 0)),    # w3 (constant)
        pl.BlockSpec((1, OUT_DIM), lambda p, i: (0, 0)),         # b3
    ]
    out_spec = pl.BlockSpec((TB, OUT_DIM), lambda p, i: (i, 0))

    img_flat = pl.pallas_call(
        decoder_kernel,
        out_shape=jax.ShapeDtypeStruct((B, OUT_DIM), jnp.float32),
        grid_spec=pltpu.PrefetchScalarGridSpec(
            num_scalar_prefetch=0,
            grid=(2, num_tiles),                 # (phase, batch tile)
            in_specs=in_specs,
            out_specs=out_spec,
            scratch_shapes=[
                pltpu.VMEM((B, HIDDEN), jnp.float32),   # h2 for the whole batch
                pltpu.VMEM((2, HIDDEN), jnp.float32),   # BN scale / shift
            ],
        ),
        compiler_params=pltpu.CompilerParams(
            # Both axes sequential: BN statistics couple all batch tiles.
            dimension_semantics=("arbitrary", "arbitrary"),
        ),
    )(z, params["w1"], params["vecs"], params["w2"], params["w3"], params["b3"])

    # img_flat.view(B, *img_shape) -> NCHW
    return img_flat.reshape(B, CHANNELS, IMG_SIZE, IMG_SIZE)


def init_params(key):
    """Deterministic init; shapes match nn.Linear / nn.BatchNorm1d.

    Weights stored bf16 (HBM-bandwidth optimization); biases / BN affine f32.
    Linear2's bias is not materialized (exactly cancelled by training-mode BN).
    """
    ks = jax.random.split(key, 6)

    def linear(kw, kb, fan_in, fan_out):
        bound = 1.0 / (fan_in ** 0.5)
        # weight stored transposed vs PyTorch: (in, out) so kernel does x @ W
        w = jax.random.uniform(kw, (fan_in, fan_out), jnp.float32, -bound, bound)
        b = jax.random.uniform(kb, (1, fan_out), jnp.float32, -bound, bound)
        return w.astype(jnp.bfloat16), b

    w1, b1 = linear(ks[0], ks[1], LATENT_DIM, HIDDEN)
    w2, _b2 = linear(ks[2], ks[3], HIDDEN, HIDDEN)   # b2 dropped (see above)
    w3, b3 = linear(ks[4], ks[5], HIDDEN, OUT_DIM)
    gamma = jnp.ones((1, HIDDEN), jnp.float32)       # BatchNorm1d weight
    beta = jnp.zeros((1, HIDDEN), jnp.float32)       # BatchNorm1d bias
    vecs = jnp.concatenate([b1, gamma, beta], axis=0)  # (3, 512) packed
    return dict(w1=w1, vecs=vecs, w2=w2, w3=w3, b3=b3)


def reference_forward(z, params):
    """Pure-JAX f32 reference matching the PyTorch forward (training-mode BN)."""
    f32 = lambda a: a.astype(jnp.float32)
    b1 = params["vecs"][0:1]
    gamma = params["vecs"][1:2]
    beta = params["vecs"][2:3]
    h1 = jax.nn.leaky_relu(z @ f32(params["w1"]) + b1, LRELU_SLOPE)
    h2 = h1 @ f32(params["w2"])
    mean = jnp.mean(h2, axis=0, keepdims=True)
    var = jnp.mean((h2 - mean) ** 2, axis=0, keepdims=True)
    h3 = jax.nn.leaky_relu((h2 - mean) * jax.lax.rsqrt(var + BN_EPS) * gamma + beta,
                           LRELU_SLOPE)
    o = jnp.tanh(h3 @ f32(params["w3"]) + params["b3"])
    return o.reshape(z.shape[0], CHANNELS, IMG_SIZE, IMG_SIZE)


if __name__ == "__main__":
    key = jax.random.PRNGKey(0)
    k_params, k_z = jax.random.split(key)
    params = init_params(k_params)
    z = jax.random.normal(k_z, (BATCH, LATENT_DIM), jnp.float32)

    # tile_batch=8 -> grid (2, 2): exercises the multi-tile BN path at small B.
    img = decoder_forward(z, params, tile_batch=8)
    img = jax.block_until_ready(img)

    assert img.shape == (BATCH, CHANNELS, IMG_SIZE, IMG_SIZE), img.shape
    assert bool(jnp.all(jnp.isfinite(img)))
    assert bool(jnp.all(jnp.abs(img) <= 1.0 + 1e-6))  # tanh range

    ref = reference_forward(z, params)
    max_err = float(jnp.max(jnp.abs(img - ref)))
    assert max_err < 5e-2, max_err  # bf16 weights / MXU vs f32 reference

    print("KERNEL_OK")
</pallas_src>

<mosaic_0001>
module attributes {stable_mosaic.version = 11 : i64} {
  func.func @decoder_kernel(%arg0: i32, %arg1: i32, %arg2: memref<8x32xf32, #tpu.memory_space<vmem>>, %arg3: memref<32x512xbf16, #tpu.memory_space<vmem>>, %arg4: memref<3x512xf32, #tpu.memory_space<vmem>>, %arg5: memref<512x512xbf16, #tpu.memory_space<vmem>>, %arg6: memref<512x1024xbf16, #tpu.memory_space<vmem>>, %arg7: memref<1x1024xf32, #tpu.memory_space<vmem>>, %arg8: memref<8x1024xf32, #tpu.memory_space<vmem>>, %arg9: memref<16x512xf32, #tpu.memory_space<vmem>>, %arg10: memref<2x512xf32, #tpu.memory_space<vmem>>) attributes {dimension_semantics = [#tpu.dimension_semantics<arbitrary>, #tpu.dimension_semantics<arbitrary>], iteration_bounds = array<i64: 2, 2>, scalar_prefetch = 0 : i64, scratch_operands = 2 : i64, tpu.core_type = #tpu.core_type<tc>, window_params = [{transform_indices = @transform_0, window_bounds = array<i64: 8, 32>}, {pipeline_mode = #tpu.pipeline_mode<synchronous>, transform_indices = @transform_1, window_bounds = array<i64: 32, 512>}, {pipeline_mode = #tpu.pipeline_mode<synchronous>, transform_indices = @transform_2, window_bounds = array<i64: 3, 512>}, {pipeline_mode = #tpu.pipeline_mode<synchronous>, transform_indices = @transform_3, window_bounds = array<i64: 512, 512>}, {pipeline_mode = #tpu.pipeline_mode<synchronous>, transform_indices = @transform_4, window_bounds = array<i64: 512, 1024>}, {pipeline_mode = #tpu.pipeline_mode<synchronous>, transform_indices = @transform_5, window_bounds = array<i64: 1, 1024>}, {transform_indices = @transform_6, window_bounds = array<i64: 8, 1024>}]} {
    %c8_i32 = arith.constant 8 : i32
    %0 = arith.muli %arg1, %c8_i32 : i32
    %1 = tpu.assume_multiple %0, 8 : i32
    %c0_i32 = arith.constant 0 : i32
    %2 = arith.cmpi eq, %arg0, %c0_i32 : i32
    %3 = arith.extui %2 : i1 to i32
    %c0_i32_0 = arith.constant 0 : i32
    %4 = arith.cmpi ne, %3, %c0_i32_0 : i32
    scf.if %4 {
      %c0 = arith.constant 0 : index
      %c0_5 = arith.constant 0 : index
      %13 = vector.load %arg4[%c0, %c0_5] : memref<3x512xf32, #tpu.memory_space<vmem>>, vector<1x512xf32>
      %c0_6 = arith.constant 0 : index
      %c0_7 = arith.constant 0 : index
      %14 = vector.load %arg2[%c0_6, %c0_7] : memref<8x32xf32, #tpu.memory_space<vmem>>, vector<8x32xf32>
      %15 = arith.truncf %14 : vector<8x32xf32> to vector<8x32xbf16>
      %c0_8 = arith.constant 0 : index
      %c0_9 = arith.constant 0 : index
      %16 = vector.load %arg3[%c0_8, %c0_9] : memref<32x512xbf16, #tpu.memory_space<vmem>>, vector<32x512xbf16>
      %cst = arith.constant dense<0.000000e+00> : vector<8x512xf32>
      %17 = tpu.matmul %15, %16, %cst {dimension_numbers = #tpu.dot_dimension_numbers<[1], [0], [0], [1], [0, 0, 1, 1], [], []>} : vector<8x32xbf16>, vector<32x512xbf16>, vector<8x512xf32> -> vector<8x512xf32>
      %18 = vector.broadcast %13 : vector<1x512xf32> to vector<8x512xf32>
      %19 = arith.addf %17, %18 : vector<8x512xf32>
      %cst_10 = arith.constant 0.000000e+00 : f32
      %20 = vector.broadcast %cst_10 : f32 to vector<8x512xf32>
      %21 = arith.cmpf ogt, %19, %20 : vector<8x512xf32>
      %cst_11 = arith.constant 2.000000e-01 : f32
      %22 = vector.broadcast %cst_11 : f32 to vector<8x512xf32>
      %23 = arith.mulf %22, %19 : vector<8x512xf32>
      %24 = arith.select %21, %19, %23 : vector<8x512xi1>, vector<8x512xf32>
      %25 = arith.truncf %24 : vector<8x512xf32> to vector<8x512xbf16>
      %c0_12 = arith.constant 0 : index
      %c0_13 = arith.constant 0 : index
      %26 = vector.load %arg5[%c0_12, %c0_13] : memref<512x512xbf16, #tpu.memory_space<vmem>>, vector<512x512xbf16>
      %cst_14 = arith.constant dense<0.000000e+00> : vector<8x512xf32>
      %27 = tpu.matmul %25, %26, %cst_14 {dimension_numbers = #tpu.dot_dimension_numbers<[1], [0], [0], [1], [0, 0, 1, 1], [], []>} : vector<8x512xbf16>, vector<512x512xbf16>, vector<8x512xf32> -> vector<8x512xf32>
      %28 = arith.index_cast %1 : i32 to index
      %c0_15 = arith.constant 0 : index
      %29 = vector.load %arg9[%28, %c0_15] : memref<16x512xf32, #tpu.memory_space<vmem>>, vector<8x512xf32>
      tpu.vector_store %arg9[%28, %c0_15], %27 {strides = array<i32>} : memref<16x512xf32, #tpu.memory_space<vmem>>, vector<8x512xf32>,
    } else {
    }
    %c1_i32 = arith.constant 1 : i32
    %5 = arith.cmpi eq, %arg0, %c1_i32 : i32
    %c0_i32_1 = arith.constant 0 : i32
    %6 = arith.cmpi eq, %arg1, %c0_i32_1 : i32
    %7 = arith.andi %5, %6 : i1
    %8 = arith.extui %7 : i1 to i32
    %c0_i32_2 = arith.constant 0 : i32
    %9 = arith.cmpi ne, %8, %c0_i32_2 : i32
    scf.if %9 {
      %c1 = arith.constant 1 : index
      %c0 = arith.constant 0 : index
      %13 = vector.load %arg4[%c1, %c0] : memref<3x512xf32, #tpu.memory_space<vmem>>, vector<1x512xf32>
      %c2 = arith.constant 2 : index
      %c0_5 = arith.constant 0 : index
      %14 = vector.load %arg4[%c2, %c0_5] : memref<3x512xf32, #tpu.memory_space<vmem>>, vector<1x512xf32>
      %c0_6 = arith.constant 0 : index
      %c0_7 = arith.constant 0 : index
      %15 = vector.load %arg9[%c0_6, %c0_7] : memref<16x512xf32, #tpu.memory_space<vmem>>, vector<16x512xf32>
      %cst = arith.constant dense<0.000000e+00> : vector<512xf32>
      %16 = vector.multi_reduction <add>, %15, %cst [0] : vector<16x512xf32> to vector<512xf32>
      %17 = vector.shape_cast %16 : vector<512xf32> to vector<1x512xf32>
      %cst_8 = arith.constant 1.600000e+01 : f32
      %18 = vector.broadcast %cst_8 : f32 to vector<1x512xf32>
      %19 = arith.divf %17, %18 : vector<1x512xf32>
      %20 = vector.broadcast %19 : vector<1x512xf32> to vector<16x512xf32>
      %21 = arith.subf %15, %20 : vector<16x512xf32>
      %22 = arith.mulf %21, %21 : vector<16x512xf32>
      %cst_9 = arith.constant dense<0.000000e+00> : vector<512xf32>
      %23 = vector.multi_reduction <add>, %22, %cst_9 [0] : vector<16x512xf32> to vector<512xf32>
      %24 = vector.shape_cast %23 : vector<512xf32> to vector<1x512xf32>
      %cst_10 = arith.constant 1.600000e+01 : f32
      %25 = vector.broadcast %cst_10 : f32 to vector<1x512xf32>
      %26 = arith.divf %24, %25 : vector<1x512xf32>
      %cst_11 = arith.constant 9.99999974E-6 : f32
      %27 = vector.broadcast %cst_11 : f32 to vector<1x512xf32>
      %28 = arith.addf %26, %27 : vector<1x512xf32>
      %29 = math.rsqrt %28 : vector<1x512xf32>
      %30 = arith.mulf %13, %29 : vector<1x512xf32>
      %c0_12 = arith.constant 0 : index
      %c0_13 = arith.constant 0 : index
      %31 = vector.load %arg10[%c0_12, %c0_13] : memref<2x512xf32, #tpu.memory_space<vmem>>, vector<1x512xf32>
      tpu.vector_store %arg10[%c0_12, %c0_13], %30 {strides = array<i32>} : memref<2x512xf32, #tpu.memory_space<vmem>>, vector<1x512xf32>,
      %32 = arith.mulf %19, %30 : vector<1x512xf32>
      %33 = arith.subf %14, %32 : vector<1x512xf32>
      %c1_14 = arith.constant 1 : index
      %c0_15 = arith.constant 0 : index
      %34 = vector.load %arg10[%c1_14, %c0_15] : memref<2x512xf32, #tpu.memory_space<vmem>>, vector<1x512xf32>
      tpu.vector_store %arg10[%c1_14, %c0_15], %33 {strides = array<i32>} : memref<2x512xf32, #tpu.memory_space<vmem>>, vector<1x512xf32>,
    } else {
    }
    %c1_i32_3 = arith.constant 1 : i32
    %10 = arith.cmpi eq, %arg0, %c1_i32_3 : i32
    %11 = arith.extui %10 : i1 to i32
    %c0_i32_4 = arith.constant 0 : i32
    %12 = arith.cmpi ne, %11, %c0_i32_4 : i32
    scf.if %12 {
      %13 = arith.index_cast %1 : i32 to index
      %c0 = arith.constant 0 : index
      %14 = vector.load %arg9[%13, %c0] : memref<16x512xf32, #tpu.memory_space<vmem>>, vector<8x512xf32>
      %c0_5 = arith.constant 0 : index
      %c0_6 = arith.constant 0 : index
      %15 = vector.load %arg10[%c0_5, %c0_6] : memref<2x512xf32, #tpu.memory_space<vmem>>, vector<1x512xf32>
      %16 = vector.broadcast %15 : vector<1x512xf32> to vector<8x512xf32>
      %17 = arith.mulf %14, %16 : vector<8x512xf32>
      %c1 = arith.constant 1 : index
      %c0_7 = arith.constant 0 : index
      %18 = vector.load %arg10[%c1, %c0_7] : memref<2x512xf32, #tpu.memory_space<vmem>>, vector<1x512xf32>
      %19 = vector.broadcast %18 : vector<1x512xf32> to vector<8x512xf32>
      %20 = arith.addf %17, %19 : vector<8x512xf32>
      %cst = arith.constant 0.000000e+00 : f32
      %21 = vector.broadcast %cst : f32 to vector<8x512xf32>
      %22 = arith.cmpf ogt, %20, %21 : vector<8x512xf32>
      %cst_8 = arith.constant 2.000000e-01 : f32
      %23 = vector.broadcast %cst_8 : f32 to vector<8x512xf32>
      %24 = arith.mulf %23, %20 : vector<8x512xf32>
      %25 = arith.select %22, %20, %24 : vector<8x512xi1>, vector<8x512xf32>
      %26 = arith.truncf %25 : vector<8x512xf32> to vector<8x512xbf16>
      %c0_9 = arith.constant 0 : index
      %c0_10 = arith.constant 0 : index
      %27 = vector.load %arg6[%c0_9, %c0_10] : memref<512x1024xbf16, #tpu.memory_space<vmem>>, vector<512x1024xbf16>
      %cst_11 = arith.constant dense<0.000000e+00> : vector<8x1024xf32>
      %28 = tpu.matmul %26, %27, %cst_11 {dimension_numbers = #tpu.dot_dimension_numbers<[1], [0], [0], [1], [0, 0, 1, 1], [], []>} : vector<8x512xbf16>, vector<512x1024xbf16>, vector<8x1024xf32> -> vector<8x1024xf32>
      %c0_12 = arith.constant 0 : index
      %c0_13 = arith.constant 0 : index
      %29 = vector.load %arg7[%c0_12, %c0_13] : memref<1x1024xf32, #tpu.memory_space<vmem>>, vector<1x1024xf32>
      %30 = vector.broadcast %29 : vector<1x1024xf32> to vector<8x1024xf32>
      %31 = arith.addf %28, %30 : vector<8x1024xf32>
      %32 = math.tanh %31 : vector<8x1024xf32>
      %c0_14 = arith.constant 0 : index
      %c0_15 = arith.constant 0 : index
      %33 = vector.load %arg8[%c0_14, %c0_15] : memref<8x1024xf32, #tpu.memory_space<vmem>>, vector<8x1024xf32>
      tpu.vector_store %arg8[%c0_14, %c0_15], %32 {strides = array<i32>} : memref<8x1024xf32, #tpu.memory_space<vmem>>, vector<8x1024xf32>,
    } else {
    }
    return
  }
  func.func @transform_0(%arg0: i32, %arg1: i32) -> (i32, i32) {
    %c0_i32 = arith.constant 0 : i32
    %c0_i32_0 = arith.constant 0 : i32
    return %arg1, %c0_i32 : i32, i32
  }
  func.func @transform_1(%arg0: i32, %arg1: i32) -> (i32, i32) {
    %c0_i32 = arith.constant 0 : i32
    %c0_i32_0 = arith.constant 0 : i32
    %c0_i32_1 = arith.constant 0 : i32
    return %c0_i32, %c0_i32_0 : i32, i32
  }
  func.func @transform_2(%arg0: i32, %arg1: i32) -> (i32, i32) {
    %c0_i32 = arith.constant 0 : i32
    %c0_i32_0 = arith.constant 0 : i32
    %c0_i32_1 = arith.constant 0 : i32
    return %c0_i32, %c0_i32_0 : i32, i32
  }
  func.func @transform_3(%arg0: i32, %arg1: i32) -> (i32, i32) {
    %c0_i32 = arith.constant 0 : i32
    %c0_i32_0 = arith.constant 0 : i32
    %c0_i32_1 = arith.constant 0 : i32
    return %c0_i32, %c0_i32_0 : i32, i32
  }
  func.func @transform_4(%arg0: i32, %arg1: i32) -> (i32, i32) {
    %c0_i32 = arith.constant 0 : i32
    %c0_i32_0 = arith.constant 0 : i32
    %c0_i32_1 = arith.constant 0 : i32
    return %c0_i32, %c0_i32_0 : i32, i32
  }
  func.func @transform_5(%arg0: i32, %arg1: i32) -> (i32, i32) {
    %c0_i32 = arith.constant 0 : i32
    %c0_i32_0 = arith.constant 0 : i32
    %c0_i32_1 = arith.constant 0 : i32
    return %c0_i32, %c0_i32_0 : i32, i32
  }
  func.func @transform_6(%arg0: i32, %arg1: i32) -> (i32, i32) {
    %c0_i32 = arith.constant 0 : i32
    %c0_i32_0 = arith.constant 0 : i32
    return %arg1, %c0_i32 : i32, i32
  }
}

</mosaic_0001>

<llo_original>
// kernel: tpu_custom_call.1
$region0: #{tpu_custom_call.1}
  #allocation0 [shape = 'u32[]', space=smem, size = 0x4, offset = 0x4, fixed_abs, tag = 'smem constant byte address 0x4 - core index']
  #allocation1 [shape = 'u32[144,128]{1,0:T(1,128)}', space=vmem, size = 0x12000, scoped, tag = 'internal scratch']
  #allocation2 [shape = 'f32[16,512]{1,0:T(8,128)}', space=vmem, size = 0x8000, scoped, tag = 'scratch operand']
  #allocation3 [shape = 'f32[2,512]{1,0:T(2,128)}', space=vmem, size = 0x1000, scoped, tag = 'scratch operand']
  %s0 = inlined_call_operand.hbm [shape: f32[16,32], index: 0, kind: input, shape index: {}]
  %s1 = inlined_call_operand.hbm [shape: bf16[32,512], index: 1, kind: input, shape index: {}]
  %s2 = inlined_call_operand.hbm [shape: f32[3,512], index: 2, kind: input, shape index: {}]
  %s3 = inlined_call_operand.hbm [shape: bf16[512,512], index: 3, kind: input, shape index: {}]
  %s4 = inlined_call_operand.hbm [shape: bf16[512,1024], index: 4, kind: input, shape index: {}]
  %s5 = inlined_call_operand.vmem [shape: f32[1,1024], index: 5, kind: input, shape index: {}]
  %s6 = inlined_call_operand.hbm [shape: f32[16,1024], index: 6, kind: output, shape index: {}]
  %s7 = sld [smem:[#allocation0]]
  $region89: #{tpu_custom_call.1} parent=0
    _
  %s9 = ssub.s32 1, %s7
  %s10 = scalar_select 0, %s9, %s7
  $region1: #{tpu_custom_call.1} parent=0
    #allocation4 [shape = 'u8[8192]{0}', space=vmem, size = 0x2000, scoped, tag = 'input window, operand 0']
    #allocation5 [shape = 's32[2]{0}', space=sflag, size = 0x8, scoped, tag = 'scoped memory for tpu_custom_call.1']
    #allocation6 [shape = 's32[2]{0}', space=sflag, size = 0x8, scoped, tag = 'scoped memory for tpu_custom_call.1']
    #allocation7 [shape = 'u8[32768]{0}', space=vmem, size = 0x8000, scoped, tag = 'input window, operand 1, single buffered']
    #allocation8 [shape = 's32[1]{0}', space=sflag, size = 0x4, scoped, tag = 'scoped memory for tpu_custom_call.1']
    #allocation9 [shape = 'u8[8192]{0}', space=vmem, size = 0x2000, scoped, tag = 'input window, operand 2, single buffered']
    #allocation10 [shape = 'u8[524288]{0}', space=vmem, size = 0x80000, scoped, tag = 'input window, operand 3, single buffered']
    #allocation11 [shape = 's32[1]{0}', space=sflag, size = 0x4, scoped, tag = 'scoped memory for tpu_custom_call.1']
    #allocation12 [shape = 'u8[1048576]{0}', space=vmem, size = 0x100000, scoped, tag = 'input window, operand 4, single buffered']
    #allocation13 [shape = 'u8[65536]{0}', space=vmem, size = 0x10000, scoped, tag = 'output window, operand 0']
    %11 = vsyncpa [#allocation5], 0
    %s12 = scalar_lea.sflag [#allocation5], 1
    %13 = vsyncpa %s12, 0
    %14 = vsyncpa [#allocation8], 0
    %15 = vsyncpa [#allocation11], 0
    %16 = vsyncpa [#allocation6], 0
    %s17 = scalar_lea.sflag [#allocation6], 1
    %18 = vsyncpa %s17, 0
    loop: start=0, step=1, limit=6
    $region2: #{tpu_custom_call.1} parent=1 // loop_pre_header
      _
    $region3: #{tpu_custom_call.1} parent=1 // loop_header
      %s20 = sphi 0, %s24
      %p21 = scmp.ge.s32.totalorder %s20, 6
      %s27 = sphi 0, %s39
      %s28 = sphi 0, %s35
      %s29 = sphi 0, %s27
      %s30 = sphi 0, %s28
      %s31 = sphi 0, %s29
      %s32 = sphi 0, %s30
      %s42 = sphi 0, %s44
      %s45 = sphi 0, %s42
      %s46 = sphi 0, %s45
      %s62 = sphi 0, %s46
      %s66 = sphi 0, %s66
      %s68 = sphi 0, %s66
      %s69 = sphi 0, %s68
      %s83 = sphi 0, %s69
      %s87 = sphi 0, %s87
      %s89 = sphi 0, %s87
      %s90 = sphi 0, %s89
      %s104 = sphi 0, %s90
      %s108 = sphi 0, %s108
      %s110 = sphi 0, %s108
      %s111 = sphi 0, %s110
      %s125 = sphi 0, %s111
      %s129 = sphi 0, %s129
      %s131 = sphi 0, %s129
      %s132 = sphi 0, %s131
      %s146 = sphi 0, %s132
      %s150 = sphi 0, %s150
      %s152 = sphi 0, %s150
      %s153 = sphi 0, %s152
      %s167 = sphi 0, %s153
      %s173 = sphi 0, %s175
      %s176 = sphi 0, %s173
      %s177 = sphi 0, %s176
      %s193 = sphi 0, %s177
    $region4: #{tpu_custom_call.1} parent=1 // loop_header_branch
      %23 = sbr.rel (%p21) target = $region8
    $region5: #{tpu_custom_call.1} parent=1 // loop_body
      %s25 = ssub.s32 %s20, 1
      %s26 = ssub.s32 %s20, 2
      %s33 = sadd.s32 1, %s28
      %p34 = scmp.ge.s32.totalorder %s33, 2
      %s35 = scalar_select %p34, 0, %s33
      %s36 = sadd.s32 1, %s27
      %s37 = scalar_select %p34, %s36, %s27
      %p38 = scmp.ge.s32.totalorder %s37, 2
      %s39 = scalar_select %p38, 0, %s37
      %s40 = ssub.s32 %s28, %s35
      %p41 = scmp.eq.s32.totalorder %s40, 0
      %s43 = sadd.s32 %s42, 1
      %s44 = scalar_select %p41, %s42, %s43
      %p47 = pneg %p41
      %p48 = scmp.eq.s32.totalorder %s20, 3
      %p49 = por %p47, %p48
      %p50 = scmp.ne.s32.totalorder %s42, %s45
      %p51 = scmp.eq.s32.totalorder %s20, 0
      %p52 = por %p50, %p51
      %p53 = scmp.ne.s32.totalorder %s42, %s45
      %p54 = scmp.eq.s32.totalorder %s25, 3
      %p55 = por %p53, %p54
      %p56 = scmp.ne.s32.totalorder %s45, %s46
      %p57 = scmp.eq.s32.totalorder %s25, 0
      %p58 = por %p56, %p57
      %p59 = scmp.ne.s32.totalorder %s45, %s46
      %p60 = scmp.eq.s32.totalorder %s26, 3
      %p61 = por %p59, %p60
      %p63 = scmp.ne.s32.totalorder %s46, %s62
      %p64 = scmp.eq.s32.totalorder %s26, 0
      %p65 = por %p63, %p64
      %s67 = sadd.s32 %s66, 1
      %p70 = scmp.eq.s32.totalorder %s20, 3
      %p71 = scmp.ne.s32.totalorder %s66, %s68
      %p72 = scmp.eq.s32.totalorder %s20, 0
      %p73 = por %p71, %p72
      %p74 = scmp.ne.s32.totalorder %s66, %s68
      %p75 = scmp.eq.s32.totalorder %s25, 3
      %p76 = por %p74, %p75
      %p77 = scmp.ne.s32.totalorder %s68, %s69
      %p78 = scmp.eq.s32.totalorder %s25, 0
      %p79 = por %p77, %p78
      %p80 = scmp.ne.s32.totalorder %s68, %s69
      %p81 = scmp.eq.s32.totalorder %s26, 3
      %p82 = por %p80, %p81
      %p84 = scmp.ne.s32.totalorder %s69, %s83
      %p85 = scmp.eq.s32.totalorder %s26, 0
      %p86 = por %p84, %p85
      %s88 = sadd.s32 %s87, 1
      %p91 = scmp.eq.s32.totalorder %s20, 3
      %p92 = scmp.ne.s32.totalorder %s87, %s89
      %p93 = scmp.eq.s32.totalorder %s20, 0
      %p94 = por %p92, %p93
      %p95 = scmp.ne.s32.totalorder %s87, %s89
      %p96 = scmp.eq.s32.totalorder %s25, 3
      %p97 = por %p95, %p96
      %p98 = scmp.ne.s32.totalorder %s89, %s90
      %p99 = scmp.eq.s32.totalorder %s25, 0
      %p100 = por %p98, %p99
      %p101 = scmp.ne.s32.totalorder %s89, %s90
      %p102 = scmp.eq.s32.totalorder %s26, 3
      %p103 = por %p101, %p102
      %p105 = scmp.ne.s32.totalorder %s90, %s104
      %p106 = scmp.eq.s32.totalorder %s26, 0
      %p107 = por %p105, %p106
      %s109 = sadd.s32 %s108, 1
      %p112 = scmp.eq.s32.totalorder %s20, 3
      %p113 = scmp.ne.s32.totalorder %s108, %s110
      %p114 = scmp.eq.s32.totalorder %s20, 0
      %p115 = por %p113, %p114
      %p116 = scmp.ne.s32.totalorder %s108, %s110
      %p117 = scmp.eq.s32.totalorder %s25, 3
      %p118 = por %p116, %p117
      %p119 = scmp.ne.s32.totalorder %s110, %s111
      %p120 = scmp.eq.s32.totalorder %s25, 0
      %p121 = por %p119, %p120
      %p122 = scmp.ne.s32.totalorder %s110, %s111
      %p123 = scmp.eq.s32.totalorder %s26, 3
      %p124 = por %p122, %p123
      %p126 = scmp.ne.s32.totalorder %s111, %s125
      %p127 = scmp.eq.s32.totalorder %s26, 0
      %p128 = por %p126, %p127
      %s130 = sadd.s32 %s129, 1
      %p133 = scmp.eq.s32.totalorder %s20, 3
      %p134 = scmp.ne.s32.totalorder %s129, %s131
      %p135 = scmp.eq.s32.totalorder %s20, 0
      %p136 = por %p134, %p135
      %p137 = scmp.ne.s32.totalorder %s129, %s131
      %p138 = scmp.eq.s32.totalorder %s25, 3
      %p139 = por %p137, %p138
      %p140 = scmp.ne.s32.totalorder %s131, %s132
      %p141 = scmp.eq.s32.totalorder %s25, 0
      %p142 = por %p140, %p141
      %p143 = scmp.ne.s32.totalorder %s131, %s132
      %p144 = scmp.eq.s32.totalorder %s26, 3
      %p145 = por %p143, %p144
      %p147 = scmp.ne.s32.totalorder %s132, %s146
      %p148 = scmp.eq.s32.totalorder %s26, 0
      %p149 = por %p147, %p148
      %s151 = sadd.s32 %s150, 1
      %p154 = scmp.eq.s32.totalorder %s20, 3
      %p155 = scmp.ne.s32.totalorder %s150, %s152
      %p156 = scmp.eq.s32.totalorder %s20, 0
      %p157 = por %p155, %p156
      %p158 = scmp.ne.s32.totalorder %s150, %s152
      %p159 = scmp.eq.s32.totalorder %s25, 3
      %p160 = por %p158, %p159
      %p161 = scmp.ne.s32.totalorder %s152, %s153
      %p162 = scmp.eq.s32.totalorder %s25, 0
      %p163 = por %p161, %p162
      %p164 = scmp.ne.s32.totalorder %s152, %s153
      %p165 = scmp.eq.s32.totalorder %s26, 3
      %p166 = por %p164, %p165
      %p168 = scmp.ne.s32.totalorder %s153, %s167
      %p169 = scmp.eq.s32.totalorder %s26, 0
      %p170 = por %p168, %p169
      %s171 = ssub.s32 %s28, %s35
      %p172 = scmp.eq.s32.totalorder %s171, 0
      %s174 = sadd.s32 %s173, 1
      %s175 = scalar_select %p172, %s173, %s174
      %p178 = pneg %p172
      %p179 = scmp.eq.s32.totalorder %s20, 3
      %p180 = por %p178, %p179
      %p181 = scmp.ne.s32.totalorder %s173, %s176
      %p182 = scmp.eq.s32.totalorder %s20, 0
      %p183 = por %p181, %p182
      %p184 = scmp.ne.s32.totalorder %s173, %s176
      %p185 = scmp.eq.s32.totalorder %s25, 3
      %p186 = por %p184, %p185
      %p187 = scmp.ne.s32.totalorder %s176, %s177
      %p188 = scmp.eq.s32.totalorder %s25, 0
      %p189 = por %p187, %p188
      %p190 = scmp.ne.s32.totalorder %s176, %s177
      %p191 = scmp.eq.s32.totalorder %s26, 3
      %p192 = por %p190, %p191
      %p194 = scmp.ne.s32.totalorder %s177, %s193
      %p195 = scmp.eq.s32.totalorder %s26, 0
      %p196 = por %p194, %p195
      %p197 = scmp.le.s32.totalorder 1, %s20
      %p198 = scmp.lt.s32.totalorder %s20, 5
      %p199 = pnand %p197, %p198
      %p200 = pneg %p199
      // Predicated region
      $region9: #{tpu_custom_call.1} parent=5 // pred_check
        _
      $region10: #{tpu_custom_call.1} parent=5 // pred_check_branch
        %202 = sbr.rel (%p199) target = $region12
      $region11: #{tpu_custom_call.1} parent=5 // pred_region
        %s203 = ssub.s32 %s20, 1
        // Predicated region
        $region13: #{tpu_custom_call.1} parent=11 // pred_check
          %p204 = pneg %p79
        $region14: #{tpu_custom_call.1} parent=11 // pred_check_branch
          %206 = sbr.rel (%p204) target = $region16
        $region15: #{tpu_custom_call.1} parent=11 // pred_region
          %s208 = ssub.s32 1024, 1024
          %209 = vsyncadd [#allocation8], %s208
          %s210 = sshll.u32 [#allocation7], 4
          %s211 = int_to_ptr.vmem [resolvable:$true] %s210
          %216 = dma.hbm_to_vmem [thread:$0]  %s1, 1024, %s211, [#allocation8], 256, 256, 16
        $region16: #{tpu_custom_call.1} parent=11 // pred_fallthru
          _
        // Predicated region
        $region17: #{tpu_custom_call.1} parent=11 // pred_check
          %p217 = pneg %p100
        $region18: #{tpu_custom_call.1} parent=11 // pred_check_branch
          %219 = sbr.rel (%p217) target = $region20
        $region19: #{tpu_custom_call.1} parent=11 // pred_region
          %s221 = ssub.s32 256, 256
          %222 = vsyncadd [#allocation8], %s221
          %s224 = sshll.u32 [#allocation9], 4
          %s225 = int_to_ptr.vmem [resolvable:$true] %s224
          %227 = dma.hbm_to_vmem [thread:$0]  %s2, 256, %s225, [#allocation8]
        $region20: #{tpu_custom_call.1} parent=11 // pred_fallthru
          _
        // Predicated region
        $region21: #{tpu_custom_call.1} parent=11 // pred_check
          %p228 = pneg %p121
        $region22: #{tpu_custom_call.1} parent=11 // pred_check_branch
          %230 = sbr.rel (%p228) target = $region24
        $region23: #{tpu_custom_call.1} parent=11 // pred_region
          %s232 = ssub.s32 16384, 16384
          %233 = vsyncadd [#allocation11], %s232
          %s234 = sshll.u32 [#allocation10], 4
          %s235 = int_to_ptr.vmem [resolvable:$true] %s234
          %240 = dma.hbm_to_vmem [thread:$0]  %s3, 16384, %s235, [#allocation11], 256, 256, 16
        $region24: #{tpu_custom_call.1} parent=11 // pred_fallthru
          _
        // Predicated region
        $region25: #{tpu_custom_call.1} parent=11 // pred_check
          %p241 = pneg %p142
        $region26: #{tpu_custom_call.1} parent=11 // pred_check_branch
          %243 = sbr.rel (%p241) target = $region28
        $region27: #{tpu_custom_call.1} parent=11 // pred_region
          %s245 = ssub.s32 32768, 32768
          %246 = vsyncadd [#allocation11], %s245
          %s247 = sshll.u32 [#allocation12], 4
          %s248 = int_to_ptr.vmem [resolvable:$true] %s247
          %253 = dma.hbm_to_vmem [thread:$0]  %s4, 32768, %s248, [#allocation11], 512, 512, 32
        $region28: #{tpu_custom_call.1} parent=11 // pred_fallthru
          _
        // Predicated region
        $region29: #{tpu_custom_call.1} parent=11 // pred_check
          %p254 = pneg %p163
        $region30: #{tpu_custom_call.1} parent=11 // pred_check_branch
          %256 = sbr.rel (%p254) target = $region32
        $region31: #{tpu_custom_call.1} parent=11 // pred_region
          _
        $region32: #{tpu_custom_call.1} parent=11 // pred_fallthru
          _
      $region12: #{tpu_custom_call.1} parent=5 // pred_fallthru
        _
      %p257 = scmp.lt.s32.totalorder %s20, 4
      // Predicated region
      $region33: #{tpu_custom_call.1} parent=5 // pred_check
        %p258 = pneg %p257
      $region34: #{tpu_custom_call.1} parent=5 // pred_check_branch
        %260 = sbr.rel (%p258) target = $region36
      $region35: #{tpu_custom_call.1} parent=5 // pred_region
        // Predicated region
        $region37: #{tpu_custom_call.1} parent=35 // pred_check
          %p261 = pneg %p52
        $region38: #{tpu_custom_call.1} parent=35 // pred_check_branch
          %263 = sbr.rel (%p261) target = $region40
        $region39: #{tpu_custom_call.1} parent=35 // pred_region
          %s264 = sand.u32 %s42, 1
          %s265 = scalar_lea.sflag [#allocation5], %s264
          %s266 = sand.u32 %s42, 1
          %s267 = smul.addr %s266, 8
          %s268 = scalar_lea.vmem [#allocation4], %s267
          %s270 = ssub.s32 128, 128
          %271 = vsyncadd %s265, %s270
          %s272 = smul.addr %s28, 128
          %s273 = scalar_lea.hbm %s0, %s272
          %s275 = sshll.u32 %s268, 4
          %s276 = int_to_ptr.vmem [resolvable:$true] %s275
          %278 = dma.hbm_to_vmem [thread:$0]  %s273, 128, %s276, %s265
        $region40: #{tpu_custom_call.1} parent=35 // pred_fallthru
          _
      $region36: #{tpu_custom_call.1} parent=5 // pred_fallthru
        _
      %p279 = scmp.le.s32.totalorder 1, %s20
      %p280 = scmp.lt.s32.totalorder %s20, 5
      %p281 = pnand %p279, %p280
      %p282 = pneg %p281
      // Predicated region
      $region41: #{tpu_custom_call.1} parent=5 // pred_check
        _
      $region42: #{tpu_custom_call.1} parent=5 // pred_check_branch
        %284 = sbr.rel (%p281) target = $region44
      $region43: #{tpu_custom_call.1} parent=5 // pred_region
        %s285 = ssub.s32 %s20, 1
        %s286 = sand.u32 %s45, 1
        %s287 = scalar_lea.sflag [#allocation5], %s286
        %s288 = sand.u32 %s45, 1
        %s289 = smul.addr %s288, 8
        %s290 = scalar_lea.vmem [#allocation4], %s289
        // Predicated region
        $region45: #{tpu_custom_call.1} parent=43 // pred_check
          %p291 = pneg %p58
        $region46: #{tpu_custom_call.1} parent=43 // pred_check_branch
          %293 = sbr.rel (%p291) target = $region48
        $region47: #{tpu_custom_call.1} parent=43 // pred_region
          %294 = dma.done %s287, 128
        $region48: #{tpu_custom_call.1} parent=43 // pred_fallthru
          _
        // Predicated region
        $region49: #{tpu_custom_call.1} parent=43 // pred_check
          %p295 = pneg %p79
        $region50: #{tpu_custom_call.1} parent=43 // pred_check_branch
          %297 = sbr.rel (%p295) target = $region52
        $region51: #{tpu_custom_call.1} parent=43 // pred_region
          %298 = dma.done [#allocation8], 1024
        $region52: #{tpu_custom_call.1} parent=43 // pred_fallthru
          _
        // Predicated region
        $region53: #{tpu_custom_call.1} parent=43 // pred_check
          %p299 = pneg %p100
        $region54: #{tpu_custom_call.1} parent=43 // pred_check_branch
          %301 = sbr.rel (%p299) target = $region56
        $region55: #{tpu_custom_call.1} parent=43 // pred_region
          %302 = dma.done [#allocation8], 256
        $region56: #{tpu_custom_call.1} parent=43 // pred_fallthru
          _
        // Predicated region
        $region57: #{tpu_custom_call.1} parent=43 // pred_check
          %p303 = pneg %p121
        $region58: #{tpu_custom_call.1} parent=43 // pred_check_branch
          %305 = sbr.rel (%p303) target = $region60
        $region59: #{tpu_custom_call.1} parent=43 // pred_region
          %306 = dma.done [#allocation11], 16384
        $region60: #{tpu_custom_call.1} parent=43 // pred_fallthru
          _
        // Predicated region
        $region61: #{tpu_custom_call.1} parent=43 // pred_check
          %p307 = pneg %p142
        $region62: #{tpu_custom_call.1} parent=43 // pred_check_branch
          %309 = sbr.rel (%p307) target = $region64
        $region63: #{tpu_custom_call.1} parent=43 // pred_region
          %310 = dma.done [#allocation11], 32768
        $region64: #{tpu_custom_call.1} parent=43 // pred_fallthru
          _
        %s311 = sand.u32 %s45, 1
        %s312 = scalar_lea.sflag [#allocation5], %s311
        %s313 = sand.u32 %s45, 1
        %s314 = smul.addr %s313, 8
        %s315 = scalar_lea.vmem [#allocation4], %s314
        %p316 = pneg %p58
        %p317 = pneg %p55
        %p318 = pneg %p79
        %p319 = pneg %p76
        %p320 = pneg %p100
        %p321 = pneg %p97
        %p322 = pneg %p121
        %p323 = pneg %p118
        %p324 = pneg %p142
        %p325 = pneg %p139
        %p326 = pneg %p163
        %p327 = pneg %p160
        %p328 = pneg %p189
        %p329 = pneg %p186
        %s330 = sand.u32 %s176, 1
        %s331 = scalar_lea.sflag [#allocation6], %s330
        %s332 = sand.u32 %s176, 1
        %s333 = smul.addr %s332, 64
        %s334 = scalar_lea.vmem [#allocation13], %s333
        %s336 = smul.u32 %s30, 8
        %p337 = scmp.eq.s32.totalorder %s29, 0
        // Predicated region
        $region65: #{tpu_custom_call.1} parent=43 // pred_check
          %p338 = pneg %p337
        $region66: #{tpu_custom_call.1} parent=43 // pred_check_branch
          %340 = sbr.rel (%p338) target = $region68
        $region67: #{tpu_custom_call.1} parent=43 // pred_region
          %v341 = vld [vmem:[#allocation9] ss:$4 sm:$0xf]
          %v342 = vld [vmem:[%s290] sm:$0xff]
          %v343 = vpack.c.bf16 %v342, %v342
          %v344 = vld [vmem:[#allocation7] sm:$0xff]
          %v345 = vld [vmem:[#allocation7 + $0x8] sm:$0xff]
          %v346 = vld [vmem:[#allocation7 + $0x10] sm:$0xff]
          %v347 = vld [vmem:[#allocation7 + $0x18] sm:$0xff]
          %v348 = vld [vmem:[#allocation7 + $0x20] sm:$0xff]
          %v349 = vld [vmem:[#allocation7 + $0x28] sm:$0xff]
          %v350 = vld [vmem:[#allocation7 + $0x30] sm:$0xff]
          %v351 = vld [vmem:[#allocation7 + $0x38] sm:$0xff]
          %v353 = vlaneseq
          %v354 = vshrl.u32 %v353, 7
          %v355 = vsub.s32 0, %v354
          %v356 = vrot.slane %v341, %v355
          %v357 = vlaneseq
          %v358 = vshrl.u32 %v357, 7
          %v359 = vsub.s32 1, %v358
          %v360 = vrot.slane %v341, %v359
          %v361 = vlaneseq
          %v362 = vshrl.u32 %v361, 7
          %v363 = vsub.s32 2, %v362
          %v364 = vrot.slane %v341, %v363
          %v365 = vlaneseq
          %v366 = vshrl.u32 %v365, 7
          %v367 = vsub.s32 3, %v366
          %v368 = vrot.slane %v341, %v367
          %v381 = vunpack.c.l.b16 %v344
          %v382 = vunpack.c.h.b16 %v344
          %v383 = vunpack.c.l.b16 %v345
          %v384 = vunpack.c.h.b16 %v345
          %v385 = vunpack.c.l.b16 %v346
          %v386 = vunpack.c.h.b16 %v346
          %v387 = vunpack.c.l.b16 %v347
          %v388 = vunpack.c.h.b16 %v347
          %v389 = vunpack.c.l.b16 %v348
          %v390 = vunpack.c.h.b16 %v348
          %v391 = vunpack.c.l.b16 %v349
          %v392 = vunpack.c.h.b16 %v349
          %v393 = vunpack.c.l.b16 %v350
          %v394 = vunpack.c.h.b16 %v350
          %v395 = vunpack.c.l.b16 %v351
          %v396 = vunpack.c.h.b16 %v351
          %v397 = vpack.c.b16 %v385, %v381
          %v398 = vpack.c.b16 %v386, %v382
          %v399 = vpack.c.b16 %v387, %v383
          %v400 = vpack.c.b16 %v388, %v384
          %v401 = vpack.c.b16 %v393, %v389
          %v402 = vpack.c.b16 %v394, %v390
          %v403 = vpack.c.b16 %v395, %v391
          %v404 = vpack.c.b16 %v396, %v392
          %vm413 = vcmask 261120
          %v415 = vsel %vm413, %v343, 0
          %417 = vmatprep.subr.bf16.mxu0 %v398
          %418 = vmatpush1.bf16.msra.mxu0 %v397
          %419 = vmatprep.subr.bf16.mxu0 %v402
          %420 = vmatpush1.bf16.msra.mxu0 %v401
          %421 = vmatprep.subr.bf16.mxu0 0
          %422 = vmatpush1.bf16.msra.mxu0 0
          %423 = vmatprep.subr.bf16.mxu0 0
          %424 = vmatpush1.bf16.msra.mxu0 0
          %425 = vmatprep.subr.bf16.mxu0 0
          %426 = vmatpush1.bf16.msra.mxu0 0
          %427 = vmatprep.subr.bf16.mxu0 0
          %428 = vmatpush1.bf16.msra.mxu0 0
          %429 = vmatprep.subr.bf16.mxu0 0
          %430 = vmatpush1.bf16.msra.mxu0 0
          %431 = vmatprep.subr.bf16.mxu0 0
          %432 = vmatpush1.bf16.msra.mxu0 0
          %433 = vmatprep.subr.bf16.mxu0 0
          %434 = vmatpush1.bf16.msra.mxu0 0
          %435 = vmatprep.subr.bf16.mxu0 0
          %436 = vmatpush1.bf16.msra.mxu0 0
          %437 = vmatprep.subr.bf16.mxu0 0
          %438 = vmatpush1.bf16.msra.mxu0 0
          %439 = vmatprep.subr.bf16.mxu0 0
          %440 = vmatpush1.bf16.msra.mxu0 0
          %441 = vmatprep.subr.bf16.mxu0 0
          %442 = vmatpush1.bf16.msra.mxu0 0
          %443 = vmatprep.subr.bf16.mxu0 0
          %444 = vmatpush1.bf16.msra.mxu0 0
          %445 = vmatprep.subr.bf16.mxu0 0
          %446 = vmatpush1.bf16.msra.mxu0 0
          %447 = vmatprep.subr.bf16.mxu0 0
          %448 = vmatpush1.bf16.msra.mxu0 0
          %449 = vmatprep.mubr.bf16.mxu0 0
          %450 = vmatmul.mubr.bf16.gmra.mrb[0].mxu0 %v415
          %v451 = vpop.f32.mrb[0].mxu0
          %v452 = vadd.f32 %v356, %v451
          %v453 = vpop.f32.mrb[0].mxu0
          %v454 = vadd.f32 %v360, %v453
          %v455 = vpop.f32.mrb[0].mxu0
          %v456 = vpop.f32.mrb[0].mxu0
          %457 = vdwg.mxu0
          %458 = vmatprep.subr.bf16.mxu0 %v400
          %459 = vmatpush1.bf16.msra.mxu0 %v399
          %460 = vmatprep.subr.bf16.mxu0 %v404
          %461 = vmatpush1.bf16.msra.mxu0 %v403
          %462 = vmatprep.subr.bf16.mxu0 0
          %463 = vmatpush1.bf16.msra.mxu0 0
          %464 = vmatprep.subr.bf16.mxu0 0
          %465 = vmatpush1.bf16.msra.mxu0 0
          %466 = vmatprep.subr.bf16.mxu0 0
          %467 = vmatpush1.bf16.msra.mxu0 0
          %468 = vmatprep.subr.bf16.mxu0 0
          %469 = vmatpush1.bf16.msra.mxu0 0
          %470 = vmatprep.subr.bf16.mxu0 0
          %471 = vmatpush1.bf16.msra.mxu0 0
          %472 = vmatprep.subr.bf16.mxu0 0
          %473 = vmatpush1.bf16.msra.mxu0 0
          %474 = vmatprep.subr.bf16.mxu0 0
          %475 = vmatpush1.bf16.msra.mxu0 0
          %476 = vmatprep.subr.bf16.mxu0 0
          %477 = vmatpush1.bf16.msra.mxu0 0
          %478 = vmatprep.subr.bf16.mxu0 0
          %479 = vmatpush1.bf16.msra.mxu0 0
          %480 = vmatprep.subr.bf16.mxu0 0
          %481 = vmatpush1.bf16.msra.mxu0 0
          %482 = vmatprep.subr.bf16.mxu0 0
          %483 = vmatpush1.bf16.msra.mxu0 0
          %484 = vmatprep.subr.bf16.mxu0 0
          %485 = vmatpush1.bf16.msra.mxu0 0
          %486 = vmatprep.subr.bf16.mxu0 0
          %487 = vmatpush1.bf16.msra.mxu0 0
          %488 = vmatprep.subr.bf16.mxu0 0
          %489 = vmatpush1.bf16.msra.mxu0 0
          %490 = vmatprep.mubr.bf16.mxu0 0
          %491 = vmatmul.mubr.bf16.gmra.mrb[0].mxu0 %v415
          %v492 = vpop.f32.mrb[0].mxu0
          %v493 = vadd.f32 %v364, %v492
          %v494 = vpop.f32.mrb[0].mxu0
          %v495 = vadd.f32 %v368, %v494
          %v496 = vpop.f32.mrb[0].mxu0
          %v497 = vpop.f32.mrb[0].mxu0
          %498 = vdwg.mxu0
          %vm499 = vcmp.gt.f32.partialorder %v452, 0.0
          %vm500 = vcmp.gt.f32.partialorder %v454, 0.0
          %vm501 = vcmp.gt.f32.partialorder %v493, 0.0
          %vm502 = vcmp.gt.f32.partialorder %v495, 0.0
          %v503 = vmul.f32 %v452, 0.2
          %v504 = vmul.f32 %v454, 0.2
          %v505 = vmul.f32 %v493, 0.2
          %v506 = vmul.f32 %v495, 0.2
          %v507 = vsel %vm499, %v452, %v503
          %v508 = vsel %vm500, %v454, %v504
          %v509 = vsel %vm501, %v493, %v505
          %v510 = vsel %vm502, %v495, %v506
          %v511 = vpack.c.bf16 %v507, %v507
          %v512 = vpack.c.bf16 %v508, %v508
          %v513 = vpack.c.bf16 %v509, %v509
          %v514 = vpack.c.bf16 %v510, %v510
          %v515 = vld [vmem:[#allocation10] sm:$0xff]
          %v516 = vld [vmem:[#allocation10 + $0x8] sm:$0xff]
          %v517 = vld [vmem:[#allocation10 + $0x10] sm:$0xff]
          %v518 = vld [vmem:[#allocation10 + $0x18] sm:$0xff]
          %v519 = vld [vmem:[#allocation10 + $0x20] sm:$0xff]
          %v520 = vld [vmem:[#allocation10 + $0x28] sm:$0xff]
          %v521 = vld [vmem:[#allocation10 + $0x30] sm:$0xff]
          %v522 = vld [vmem:[#allocation10 + $0x38] sm:$0xff]
          %v523 = vld [vmem:[#allocation10 + $0x40] sm:$0xff]
          %v524 = vld [vmem:[#allocation10 + $0x48] sm:$0xff]
          %v525 = vld [vmem:[#allocation10 + $0x50] sm:$0xff]
          %v526 = vld [vmem:[#allocation10 + $0x58] sm:$0xff]
          %v527 = vld [vmem:[#allocation10 + $0x60] sm:$0xff]
          %v528 = vld [vmem:[#allocation10 + $0x68] sm:$0xff]
          %v529 = vld [vmem:[#allocation10 + $0x70] sm:$0xff]
          %v530 = vld [vmem:[#allocation10 + $0x78] sm:$0xff]
          %v531 = vld [vmem:[#allocation10 + $0x80] sm:$0xff]
          %v532 = vld [vmem:[#allocation10 + $0x88] sm:$0xff]
          %v533 = vld [vmem:[#allocation10 + $0x90] sm:$0xff]
          %v534 = vld [vmem:[#allocation10 + $0x98] sm:$0xff]
          %v535 = vld [vmem:[#allocation10 + $0xa0] sm:$0xff]
          %v536 = vld [vmem:[#allocation10 + $0xa8] sm:$0xff]
          %v537 = vld [vmem:[#allocation10 + $0xb0] sm:$0xff]
          %v538 = vld [vmem:[#allocation10 + $0xb8] sm:$0xff]
          %v539 = vld [vmem:[#allocation10 + $0xc0] sm:$0xff]
          %v540 = vld [vmem:[#allocation10 + $0xc8] sm:$0xff]
          %v541 = vld [vmem:[#allocation10 + $0xd0] sm:$0xff]
          %v542 = vld [vmem:[#allocation10 + $0xd8] sm:$0xff]
          %v543 = vld [vmem:[#allocation10 + $0xe0] sm:$0xff]
          %v544 = vld [vmem:[#allocation10 + $0xe8] sm:$0xff]
          %v545 = vld [vmem:[#allocation10 + $0xf0] sm:$0xff]
          %v546 = vld [vmem:[#allocation10 + $0xf8] sm:$0xff]
          %v547 = vld [vmem:[#allocation10 + $0x100] sm:$0xff]
          %v548 = vld [vmem:[#allocation10 + $0x108] sm:$0xff]
          %v549 = vld [vmem:[#allocation10 + $0x110] sm:$0xff]
          %v550 = vld [vmem:[#allocation10 + $0x118] sm:$0xff]
          %v551 = vld [vmem:[#allocation10 + $0x120] sm:$0xff]
          %v552 = vld [vmem:[#allocation10 + $0x128] sm:$0xff]
          %v553 = vld [vmem:[#allocation10 + $0x130] sm:$0xff]
          %v554 = vld [vmem:[#allocation10 + $0x138] sm:$0xff]
          %v555 = vld [vmem:[#allocation10 + $0x140] sm:$0xff]
          %v556 = vld [vmem:[#allocation10 + $0x148] sm:$0xff]
          %v557 = vld [vmem:[#allocation10 + $0x150] sm:$0xff]
          %v558 = vld [vmem:[#allocation10 + $0x158] sm:$0xff]
          %v559 = vld [vmem:[#allocation10 + $0x160] sm:$0xff]
          %v560 = vld [vmem:[#allocation10 + $0x168] sm:$0xff]
          %v561 = vld [vmem:[#allocation10 + $0x170] sm:$0xff]
          %v562 = vld [vmem:[#allocation10 + $0x178] sm:$0xff]
          %v563 = vld [vmem:[#allocation10 + $0x180] sm:$0xff]
          %v564 = vld [vmem:[#allocation10 + $0x188] sm:$0xff]
          %v565 = vld [vmem:[#allocation10 + $0x190] sm:$0xff]
          %v566 = vld [vmem:[#allocation10 + $0x198] sm:$0xff]
          %v567 = vld [vmem:[#allocation10 + $0x1a0] sm:$0xff]
          %v568 = vld [vmem:[#allocation10 + $0x1a8] sm:$0xff]
          %v569 = vld [vmem:[#allocation10 + $0x1b0] sm:$0xff]
          %v570 = vld [vmem:[#allocation10 + $0x1b8] sm:$0xff]
          %v571 = vld [vmem:[#allocation10 + $0x1c0] sm:$0xff]
          %v572 = vld [vmem:[#allocation10 + $0x1c8] sm:$0xff]
          %v573 = vld [vmem:[#allocation10 + $0x1d0] sm:$0xff]
          %v574 = vld [vmem:[#allocation10 + $0x1d8] sm:$0xff]
          %v575 = vld [vmem:[#allocation10 + $0x1e0] sm:$0xff]
          %v576 = vld [vmem:[#allocation10 + $0x1e8] sm:$0xff]
          %v577 = vld [vmem:[#allocation10 + $0x1f0] sm:$0xff]
          %v578 = vld [vmem:[#allocation10 + $0x1f8] sm:$0xff]
          %v579 = vld [vmem:[#allocation10 + $0x200] sm:$0xff]
          %v580 = vld [vmem:[#allocation10 + $0x208] sm:$0xff]
          %v581 = vld [vmem:[#allocation10 + $0x210] sm:$0xff]
          %v582 = vld [vmem:[#allocation10 + $0x218] sm:$0xff]
          %v583 = vld [vmem:[#allocation10 + $0x220] sm:$0xff]
          %v584 = vld [vmem:[#allocation10 + $0x228] sm:$0xff]
          %v585 = vld [vmem:[#allocation10 + $0x230] sm:$0xff]
          %v586 = vld [vmem:[#allocation10 + $0x238] sm:$0xff]
          %v587 = vld [vmem:[#allocation10 + $0x240] sm:$0xff]
          %v588 = vld [vmem:[#allocation10 + $0x248] sm:$0xff]
          %v589 = vld [vmem:[#allocation10 + $0x250] sm:$0xff]
          %v590 = vld [vmem:[#allocation10 + $0x258] sm:$0xff]
          %v591 = vld [vmem:[#allocation10 + $0x260] sm:$0xff]
          %v592 = vld [vmem:[#allocation10 + $0x268] sm:$0xff]
          %v593 = vld [vmem:[#allocation10 + $0x270] sm:$0xff]
          %v594 = vld [vmem:[#allocation10 + $0x278] sm:$0xff]
          %v595 = vld [vmem:[#allocation10 + $0x280] sm:$0xff]
          %v596 = vld [vmem:[#allocation10 + $0x288] sm:$0xff]
          %v597 = vld [vmem:[#allocation10 + $0x290] sm:$0xff]
          %v598 = vld [vmem:[#allocation10 + $0x298] sm:$0xff]
          %v599 = vld [vmem:[#allocation10 + $0x2a0] sm:$0xff]
          %v600 = vld [vmem:[#allocation10 + $0x2a8] sm:$0xff]
          %v601 = vld [vmem:[#allocation10 + $0x2b0] sm:$0xff]
          %v602 = vld [vmem:[#allocation10 + $0x2b8] sm:$0xff]
          %v603 = vld [vmem:[#allocation10 + $0x2c0] sm:$0xff]
          %v604 = vld [vmem:[#allocation10 + $0x2c8] sm:$0xff]
          %v605 = vld [vmem:[#allocation10 + $0x2d0] sm:$0xff]
          %v606 = vld [vmem:[#allocation10 + $0x2d8] sm:$0xff]
          %v607 = vld [vmem:[#allocation10 + $0x2e0] sm:$0xff]
          %v608 = vld [vmem:[#allocation10 + $0x2e8] sm:$0xff]
          %v609 = vld [vmem:[#allocation10 + $0x2f0] sm:$0xff]
          %v610 = vld [vmem:[#allocation10 + $0x2f8] sm:$0xff]
          %v611 = vld [vmem:[#allocation10 + $0x300] sm:$0xff]
          %v612 = vld [vmem:[#allocation10 + $0x308] sm:$0xff]
          %v613 = vld [vmem:[#allocation10 + $0x310] sm:$0xff]
          %v614 = vld [vmem:[#allocation10 + $0x318] sm:$0xff]
          %v615 = vld [vmem:[#allocation10 + $0x320] sm:$0xff]
          %v616 = vld [vmem:[#allocation10 + $0x328] sm:$0xff]
          %v617 = vld [vmem:[#allocation10 + $0x330] sm:$0xff]
          %v618 = vld [vmem:[#allocation10 + $0x338] sm:$0xff]
          %v619 = vld [vmem:[#allocation10 + $0x340] sm:$0xff]
          %v620 = vld [vmem:[#allocation10 + $0x348] sm:$0xff]
          %v621 = vld [vmem:[#allocation10 + $0x350] sm:$0xff]
          %v622 = vld [vmem:[#allocation10 + $0x358] sm:$0xff]
          %v623 = vld [vmem:[#allocation10 + $0x360] sm:$0xff]
          %v624 = vld [vmem:[#allocation10 + $0x368] sm:$0xff]
          %v625 = vld [vmem:[#allocation10 + $0x370] sm:$0xff]
          %v626 = vld [vmem:[#allocation10 + $0x378] sm:$0xff]
          %v627 = vld [vmem:[#allocation10 + $0x380] sm:$0xff]
          %v628 = vld [vmem:[#allocation10 + $0x388] sm:$0xff]
          %v629 = vld [vmem:[#allocation10 + $0x390] sm:$0xff]
          %v630 = vld [vmem:[#allocation10 + $0x398] sm:$0xff]
          %v631 = vld [vmem:[#allocation10 + $0x3a0] sm:$0xff]
          %v632 = vld [vmem:[#allocation10 + $0x3a8] sm:$0xff]
          %v633 = vld [vmem:[#allocation10 + $0x3b0] sm:$0xff]
          %v634 = vld [vmem:[#allocation10 + $0x3b8] sm:$0xff]
          %v635 = vld [vmem:[#allocation10 + $0x3c0] sm:$0xff]
          %v636 = vld [vmem:[#allocation10 + $0x3c8] sm:$0xff]
          %v637 = vld [vmem:[#allocation10 + $0x3d0] sm:$0xff]
          %v638 = vld [vmem:[#allocation10 + $0x3d8] sm:$0xff]
          %v639 = vld [vmem:[#allocation10 + $0x3e0] sm:$0xff]
          %v640 = vld [vmem:[#allocation10 + $0x3e8] sm:$0xff]
          %v641 = vld [vmem:[#allocation10 + $0x3f0] sm:$0xff]
          %v642 = vld [vmem:[#allocation10 + $0x3f8] sm:$0xff]
          %v771 = vunpack.c.l.b16 %v515
          %v772 = vunpack.c.h.b16 %v515
          %v773 = vunpack.c.l.b16 %v516
          %v774 = vunpack.c.h.b16 %v516
          %v775 = vunpack.c.l.b16 %v517
          %v776 = vunpack.c.h.b16 %v517
          %v777 = vunpack.c.l.b16 %v518
          %v778 = vunpack.c.h.b16 %v518
          %v779 = vunpack.c.l.b16 %v519
          %v780 = vunpack.c.h.b16 %v519
          %v781 = vunpack.c.l.b16 %v520
          %v782 = vunpack.c.h.b16 %v520
          %v783 = vunpack.c.l.b16 %v521
          %v784 = vunpack.c.h.b16 %v521
          %v785 = vunpack.c.l.b16 %v522
          %v786 = vunpack.c.h.b16 %v522
          %v787 = vunpack.c.l.b16 %v523
          %v788 = vunpack.c.h.b16 %v523
          %v789 = vunpack.c.l.b16 %v524
          %v790 = vunpack.c.h.b16 %v524
          %v791 = vunpack.c.l.b16 %v525
          %v792 = vunpack.c.h.b16 %v525
          %v793 = vunpack.c.l.b16 %v526
          %v794 = vunpack.c.h.b16 %v526
          %v795 = vunpack.c.l.b16 %v527
          %v796 = vunpack.c.h.b16 %v527
          %v797 = vunpack.c.l.b16 %v528
          %v798 = vunpack.c.h.b16 %v528
          %v799 = vunpack.c.l.b16 %v529
          %v800 = vunpack.c.h.b16 %v529
          %v801 = vunpack.c.l.b16 %v530
          %v802 = vunpack.c.h.b16 %v530
          %v803 = vunpack.c.l.b16 %v531
          %v804 = vunpack.c.h.b16 %v531
          %v805 = vunpack.c.l.b16 %v532
          %v806 = vunpack.c.h.b16 %v532
          %v807 = vunpack.c.l.b16 %v533
          %v808 = vunpack.c.h.b16 %v533
          %v809 = vunpack.c.l.b16 %v534
          %v810 = vunpack.c.h.b16 %v534
          %v811 = vunpack.c.l.b16 %v535
          %v812 = vunpack.c.h.b16 %v535
          %v813 = vunpack.c.l.b16 %v536
          %v814 = vunpack.c.h.b16 %v536
          %v815 = vunpack.c.l.b16 %v537
          %v816 = vunpack.c.h.b16 %v537
          %v817 = vunpack.c.l.b16 %v538
          %v818 = vunpack.c.h.b16 %v538
          %v819 = vunpack.c.l.b16 %v539
          %v820 = vunpack.c.h.b16 %v539
          %v821 = vunpack.c.l.b16 %v540
          %v822 = vunpack.c.h.b16 %v540
          %v823 = vunpack.c.l.b16 %v541
          %v824 = vunpack.c.h.b16 %v541
          %v825 = vunpack.c.l.b16 %v542
          %v826 = vunpack.c.h.b16 %v542
          %v827 = vunpack.c.l.b16 %v543
          %v828 = vunpack.c.h.b16 %v543
          %v829 = vunpack.c.l.b16 %v544
          %v830 = vunpack.c.h.b16 %v544
          %v831 = vunpack.c.l.b16 %v545
          %v832 = vunpack.c.h.b16 %v545
          %v833 = vunpack.c.l.b16 %v546
          %v834 = vunpack.c.h.b16 %v546
          %v835 = vunpack.c.l.b16 %v547
          %v836 = vunpack.c.h.b16 %v547
          %v837 = vunpack.c.l.b16 %v548
          %v838 = vunpack.c.h.b16 %v548
          %v839 = vunpack.c.l.b16 %v549
          %v840 = vunpack.c.h.b16 %v549
          %v841 = vunpack.c.l.b16 %v550
          %v842 = vunpack.c.h.b16 %v550
          %v843 = vunpack.c.l.b16 %v551
          %v844 = vunpack.c.h.b16 %v551
          %v845 = vunpack.c.l.b16 %v552
          %v846 = vunpack.c.h.b16 %v552
          %v847 = vunpack.c.l.b16 %v553
          %v848 = vunpack.c.h.b16 %v553
          %v849 = vunpack.c.l.b16 %v554
          %v850 = vunpack.c.h.b16 %v554
          %v851 = vunpack.c.l.b16 %v555
          %v852 = vunpack.c.h.b16 %v555
          %v853 = vunpack.c.l.b16 %v556
          %v854 = vunpack.c.h.b16 %v556
          %v855 = vunpack.c.l.b16 %v557
          %v856 = vunpack.c.h.b16 %v557
          %v857 = vunpack.c.l.b16 %v558
          %v858 = vunpack.c.h.b16 %v558
          %v859 = vunpack.c.l.b16 %v559
          %v860 = vunpack.c.h.b16 %v559
          %v861 = vunpack.c.l.b16 %v560
          %v862 = vunpack.c.h.b16 %v560
          %v863 = vunpack.c.l.b16 %v561
          %v864 = vunpack.c.h.b16 %v561
          %v865 = vunpack.c.l.b16 %v562
          %v866 = vunpack.c.h.b16 %v562
          %v867 = vunpack.c.l.b16 %v563
          %v868 = vunpack.c.h.b16 %v563
          %v869 = vunpack.c.l.b16 %v564
          %v870 = vunpack.c.h.b16 %v564
          %v871 = vunpack.c.l.b16 %v565
          %v872 = vunpack.c.h.b16 %v565
          %v873 = vunpack.c.l.b16 %v566
          %v874 = vunpack.c.h.b16 %v566
          %v875 = vunpack.c.l.b16 %v567
          %v876 = vunpack.c.h.b16 %v567
          %v877 = vunpack.c.l.b16 %v568
          %v878 = vunpack.c.h.b16 %v568
          %v879 = vunpack.c.l.b16 %v569
          %v880 = vunpack.c.h.b16 %v569
          %v881 = vunpack.c.l.b16 %v570
          %v882 = vunpack.c.h.b16 %v570
          %v883 = vunpack.c.l.b16 %v571
          %v884 = vunpack.c.h.b16 %v571
          %v885 = vunpack.c.l.b16 %v572
          %v886 = vunpack.c.h.b16 %v572
          %v887 = vunpack.c.l.b16 %v573
          %v888 = vunpack.c.h.b16 %v573
          %v889 = vunpack.c.l.b16 %v574
          %v890 = vunpack.c.h.b16 %v574
          %v891 = vunpack.c.l.b16 %v575
          %v892 = vunpack.c.h.b16 %v575
          %v893 = vunpack.c.l.b16 %v576
          %v894 = vunpack.c.h.b16 %v576
          %v895 = vunpack.c.l.b16 %v577
          %v896 = vunpack.c.h.b16 %v577
          %v897 = vunpack.c.l.b16 %v578
          %v898 = vunpack.c.h.b16 %v578
          %v899 = vunpack.c.l.b16 %v579
          %v900 = vunpack.c.h.b16 %v579
          %v901 = vunpack.c.l.b16 %v580
          %v902 = vunpack.c.h.b16 %v580
          %v903 = vunpack.c.l.b16 %v581
          %v904 = vunpack.c.h.b16 %v581
          %v905 = vunpack.c.l.b16 %v582
          %v906 = vunpack.c.h.b16 %v582
          %v907 = vunpack.c.l.b16 %v583
          %v908 = vunpack.c.h.b16 %v583
          %v909 = vunpack.c.l.b16 %v584
          %v910 = vunpack.c.h.b16 %v584
          %v911 = vunpack.c.l.b16 %v585
          %v912 = vunpack.c.h.b16 %v585
          %v913 = vunpack.c.l.b16 %v586
          %v914 = vunpack.c.h.b16 %v586
          %v915 = vunpack.c.l.b16 %v587
          %v916 = vunpack.c.h.b16 %v587
          %v917 = vunpack.c.l.b16 %v588
          %v918 = vunpack.c.h.b16 %v588
          %v919 = vunpack.c.l.b16 %v589
          %v920 = vunpack.c.h.b16 %v589
          %v921 = vunpack.c.l.b16 %v590
          %v922 = vunpack.c.h.b16 %v590
          %v923 = vunpack.c.l.b16 %v591
          %v924 = vunpack.c.h.b16 %v591
          %v925 = vunpack.c.l.b16 %v592
          %v926 = vunpack.c.h.b16 %v592
          %v927 = vunpack.c.l.b16 %v593
          %v928 = vunpack.c.h.b16 %v593
          %v929 = vunpack.c.l.b16 %v594
          %v930 = vunpack.c.h.b16 %v594
          %v931 = vunpack.c.l.b16 %v595
          %v932 = vunpack.c.h.b16 %v595
          %v933 = vunpack.c.l.b16 %v596
          %v934 = vunpack.c.h.b16 %v596
          %v935 = vunpack.c.l.b16 %v597
          %v936 = vunpack.c.h.b16 %v597
          %v937 = vunpack.c.l.b16 %v598
          %v938 = vunpack.c.h.b16 %v598
          %v939 = vunpack.c.l.b16 %v599
          %v940 = vunpack.c.h.b16 %v599
          %v941 = vunpack.c.l.b16 %v600
          %v942 = vunpack.c.h.b16 %v600
          %v943 = vunpack.c.l.b16 %v601
          %v944 = vunpack.c.h.b16 %v601
          %v945 = vunpack.c.l.b16 %v602
          %v946 = vunpack.c.h.b16 %v602
          %v947 = vunpack.c.l.b16 %v603
          %v948 = vunpack.c.h.b16 %v603
          %v949 = vunpack.c.l.b16 %v604
          %v950 = vunpack.c.h.b16 %v604
          %v951 = vunpack.c.l.b16 %v605
          %v952 = vunpack.c.h.b16 %v605
          %v953 = vunpack.c.l.b16 %v606
          %v954 = vunpack.c.h.b16 %v606
          %v955 = vunpack.c.l.b16 %v607
          %v956 = vunpack.c.h.b16 %v607
          %v957 = vunpack.c.l.b16 %v608
          %v958 = vunpack.c.h.b16 %v608
          %v959 = vunpack.c.l.b16 %v609
          %v960 = vunpack.c.h.b16 %v609
          %v961 = vunpack.c.l.b16 %v610
          %v962 = vunpack.c.h.b16 %v610
          %v963 = vunpack.c.l.b16 %v611
          %v964 = vunpack.c.h.b16 %v611
          %v965 = vunpack.c.l.b16 %v612
          %v966 = vunpack.c.h.b16 %v612
          %v967 = vunpack.c.l.b16 %v613
          %v968 = vunpack.c.h.b16 %v613
          %v969 = vunpack.c.l.b16 %v614
          %v970 = vunpack.c.h.b16 %v614
          %v971 = vunpack.c.l.b16 %v615
          %v972 = vunpack.c.h.b16 %v615
          %v973 = vunpack.c.l.b16 %v616
          %v974 = vunpack.c.h.b16 %v616
          %v975 = vunpack.c.l.b16 %v617
          %v976 = vunpack.c.h.b16 %v617
          %v977 = vunpack.c.l.b16 %v618
          %v978 = vunpack.c.h.b16 %v618
          %v979 = vunpack.c.l.b16 %v619
          %v980 = vunpack.c.h.b16 %v619
          %v981 = vunpack.c.l.b16 %v620
          %v982 = vunpack.c.h.b16 %v620
          %v983 = vunpack.c.l.b16 %v621
          %v984 = vunpack.c.h.b16 %v621
          %v985 = vunpack.c.l.b16 %v622
          %v986 = vunpack.c.h.b16 %v622
          %v987 = vunpack.c.l.b16 %v623
          %v988 = vunpack.c.h.b16 %v623
          %v989 = vunpack.c.l.b16 %v624
          %v990 = vunpack.c.h.b16 %v624
          %v991 = vunpack.c.l.b16 %v625
          %v992 = vunpack.c.h.b16 %v625
          %v993 = vunpack.c.l.b16 %v626
          %v994 = vunpack.c.h.b16 %v626
          %v995 = vunpack.c.l.b16 %v627
          %v996 = vunpack.c.h.b16 %v627
          %v997 = vunpack.c.l.b16 %v628
          %v998 = vunpack.c.h.b16 %v628
          %v999 = vunpack.c.l.b16 %v629
          %v1000 = vunpack.c.h.b16 %v629
          %v1001 = vunpack.c.l.b16 %v630
          %v1002 = vunpack.c.h.b16 %v630
          %v1003 = vunpack.c.l.b16 %v631
          %v1004 = vunpack.c.h.b16 %v631
          %v1005 = vunpack.c.l.b16 %v632
          %v1006 = vunpack.c.h.b16 %v632
          %v1007 = vunpack.c.l.b16 %v633
          %v1008 = vunpack.c.h.b16 %v633
          %v1009 = vunpack.c.l.b16 %v634
          %v1010 = vunpack.c.h.b16 %v634
          %v1011 = vunpack.c.l.b16 %v635
          %v1012 = vunpack.c.h.b16 %v635
          %v1013 = vunpack.c.l.b16 %v636
          %v1014 = vunpack.c.h.b16 %v636
          %v1015 = vunpack.c.l.b16 %v637
          %v1016 = vunpack.c.h.b16 %v637
          %v1017 = vunpack.c.l.b16 %v638
          %v1018 = vunpack.c.h.b16 %v638
          %v1019 = vunpack.c.l.b16 %v639
          %v1020 = vunpack.c.h.b16 %v639
          %v1021 = vunpack.c.l.b16 %v640
          %v1022 = vunpack.c.h.b16 %v640
          %v1023 = vunpack.c.l.b16 %v641
          %v1024 = vunpack.c.h.b16 %v641
          %v1025 = vunpack.c.l.b16 %v642
          %v1026 = vunpack.c.h.b16 %v642
          %v1027 = vpack.c.b16 %v775, %v771
          %v1028 = vpack.c.b16 %v776, %v772
          %v1029 = vpack.c.b16 %v777, %v773
          %v1030 = vpack.c.b16 %v778, %v774
          %v1031 = vpack.c.b16 %v783, %v779
          %v1032 = vpack.c.b16 %v784, %v780
          %v1033 = vpack.c.b16 %v785, %v781
          %v1034 = vpack.c.b16 %v786, %v782
          %v1035 = vpack.c.b16 %v791, %v787
          %v1036 = vpack.c.b16 %v792, %v788
          %v1037 = vpack.c.b16 %v793, %v789
          %v1038 = vpack.c.b16 %v794, %v790
          %v1039 = vpack.c.b16 %v799, %v795
          %v1040 = vpack.c.b16 %v800, %v796
          %v1041 = vpack.c.b16 %v801, %v797
          %v1042 = vpack.c.b16 %v802, %v798
          %v1043 = vpack.c.b16 %v807, %v803
          %v1044 = vpack.c.b16 %v808, %v804
          %v1045 = vpack.c.b16 %v809, %v805
          %v1046 = vpack.c.b16 %v810, %v806
          %v1047 = vpack.c.b16 %v815, %v811
          %v1048 = vpack.c.b16 %v816, %v812
          %v1049 = vpack.c.b16 %v817, %v813
          %v1050 = vpack.c.b16 %v818, %v814
          %v1051 = vpack.c.b16 %v823, %v819
          %v1052 = vpack.c.b16 %v824, %v820
          %v1053 = vpack.c.b16 %v825, %v821
          %v1054 = vpack.c.b16 %v826, %v822
          %v1055 = vpack.c.b16 %v831, %v827
          %v1056 = vpack.c.b16 %v832, %v828
          %v1057 = vpack.c.b16 %v833, %v829
          %v1058 = vpack.c.b16 %v834, %v830
          %v1059 = vpack.c.b16 %v839, %v835
          %v1060 = vpack.c.b16 %v840, %v836
          %v1061 = vpack.c.b16 %v841, %v837
          %v1062 = vpack.c.b16 %v842, %v838
          %v1063 = vpack.c.b16 %v847, %v843
          %v1064 = vpack.c.b16 %v848, %v844
          %v1065 = vpack.c.b16 %v849, %v845
          %v1066 = vpack.c.b16 %v850, %v846
          %v1067 = vpack.c.b16 %v855, %v851
          %v1068 = vpack.c.b16 %v856, %v852
          %v1069 = vpack.c.b16 %v857, %v853
          %v1070 = vpack.c.b16 %v858, %v854
          %v1071 = vpack.c.b16 %v863, %v859
          %v1072 = vpack.c.b16 %v864, %v860
          %v1073 = vpack.c.b16 %v865, %v861
          %v1074 = vpack.c.b16 %v866, %v862
          %v1075 = vpack.c.b16 %v871, %v867
          %v1076 = vpack.c.b16 %v872, %v868
          %v1077 = vpack.c.b16 %v873, %v869
          %v1078 = vpack.c.b16 %v874, %v870
          %v1079 = vpack.c.b16 %v879, %v875
          %v1080 = vpack.c.b16 %v880, %v876
          %v1081 = vpack.c.b16 %v881, %v877
          %v1082 = vpack.c.b16 %v882, %v878
          %v1083 = vpack.c.b16 %v887, %v883
          %v1084 = vpack.c.b16 %v888, %v884
          %v1085 = vpack.c.b16 %v889, %v885
          %v1086 = vpack.c.b16 %v890, %v886
          %v1087 = vpack.c.b16 %v895, %v891
          %v1088 = vpack.c.b16 %v896, %v892
          %v1089 = vpack.c.b16 %v897, %v893
          %v1090 = vpack.c.b16 %v898, %v894
          %v1091 = vpack.c.b16 %v903, %v899
          %v1092 = vpack.c.b16 %v904, %v900
          %v1093 = vpack.c.b16 %v905, %v901
          %v1094 = vpack.c.b16 %v906, %v902
          %v1095 = vpack.c.b16 %v911, %v907
          %v1096 = vpack.c.b16 %v912, %v908
          %v1097 = vpack.c.b16 %v913, %v909
          %v1098 = vpack.c.b16 %v914, %v910
          %v1099 = vpack.c.b16 %v919, %v915
          %v1100 = vpack.c.b16 %v920, %v916
          %v1101 = vpack.c.b16 %v921, %v917
          %v1102 = vpack.c.b16 %v922, %v918
          %v1103 = vpack.c.b16 %v927, %v923
          %v1104 = vpack.c.b16 %v928, %v924
          %v1105 = vpack.c.b16 %v929, %v925
          %v1106 = vpack.c.b16 %v930, %v926
          %v1107 = vpack.c.b16 %v935, %v931
          %v1108 = vpack.c.b16 %v936, %v932
          %v1109 = vpack.c.b16 %v937, %v933
          %v1110 = vpack.c.b16 %v938, %v934
          %v1111 = vpack.c.b16 %v943, %v939
          %v1112 = vpack.c.b16 %v944, %v940
          %v1113 = vpack.c.b16 %v945, %v941
          %v1114 = vpack.c.b16 %v946, %v942
          %v1115 = vpack.c.b16 %v951, %v947
          %v1116 = vpack.c.b16 %v952, %v948
          %v1117 = vpack.c.b16 %v953, %v949
          %v1118 = vpack.c.b16 %v954, %v950
          %v1119 = vpack.c.b16 %v959, %v955
          %v1120 = vpack.c.b16 %v960, %v956
          %v1121 = vpack.c.b16 %v961, %v957
          %v1122 = vpack.c.b16 %v962, %v958
          %v1123 = vpack.c.b16 %v967, %v963
          %v1124 = vpack.c.b16 %v968, %v964
          %v1125 = vpack.c.b16 %v969, %v965
          %v1126 = vpack.c.b16 %v970, %v966
          %v1127 = vpack.c.b16 %v975, %v971
          %v1128 = vpack.c.b16 %v976, %v972
          %v1129 = vpack.c.b16 %v977, %v973
          %v1130 = vpack.c.b16 %v978, %v974
          %v1131 = vpack.c.b16 %v983, %v979
          %v1132 = vpack.c.b16 %v984, %v980
          %v1133 = vpack.c.b16 %v985, %v981
          %v1134 = vpack.c.b16 %v986, %v982
          %v1135 = vpack.c.b16 %v991, %v987
          %v1136 = vpack.c.b16 %v992, %v988
          %v1137 = vpack.c.b16 %v993, %v989
          %v1138 = vpack.c.b16 %v994, %v990
          %v1139 = vpack.c.b16 %v999, %v995
          %v1140 = vpack.c.b16 %v1000, %v996
          %v1141 = vpack.c.b16 %v1001, %v997
          %v1142 = vpack.c.b16 %v1002, %v998
          %v1143 = vpack.c.b16 %v1007, %v1003
          %v1144 = vpack.c.b16 %v1008, %v1004
          %v1145 = vpack.c.b16 %v1009, %v1005
          %v1146 = vpack.c.b16 %v1010, %v1006
          %v1147 = vpack.c.b16 %v1015, %v1011
          %v1148 = vpack.c.b16 %v1016, %v1012
          %v1149 = vpack.c.b16 %v1017, %v1013
          %v1150 = vpack.c.b16 %v1018, %v1014
          %v1151 = vpack.c.b16 %v1023, %v1019
          %v1152 = vpack.c.b16 %v1024, %v1020
          %v1153 = vpack.c.b16 %v1025, %v1021
          %v1154 = vpack.c.b16 %v1026, %v1022
          %1283 = vmatprep.subr.bf16.mxu0 %v1028
          %1284 = vmatpush1.bf16.msra.mxu0 %v1027
          %1285 = vmatprep.subr.bf16.mxu0 %v1032
          %1286 = vmatpush1.bf16.msra.mxu0 %v1031
          %1287 = vmatprep.subr.bf16.mxu0 %v1036
          %1288 = vmatpush1.bf16.msra.mxu0 %v1035
          %1289 = vmatprep.subr.bf16.mxu0 %v1040
          %1290 = vmatpush1.bf16.msra.mxu0 %v1039
          %1291 = vmatprep.subr.bf16.mxu0 %v1044
          %1292 = vmatpush1.bf16.msra.mxu0 %v1043
          %1293 = vmatprep.subr.bf16.mxu0 %v1048
          %1294 = vmatpush1.bf16.msra.mxu0 %v1047
          %1295 = vmatprep.subr.bf16.mxu0 %v1052
          %1296 = vmatpush1.bf16.msra.mxu0 %v1051
          %1297 = vmatprep.subr.bf16.mxu0 %v1056
          %1298 = vmatpush1.bf16.msra.mxu0 %v1055
          %1299 = vmatprep.subr.bf16.mxu0 %v1060
          %1300 = vmatpush1.bf16.msra.mxu0 %v1059
          %1301 = vmatprep.subr.bf16.mxu0 %v1064
          %1302 = vmatpush1.bf16.msra.mxu0 %v1063
          %1303 = vmatprep.subr.bf16.mxu0 %v1068
          %1304 = vmatpush1.bf16.msra.mxu0 %v1067
          %1305 = vmatprep.subr.bf16.mxu0 %v1072
          %1306 = vmatpush1.bf16.msra.mxu0 %v1071
          %1307 = vmatprep.subr.bf16.mxu0 %v1076
          %1308 = vmatpush1.bf16.msra.mxu0 %v1075
          %1309 = vmatprep.subr.bf16.mxu0 %v1080
          %1310 = vmatpush1.bf16.msra.mxu0 %v1079
          %1311 = vmatprep.subr.bf16.mxu0 %v1084
          %1312 = vmatpush1.bf16.msra.mxu0 %v1083
          %1313 = vmatprep.subr.bf16.mxu0 %v1088
          %1314 = vmatpush1.bf16.msra.mxu0 %v1087
          %1315 = vmatprep.mubr.bf16.mxu0 %v512
          %1316 = vmatmul.mubr.bf16.gmra.mrb[0].mxu0 %v511
          %v1317 = vpop.f32.mrb[0].mxu0
          %v1318 = vadd.f32 0.0, %v1317
          %v1319 = vpop.f32.mrb[0].mxu0
          %v1320 = vadd.f32 0.0, %v1319
          %v1321 = vpop.f32.mrb[0].mxu0
          %v1322 = vpop.f32.mrb[0].mxu0
          %1323 = vdwg.mxu0
          %1324 = vmatprep.subr.bf16.mxu0 %v1092
          %1325 = vmatpush1.bf16.msra.mxu0 %v1091
          %1326 = vmatprep.subr.bf16.mxu0 %v1096
          %1327 = vmatpush1.bf16.msra.mxu0 %v1095
          %1328 = vmatprep.subr.bf16.mxu0 %v1100
          %1329 = vmatpush1.bf16.msra.mxu0 %v1099
          %1330 = vmatprep.subr.bf16.mxu0 %v1104
          %1331 = vmatpush1.bf16.msra.mxu0 %v1103
          %1332 = vmatprep.subr.bf16.mxu0 %v1108
          %1333 = vmatpush1.bf16.msra.mxu0 %v1107
          %1334 = vmatprep.subr.bf16.mxu0 %v1112
          %1335 = vmatpush1.bf16.msra.mxu0 %v1111
          %1336 = vmatprep.subr.bf16.mxu0 %v1116
          %1337 = vmatpush1.bf16.msra.mxu0 %v1115
          %1338 = vmatprep.subr.bf16.mxu0 %v1120
          %1339 = vmatpush1.bf16.msra.mxu0 %v1119
          %1340 = vmatprep.subr.bf16.mxu0 %v1124
          %1341 = vmatpush1.bf16.msra.mxu0 %v1123
          %1342 = vmatprep.subr.bf16.mxu0 %v1128
          %1343 = vmatpush1.bf16.msra.mxu0 %v1127
          %1344 = vmatprep.subr.bf16.mxu0 %v1132
          %1345 = vmatpush1.bf16.msra.mxu0 %v1131
          %1346 = vmatprep.subr.bf16.mxu0 %v1136
          %1347 = vmatpush1.bf16.msra.mxu0 %v1135
          %1348 = vmatprep.subr.bf16.mxu0 %v1140
          %1349 = vmatpush1.bf16.msra.mxu0 %v1139
          %1350 = vmatprep.subr.bf16.mxu0 %v1144
          %1351 = vmatpush1.bf16.msra.mxu0 %v1143
          %1352 = vmatprep.subr.bf16.mxu0 %v1148
          %1353 = vmatpush1.bf16.msra.mxu0 %v1147
          %1354 = vmatprep.subr.bf16.mxu0 %v1152
          %1355 = vmatpush1.bf16.msra.mxu0 %v1151
          %1356 = vmatprep.mubr.bf16.mxu0 %v514
          %1357 = vmatmul.mubr.bf16.gmra.mrb[0].mxu0 %v513
          %v1358 = vpop.f32.mrb[0].mxu0
          %v1359 = vadd.f32 %v1318, %v1358
          %v1360 = vpop.f32.mrb[0].mxu0
          %v1361 = vadd.f32 %v1320, %v1360
          %v1362 = vpop.f32.mrb[0].mxu0
          %v1363 = vpop.f32.mrb[0].mxu0
          %1364 = vdwg.mxu0
          %1365 = vmatprep.subr.bf16.mxu0 %v1030
          %1366 = vmatpush1.bf16.msra.mxu0 %v1029
          %1367 = vmatprep.subr.bf16.mxu0 %v1034
          %1368 = vmatpush1.bf16.msra.mxu0 %v1033
          %1369 = vmatprep.subr.bf16.mxu0 %v1038
          %1370 = vmatpush1.bf16.msra.mxu0 %v1037
          %1371 = vmatprep.subr.bf16.mxu0 %v1042
          %1372 = vmatpush1.bf16.msra.mxu0 %v1041
          %1373 = vmatprep.subr.bf16.mxu0 %v1046
          %1374 = vmatpush1.bf16.msra.mxu0 %v1045
          %1375 = vmatprep.subr.bf16.mxu0 %v1050
          %1376 = vmatpush1.bf16.msra.mxu0 %v1049
          %1377 = vmatprep.subr.bf16.mxu0 %v1054
          %1378 = vmatpush1.bf16.msra.mxu0 %v1053
          %1379 = vmatprep.subr.bf16.mxu0 %v1058
          %1380 = vmatpush1.bf16.msra.mxu0 %v1057
          %1381 = vmatprep.subr.bf16.mxu0 %v1062
          %1382 = vmatpush1.bf16.msra.mxu0 %v1061
          %1383 = vmatprep.subr.bf16.mxu0 %v1066
          %1384 = vmatpush1.bf16.msra.mxu0 %v1065
          %1385 = vmatprep.subr.bf16.mxu0 %v1070
          %1386 = vmatpush1.bf16.msra.mxu0 %v1069
          %1387 = vmatprep.subr.bf16.mxu0 %v1074
          %1388 = vmatpush1.bf16.msra.mxu0 %v1073
          %1389 = vmatprep.subr.bf16.mxu0 %v1078
          %1390 = vmatpush1.bf16.msra.mxu0 %v1077
          %1391 = vmatprep.subr.bf16.mxu0 %v1082
          %1392 = vmatpush1.bf16.msra.mxu0 %v1081
          %1393 = vmatprep.subr.bf16.mxu0 %v1086
          %1394 = vmatpush1.bf16.msra.mxu0 %v1085
          %1395 = vmatprep.subr.bf16.mxu0 %v1090
          %1396 = vmatpush1.bf16.msra.mxu0 %v1089
          %1397 = vmatprep.mubr.bf16.mxu0 %v512
          %1398 = vmatmul.mubr.bf16.gmra.mrb[0].mxu0 %v511
          %v1399 = vpop.f32.mrb[0].mxu0
          %v1400 = vadd.f32 0.0, %v1399
          %v1401 = vpop.f32.mrb[0].mxu0
          %v1402 = vadd.f32 0.0, %v1401
          %v1403 = vpop.f32.mrb[0].mxu0
          %v1404 = vpop.f32.mrb[0].mxu0
          %1405 = vdwg.mxu0
          %1406 = vmatprep.subr.bf16.mxu0 %v1094
          %1407 = vmatpush1.bf16.msra.mxu0 %v1093
          %1408 = vmatprep.subr.bf16.mxu0 %v1098
          %1409 = vmatpush1.bf16.msra.mxu0 %v1097
          %1410 = vmatprep.subr.bf16.mxu0 %v1102
          %1411 = vmatpush1.bf16.msra.mxu0 %v1101
          %1412 = vmatprep.subr.bf16.mxu0 %v1106
          %1413 = vmatpush1.bf16.msra.mxu0 %v1105
          %1414 = vmatprep.subr.bf16.mxu0 %v1110
          %1415 = vmatpush1.bf16.msra.mxu0 %v1109
          %1416 = vmatprep.subr.bf16.mxu0 %v1114
          %1417 = vmatpush1.bf16.msra.mxu0 %v1113
          %1418 = vmatprep.subr.bf16.mxu0 %v1118
          %1419 = vmatpush1.bf16.msra.mxu0 %v1117
          %1420 = vmatprep.subr.bf16.mxu0 %v1122
          %1421 = vmatpush1.bf16.msra.mxu0 %v1121
          %1422 = vmatprep.subr.bf16.mxu0 %v1126
          %1423 = vmatpush1.bf16.msra.mxu0 %v1125
          %1424 = vmatprep.subr.bf16.mxu0 %v1130
          %1425 = vmatpush1.bf16.msra.mxu0 %v1129
          %1426 = vmatprep.subr.bf16.mxu0 %v1134
          %1427 = vmatpush1.bf16.msra.mxu0 %v1133
          %1428 = vmatprep.subr.bf16.mxu0 %v1138
          %1429 = vmatpush1.bf16.msra.mxu0 %v1137
          %1430 = vmatprep.subr.bf16.mxu0 %v1142
          %1431 = vmatpush1.bf16.msra.mxu0 %v1141
          %1432 = vmatprep.subr.bf16.mxu0 %v1146
          %1433 = vmatpush1.bf16.msra.mxu0 %v1145
          %1434 = vmatprep.subr.bf16.mxu0 %v1150
          %1435 = vmatpush1.bf16.msra.mxu0 %v1149
          %1436 = vmatprep.subr.bf16.mxu0 %v1154
          %1437 = vmatpush1.bf16.msra.mxu0 %v1153
          %1438 = vmatprep.mubr.bf16.mxu0 %v514
          %1439 = vmatmul.mubr.bf16.gmra.mrb[0].mxu0 %v513
          %v1440 = vpop.f32.mrb[0].mxu0
          %v1441 = vadd.f32 %v1400, %v1440
          %v1442 = vpop.f32.mrb[0].mxu0
          %v1443 = vadd.f32 %v1402, %v1442
          %v1444 = vpop.f32.mrb[0].mxu0
          %v1445 = vpop.f32.mrb[0].mxu0
          %1446 = vdwg.mxu0
          %s1447 = sshra.s32 %s336, 3
          %s1448 = sand.u32 %s336, 7
          %s1449 = smul.u32 %s1447, 4
          %s1450 = smul.addr %s1449, 8
          %s1451 = scalar_lea.vmem [#allocation2], %s1450
          %1452 = vst [vmem:[%s1451] sm:$0xff] %v1359
          %1453 = vst [vmem:[%s1451 + $0x8] sm:$0xff] %v1361
          %1454 = vst [vmem:[%s1451 + $0x10] sm:$0xff] %v1441
          %1455 = vst [vmem:[%s1451 + $0x18] sm:$0xff] %v1443
        $region68: #{tpu_custom_call.1} parent=43 // pred_fallthru
          _
        %p1456 = scmp.eq.s32.totalorder %s29, 1
        %p1457 = scmp.eq.s32.totalorder %s30, 0
        %p1458 = pnand %p1456, %p1457
        %p1459 = pneg %p1458
        // Predicated region
        $region69: #{tpu_custom_call.1} parent=43 // pred_check
          _
        $region70: #{tpu_custom_call.1} parent=43 // pred_check_branch
          %1461 = sbr.rel (%p1458) target = $region72
        $region71: #{tpu_custom_call.1} parent=43 // pred_region
          %s1462 = scalar_lea.vmem [#allocation9], 1
          %v1463 = vld [vmem:[%s1462] ss:$4 sm:$0xf]
          %s1464 = scalar_lea.vmem [#allocation9], 2
          %v1465 = vld [vmem:[%s1464] ss:$4 sm:$0xf]
          %v1466 = vld [vmem:[#allocation2] sm:$0xff]
          %v1467 = vld [vmem:[#allocation2 + $0x8] sm:$0xff]
          %v1468 = vld [vmem:[#allocation2 + $0x10] sm:$0xff]
          %v1469 = vld [vmem:[#allocation2 + $0x18] sm:$0xff]
          %v1470 = vld [vmem:[#allocation2 + $0x20] sm:$0xff]
          %v1471 = vld [vmem:[#allocation2 + $0x28] sm:$0xff]
          %v1472 = vld [vmem:[#allocation2 + $0x30] sm:$0xff]
          %v1473 = vld [vmem:[#allocation2 + $0x38] sm:$0xff]
          %v1474 = vadd.f32 %v1466, %v1470
          %v1475 = vrot.slane %v1474, 4
          %v1476 = vadd.f32 %v1474, %v1475
          %v1477 = vrot.slane %v1476, 2
          %v1478 = vadd.f32 %v1476, %v1477
          %v1479 = vrot.slane %v1478, 1
          %v1480 = vadd.f32 %v1478, %v1479
          %v1481 = vadd.f32 %v1467, %v1471
          %v1482 = vrot.slane %v1481, 4
          %v1483 = vadd.f32 %v1481, %v1482
          %v1484 = vrot.slane %v1483, 2
          %v1485 = vadd.f32 %v1483, %v1484
          %v1486 = vrot.slane %v1485, 1
          %v1487 = vadd.f32 %v1485, %v1486
          %v1488 = vadd.f32 %v1468, %v1472
          %v1489 = vrot.slane %v1488, 4
          %v1490 = vadd.f32 %v1488, %v1489
          %v1491 = vrot.slane %v1490, 2
          %v1492 = vadd.f32 %v1490, %v1491
          %v1493 = vrot.slane %v1492, 1
          %v1494 = vadd.f32 %v1492, %v1493
          %v1495 = vadd.f32 %v1469, %v1473
          %v1496 = vrot.slane %v1495, 4
          %v1497 = vadd.f32 %v1495, %v1496
          %v1498 = vrot.slane %v1497, 2
          %v1499 = vadd.f32 %v1497, %v1498
          %v1500 = vrot.slane %v1499, 1
          %v1501 = vadd.f32 %v1499, %v1500
          %v1502 = vrcp.pop 16.0
          %v1503 = vmul.f32 %v1480, %v1502
          %v1504 = vmul.f32 %v1487, %v1502
          %v1505 = vmul.f32 %v1494, %v1502
          %v1506 = vmul.f32 %v1501, %v1502
          %v1507 = vsub.f32 %v1466, %v1503
          %v1508 = vsub.f32 %v1467, %v1504
          %v1509 = vsub.f32 %v1468, %v1505
          %v1510 = vsub.f32 %v1469, %v1506
          %v1511 = vsub.f32 %v1470, %v1503
          %v1512 = vsub.f32 %v1471, %v1504
          %v1513 = vsub.f32 %v1472, %v1505
          %v1514 = vsub.f32 %v1473, %v1506
          %v1515 = vmul.f32 %v1507, %v1507
          %v1516 = vmul.f32 %v1508, %v1508
          %v1517 = vmul.f32 %v1509, %v1509
          %v1518 = vmul.f32 %v1510, %v1510
          %v1519 = vmul.f32 %v1511, %v1511
          %v1520 = vmul.f32 %v1512, %v1512
          %v1521 = vmul.f32 %v1513, %v1513
          %v1522 = vmul.f32 %v1514, %v1514
          %v1523 = vadd.f32 %v1515, %v1519
          %v1524 = vrot.slane %v1523, 4
          %v1525 = vadd.f32 %v1523, %v1524
          %v1526 = vrot.slane %v1525, 2
          %v1527 = vadd.f32 %v1525, %v1526
          %v1528 = vrot.slane %v1527, 1
          %v1529 = vadd.f32 %v1527, %v1528
          %v1530 = vadd.f32 %v1516, %v1520
          %v1531 = vrot.slane %v1530, 4
          %v1532 = vadd.f32 %v1530, %v1531
          %v1533 = vrot.slane %v1532, 2
          %v1534 = vadd.f32 %v1532, %v1533
          %v1535 = vrot.slane %v1534, 1
          %v1536 = vadd.f32 %v1534, %v1535
          %v1537 = vadd.f32 %v1517, %v1521
          %v1538 = vrot.slane %v1537, 4
          %v1539 = vadd.f32 %v1537, %v1538
          %v1540 = vrot.slane %v1539, 2
          %v1541 = vadd.f32 %v1539, %v1540
          %v1542 = vrot.slane %v1541, 1
          %v1543 = vadd.f32 %v1541, %v1542
          %v1544 = vadd.f32 %v1518, %v1522
          %v1545 = vrot.slane %v1544, 4
          %v1546 = vadd.f32 %v1544, %v1545
          %v1547 = vrot.slane %v1546, 2
          %v1548 = vadd.f32 %v1546, %v1547
          %v1549 = vrot.slane %v1548, 1
          %v1550 = vadd.f32 %v1548, %v1549
          %v1551 = vmul.f32 %v1529, %v1502
          %v1552 = vmul.f32 %v1536, %v1502
          %v1553 = vmul.f32 %v1543, %v1502
          %v1554 = vmul.f32 %v1550, %v1502
          %v1555 = vadd.f32 %v1551, 1e-05
          %v1556 = vadd.f32 %v1552, 1e-05
          %v1557 = vadd.f32 %v1553, 1e-05
          %v1558 = vadd.f32 %v1554, 1e-05
          %v1559 = vrsqrt.pop %v1555
          %v1560 = vrsqrt.pop %v1556
          %v1561 = vrsqrt.pop %v1557
          %v1562 = vrsqrt.pop %v1558
          %v1567 = vcombine.low %v1559, %v1560
          %v1568 = vcombine.low %v1561, %v1562
          %v1570 = vunpack.c.l.s4 1966171168
          %v1571 = vunpack.c.0.s8 %v1570
          %v1572 = vlaneseq
          %v1573 = vshrl.u32 %v1572, 7
          %v1574 = vsub.s32 %v1571, %v1573
          %v1575 = vrot.slane %v1567, %v1574
          %v1577 = vunpack.c.l.s4 1966171168
          %v1578 = vunpack.c.0.s8 %v1577
          %v1579 = vlaneseq
          %v1580 = vshrl.u32 %v1579, 7
          %v1581 = vsub.s32 %v1578, %v1580
          %v1582 = vrot.slane %v1568, %v1581
          %v1583 = vcombine.low %v1575, %v1582
          %v1585 = vunpack.c.l.s4 1966171168
          %v1586 = vunpack.c.0.s8 %v1585
          %v1587 = vlaneseq
          %v1588 = vshrl.u32 %v1587, 7
          %v1589 = vsub.s32 %v1586, %v1588
          %v1590 = vrot.slane %v1583, %v1589
          %v1592 = vmul.f32 %v1463, %v1590
          %v1593 = vlaneseq
          %vm1594 = vcmp.ge.s32.totalorder %v1593, 0
          %vm1595 = vcmp.lt.s32.totalorder %v1593, 512
          %vm1596 = vmand %vm1594, %vm1595
          %1597 = vst.msk [vmem:[#allocation3] ss:$2 sm:$0xf] %vm1596, %v1592
          %v1599 = vlaneseq
          %v1600 = vshrl.u32 %v1599, 7
          %v1601 = vsub.s32 0, %v1600
          %v1602 = vrot.slane %v1592, %v1601
          %v1603 = vlaneseq
          %v1604 = vshrl.u32 %v1603, 7
          %v1605 = vsub.s32 1, %v1604
          %v1606 = vrot.slane %v1592, %v1605
          %v1607 = vlaneseq
          %v1608 = vshrl.u32 %v1607, 7
          %v1609 = vsub.s32 2, %v1608
          %v1610 = vrot.slane %v1592, %v1609
          %v1611 = vlaneseq
          %v1612 = vshrl.u32 %v1611, 7
          %v1613 = vsub.s32 3, %v1612
          %v1614 = vrot.slane %v1592, %v1613
          %v1619 = vmul.f32 %v1503, %v1602
          %v1620 = vmul.f32 %v1504, %v1606
          %v1621 = vmul.f32 %v1505, %v1610
          %v1622 = vmul.f32 %v1506, %v1614
          %v1627 = vcombine.low %v1619, %v1620
          %v1628 = vcombine.low %v1621, %v1622
          %v1630 = vunpack.c.l.s4 1966171168
          %v1631 = vunpack.c.0.s8 %v1630
          %v1632 = vlaneseq
          %v1633 = vshrl.u32 %v1632, 7
          %v1634 = vsub.s32 %v1631, %v1633
          %v1635 = vrot.slane %v1627, %v1634
          %v1637 = vunpack.c.l.s4 1966171168
          %v1638 = vunpack.c.0.s8 %v1637
          %v1639 = vlaneseq
          %v1640 = vshrl.u32 %v1639, 7
          %v1641 = vsub.s32 %v1638, %v1640
          %v1642 = vrot.slane %v1628, %v1641
          %v1643 = vcombine.low %v1635, %v1642
          %v1645 = vunpack.c.l.s4 1966171168
          %v1646 = vunpack.c.0.s8 %v1645
          %v1647 = vlaneseq
          %v1648 = vshrl.u32 %v1647, 7
          %v1649 = vsub.s32 %v1646, %v1648
          %v1650 = vrot.slane %v1643, %v1649
          %v1652 = vsub.f32 %v1465, %v1650
          %s1653 = scalar_lea.vmem [#allocation3], 1
          %1654 = vst.msk [vmem:[%s1653] ss:$2 sm:$0xf] %vm1596, %v1652
        $region72: #{tpu_custom_call.1} parent=43 // pred_fallthru
          _
        // Predicated region
        $region73: #{tpu_custom_call.1} parent=43 // pred_check
          %p1655 = pneg %p1456
        $region74: #{tpu_custom_call.1} parent=43 // pred_check_branch
          %1657 = sbr.rel (%p1655) target = $region76
        $region75: #{tpu_custom_call.1} parent=43 // pred_region
          %s1658 = sshra.s32 %s336, 3
          %s1659 = sand.u32 %s336, 7
          %s1660 = smul.u32 %s1658, 4
          %s1661 = smul.addr %s1660, 8
          %s1662 = scalar_lea.vmem [#allocation2], %s1661
          %v1663 = vld [vmem:[%s1662] sm:$0xff]
          %v1664 = vld [vmem:[%s1662 + $0x8] sm:$0xff]
          %v1665 = vld [vmem:[%s1662 + $0x10] sm:$0xff]
          %v1666 = vld [vmem:[%s1662 + $0x18] sm:$0xff]
          %v1667 = vld [vmem:[#allocation3] ss:$2 sm:$0xf]
          %v1669 = vlaneseq
          %v1670 = vshrl.u32 %v1669, 7
          %v1671 = vsub.s32 0, %v1670
          %v1672 = vrot.slane %v1667, %v1671
          %v1673 = vlaneseq
          %v1674 = vshrl.u32 %v1673, 7
          %v1675 = vsub.s32 1, %v1674
          %v1676 = vrot.slane %v1667, %v1675
          %v1677 = vlaneseq
          %v1678 = vshrl.u32 %v1677, 7
          %v1679 = vsub.s32 2, %v1678
          %v1680 = vrot.slane %v1667, %v1679
          %v1681 = vlaneseq
          %v1682 = vshrl.u32 %v1681, 7
          %v1683 = vsub.s32 3, %v1682
          %v1684 = vrot.slane %v1667, %v1683
          %v1689 = vmul.f32 %v1663, %v1672
          %v1690 = vmul.f32 %v1664, %v1676
          %v1691 = vmul.f32 %v1665, %v1680
          %v1692 = vmul.f32 %v1666, %v1684
          %s1693 = scalar_lea.vmem [#allocation3], 1
          %v1694 = vld [vmem:[%s1693] ss:$2 sm:$0xf]
          %v1696 = vlaneseq
          %v1697 = vshrl.u32 %v1696, 7
          %v1698 = vsub.s32 0, %v1697
          %v1699 = vrot.slane %v1694, %v1698
          %v1700 = vlaneseq
          %v1701 = vshrl.u32 %v1700, 7
          %v1702 = vsub.s32 1, %v1701
          %v1703 = vrot.slane %v1694, %v1702
          %v1704 = vlaneseq
          %v1705 = vshrl.u32 %v1704, 7
          %v1706 = vsub.s32 2, %v1705
          %v1707 = vrot.slane %v1694, %v1706
          %v1708 = vlaneseq
          %v1709 = vshrl.u32 %v1708, 7
          %v1710 = vsub.s32 3, %v1709
          %v1711 = vrot.slane %v1694, %v1710
          %v1716 = vadd.f32 %v1689, %v1699
          %v1717 = vadd.f32 %v1690, %v1703
          %v1718 = vadd.f32 %v1691, %v1707
          %v1719 = vadd.f32 %v1692, %v1711
          %vm1720 = vcmp.gt.f32.partialorder %v1716, 0.0
          %vm1721 = vcmp.gt.f32.partialorder %v1717, 0.0
          %vm1722 = vcmp.gt.f32.partialorder %v1718, 0.0
          %vm1723 = vcmp.gt.f32.partialorder %v1719, 0.0
          %v1724 = vmul.f32 %v1716, 0.2
          %v1725 = vmul.f32 %v1717, 0.2
          %v1726 = vmul.f32 %v1718, 0.2
          %v1727 = vmul.f32 %v1719, 0.2
          %v1728 = vsel %vm1720, %v1716, %v1724
          %v1729 = vsel %vm1721, %v1717, %v1725
          %v1730 = vsel %vm1722, %v1718, %v1726
          %v1731 = vsel %vm1723, %v1719, %v1727
          %v1732 = vpack.c.bf16 %v1728, %v1728
          %v1733 = vpack.c.bf16 %v1729, %v1729
          %v1734 = vpack.c.bf16 %v1730, %v1730
          %v1735 = vpack.c.bf16 %v1731, %v1731
          %v1736 = vld [vmem:[#allocation12] sm:$0xff]
          %v1737 = vld [vmem:[#allocation12 + $0x8] sm:$0xff]
          %v1738 = vld [vmem:[#allocation12 + $0x10] sm:$0xff]
          %v1739 = vld [vmem:[#allocation12 + $0x18] sm:$0xff]
          %v1740 = vld [vmem:[#allocation12 + $0x20] sm:$0xff]
          %v1741 = vld [vmem:[#allocation12 + $0x28] sm:$0xff]
          %v1742 = vld [vmem:[#allocation12 + $0x30] sm:$0xff]
          %v1743 = vld [vmem:[#allocation12 + $0x38] sm:$0xff]
          %v1744 = vld [vmem:[#allocation12 + $0x40] sm:$0xff]
          %v1745 = vld [vmem:[#allocation12 + $0x48] sm:$0xff]
          %v1746 = vld [vmem:[#allocation12 + $0x50] sm:$0xff]
          %v1747 = vld [vmem:[#allocation12 + $0x58] sm:$0xff]
          %v1748 = vld [vmem:[#allocation12 + $0x60] sm:$0xff]
          %v1749 = vld [vmem:[#allocation12 + $0x68] sm:$0xff]
          %v1750 = vld [vmem:[#allocation12 + $0x70] sm:$0xff]
          %v1751 = vld [vmem:[#allocation12 + $0x78] sm:$0xff]
          %v1752 = vld [vmem:[#allocation12 + $0x80] sm:$0xff]
          %v1753 = vld [vmem:[#allocation12 + $0x88] sm:$0xff]
          %v1754 = vld [vmem:[#allocation12 + $0x90] sm:$0xff]
          %v1755 = vld [vmem:[#allocation12 + $0x98] sm:$0xff]
          %v1756 = vld [vmem:[#allocation12 + $0xa0] sm:$0xff]
          %v1757 = vld [vmem:[#allocation12 + $0xa8] sm:$0xff]
          %v1758 = vld [vmem:[#allocation12 + $0xb0] sm:$0xff]
          %v1759 = vld [vmem:[#allocation12 + $0xb8] sm:$0xff]
          %v1760 = vld [vmem:[#allocation12 + $0xc0] sm:$0xff]
          %v1761 = vld [vmem:[#allocation12 + $0xc8] sm:$0xff]
          %v1762 = vld [vmem:[#allocation12 + $0xd0] sm:$0xff]
          %v1763 = vld [vmem:[#allocation12 + $0xd8] sm:$0xff]
          %v1764 = vld [vmem:[#allocation12 + $0xe0] sm:$0xff]
          %v1765 = vld [vmem:[#allocation12 + $0xe8] sm:$0xff]
          %v1766 = vld [vmem:[#allocation12 + $0xf0] sm:$0xff]
          %v1767 = vld [vmem:[#allocation12 + $0xf8] sm:$0xff]
          %v1768 = vld [vmem:[#allocation12 + $0x100] sm:$0xff]
          %v1769 = vld [vmem:[#allocation12 + $0x108] sm:$0xff]
          %v1770 = vld [vmem:[#allocation12 + $0x110] sm:$0xff]
          %v1771 = vld [vmem:[#allocation12 + $0x118] sm:$0xff]
          %v1772 = vld [vmem:[#allocation12 + $0x120] sm:$0xff]
          %v1773 = vld [vmem:[#allocation12 + $0x128] sm:$0xff]
          %v1774 = vld [vmem:[#allocation12 + $0x130] sm:$0xff]
          %v1775 = vld [vmem:[#allocation12 + $0x138] sm:$0xff]
          %v1776 = vld [vmem:[#allocation12 + $0x140] sm:$0xff]
          %v1777 = vld [vmem:[#allocation12 + $0x148] sm:$0xff]
          %v1778 = vld [vmem:[#allocation12 + $0x150] sm:$0xff]
          %v1779 = vld [vmem:[#allocation12 + $0x158] sm:$0xff]
          %v1780 = vld [vmem:[#allocation12 + $0x160] sm:$0xff]
          %v1781 = vld [vmem:[#allocation12 + $0x168] sm:$0xff]
          %v1782 = vld [vmem:[#allocation12 + $0x170] sm:$0xff]
          %v1783 = vld [vmem:[#allocation12 + $0x178] sm:$0xff]
          %v1784 = vld [vmem:[#allocation12 + $0x180] sm:$0xff]
          %v1785 = vld [vmem:[#allocation12 + $0x188] sm:$0xff]
          %v1786 = vld [vmem:[#allocation12 + $0x190] sm:$0xff]
          %v1787 = vld [vmem:[#allocation12 + $0x198] sm:$0xff]
          %v1788 = vld [vmem:[#allocation12 + $0x1a0] sm:$0xff]
          %v1789 = vld [vmem:[#allocation12 + $0x1a8] sm:$0xff]
          %v1790 = vld [vmem:[#allocation12 + $0x1b0] sm:$0xff]
          %v1791 = vld [vmem:[#allocation12 + $0x1b8] sm:$0xff]
          %v1792 = vld [vmem:[#allocation12 + $0x1c0] sm:$0xff]
          %v1793 = vld [vmem:[#allocation12 + $0x1c8] sm:$0xff]
          %v1794 = vld [vmem:[#allocation12 + $0x1d0] sm:$0xff]
          %v1795 = vld [vmem:[#allocation12 + $0x1d8] sm:$0xff]
          %v1796 = vld [vmem:[#allocation12 + $0x1e0] sm:$0xff]
          %v1797 = vld [vmem:[#allocation12 + $0x1e8] sm:$0xff]
          %v1798 = vld [vmem:[#allocation12 + $0x1f0] sm:$0xff]
          %v1799 = vld [vmem:[#allocation12 + $0x1f8] sm:$0xff]
          %v1800 = vld [vmem:[#allocation12 + $0x200] sm:$0xff]
          %v1801 = vld [vmem:[#allocation12 + $0x208] sm:$0xff]
          %v1802 = vld [vmem:[#allocation12 + $0x210] sm:$0xff]
          %v1803 = vld [vmem:[#allocation12 + $0x218] sm:$0xff]
          %v1804 = vld [vmem:[#allocation12 + $0x220] sm:$0xff]
          %v1805 = vld [vmem:[#allocation12 + $0x228] sm:$0xff]
          %v1806 = vld [vmem:[#allocation12 + $0x230] sm:$0xff]
          %v1807 = vld [vmem:[#allocation12 + $0x238] sm:$0xff]
          %v1808 = vld [vmem:[#allocation12 + $0x240] sm:$0xff]
          %v1809 = vld [vmem:[#allocation12 + $0x248] sm:$0xff]
          %v1810 = vld [vmem:[#allocation12 + $0x250] sm:$0xff]
          %v1811 = vld [vmem:[#allocation12 + $0x258] sm:$0xff]
          %v1812 = vld [vmem:[#allocation12 + $0x260] sm:$0xff]
          %v1813 = vld [vmem:[#allocation12 + $0x268] sm:$0xff]
          %v1814 = vld [vmem:[#allocation12 + $0x270] sm:$0xff]
          %v1815 = vld [vmem:[#allocation12 + $0x278] sm:$0xff]
          %v1816 = vld [vmem:[#allocation12 + $0x280] sm:$0xff]
          %v1817 = vld [vmem:[#allocation12 + $0x288] sm:$0xff]
          %v1818 = vld [vmem:[#allocation12 + $0x290] sm:$0xff]
          %v1819 = vld [vmem:[#allocation12 + $0x298] sm:$0xff]
          %v1820 = vld [vmem:[#allocation12 + $0x2a0] sm:$0xff]
          %v1821 = vld [vmem:[#allocation12 + $0x2a8] sm:$0xff]
          %v1822 = vld [vmem:[#allocation12 + $0x2b0] sm:$0xff]
          %v1823 = vld [vmem:[#allocation12 + $0x2b8] sm:$0xff]
          %v1824 = vld [vmem:[#allocation12 + $0x2c0] sm:$0xff]
          %v1825 = vld [vmem:[#allocation12 + $0x2c8] sm:$0xff]
          %v1826 = vld [vmem:[#allocation12 + $0x2d0] sm:$0xff]
          %v1827 = vld [vmem:[#allocation12 + $0x2d8] sm:$0xff]
          %v1828 = vld [vmem:[#allocation12 + $0x2e0] sm:$0xff]
          %v1829 = vld [vmem:[#allocation12 + $0x2e8] sm:$0xff]
          %v1830 = vld [vmem:[#allocation12 + $0x2f0] sm:$0xff]
          %v1831 = vld [vmem:[#allocation12 + $0x2f8] sm:$0xff]
          %v1832 = vld [vmem:[#allocation12 + $0x300] sm:$0xff]
          %v1833 = vld [vmem:[#allocation12 + $0x308] sm:$0xff]
          %v1834 = vld [vmem:[#allocation12 + $0x310] sm:$0xff]
          %v1835 = vld [vmem:[#allocation12 + $0x318] sm:$0xff]
          %v1836 = vld [vmem:[#allocation12 + $0x320] sm:$0xff]
          %v1837 = vld [vmem:[#allocation12 + $0x328] sm:$0xff]
          %v1838 = vld [vmem:[#allocation12 + $0x330] sm:$0xff]
          %v1839 = vld [vmem:[#allocation12 + $0x338] sm:$0xff]
          %v1840 = vld [vmem:[#allocation12 + $0x340] sm:$0xff]
          %v1841 = vld [vmem:[#allocation12 + $0x348] sm:$0xff]
          %v1842 = vld [vmem:[#allocation12 + $0x350] sm:$0xff]
          %v1843 = vld [vmem:[#allocation12 + $0x358] sm:$0xff]
          %v1844 = vld [vmem:[#allocation12 + $0x360] sm:$0xff]
          %v1845 = vld [vmem:[#allocation12 + $0x368] sm:$0xff]
          %v1846 = vld [vmem:[#allocation12 + $0x370] sm:$0xff]
          %v1847 = vld [vmem:[#allocation12 + $0x378] sm:$0xff]
          %v1848 = vld [vmem:[#allocation12 + $0x380] sm:$0xff]
          %v1849 = vld [vmem:[#allocation12 + $0x388] sm:$0xff]
          %v1850 = vld [vmem:[#allocation12 + $0x390] sm:$0xff]
          %v1851 = vld [vmem:[#allocation12 + $0x398] sm:$0xff]
          %v1852 = vld [vmem:[#allocation12 + $0x3a0] sm:$0xff]
          %v1853 = vld [vmem:[#allocation12 + $0x3a8] sm:$0xff]
          %v1854 = vld [vmem:[#allocation12 + $0x3b0] sm:$0xff]
          %v1855 = vld [vmem:[#allocation12 + $0x3b8] sm:$0xff]
          %v1856 = vld [vmem:[#allocation12 + $0x3c0] sm:$0xff]
          %v1857 = vld [vmem:[#allocation12 + $0x3c8] sm:$0xff]
          %v1858 = vld [vmem:[#allocation12 + $0x3d0] sm:$0xff]
          %v1859 = vld [vmem:[#allocation12 + $0x3d8] sm:$0xff]
          %v1860 = vld [vmem:[#allocation12 + $0x3e0] sm:$0xff]
          %v1861 = vld [vmem:[#allocation12 + $0x3e8] sm:$0xff]
          %v1862 = vld [vmem:[#allocation12 + $0x3f0] sm:$0xff]
          %v1863 = vld [vmem:[#allocation12 + $0x3f8] sm:$0xff]
          %v1864 = vld [vmem:[#allocation12 + $0x400] sm:$0xff]
          %v1865 = vld [vmem:[#allocation12 + $0x408] sm:$0xff]
          %v1866 = vld [vmem:[#allocation12 + $0x410] sm:$0xff]
          %v1867 = vld [vmem:[#allocation12 + $0x418] sm:$0xff]
          %v1868 = vld [vmem:[#allocation12 + $0x420] sm:$0xff]
          %v1869 = vld [vmem:[#allocation12 + $0x428] sm:$0xff]
          %v1870 = vld [vmem:[#allocation12 + $0x430] sm:$0xff]
          %v1871 = vld [vmem:[#allocation12 + $0x438] sm:$0xff]
          %v1872 = vld [vmem:[#allocation12 + $0x440] sm:$0xff]
          %v1873 = vld [vmem:[#allocation12 + $0x448] sm:$0xff]
          %v1874 = vld [vmem:[#allocation12 + $0x450] sm:$0xff]
          %v1875 = vld [vmem:[#allocation12 + $0x458] sm:$0xff]
          %v1876 = vld [vmem:[#allocation12 + $0x460] sm:$0xff]
          %v1877 = vld [vmem:[#allocation12 + $0x468] sm:$0xff]
          %v1878 = vld [vmem:[#allocation12 + $0x470] sm:$0xff]
          %v1879 = vld [vmem:[#allocation12 + $0x478] sm:$0xff]
          %v1880 = vld [vmem:[#allocation12 + $0x480] sm:$0xff]
          %v1881 = vld [vmem:[#allocation12 + $0x488] sm:$0xff]
          %v1882 = vld [vmem:[#allocation12 + $0x490] sm:$0xff]
          %v1883 = vld [vmem:[#allocation12 + $0x498] sm:$0xff]
          %v1884 = vld [vmem:[#allocation12 + $0x4a0] sm:$0xff]
          %v1885 = vld [vmem:[#allocation12 + $0x4a8] sm:$0xff]
          %v1886 = vld [vmem:[#allocation12 + $0x4b0] sm:$0xff]
          %v1887 = vld [vmem:[#allocation12 + $0x4b8] sm:$0xff]
          %v1888 = vld [vmem:[#allocation12 + $0x4c0] sm:$0xff]
          %v1889 = vld [vmem:[#allocation12 + $0x4c8] sm:$0xff]
          %v1890 = vld [vmem:[#allocation12 + $0x4d0] sm:$0xff]
          %v1891 = vld [vmem:[#allocation12 + $0x4d8] sm:$0xff]
          %v1892 = vld [vmem:[#allocation12 + $0x4e0] sm:$0xff]
          %v1893 = vld [vmem:[#allocation12 + $0x4e8] sm:$0xff]
          %v1894 = vld [vmem:[#allocation12 + $0x4f0] sm:$0xff]
          %v1895 = vld [vmem:[#allocation12 + $0x4f8] sm:$0xff]
          %v1896 = vld [vmem:[#allocation12 + $0x500] sm:$0xff]
          %v1897 = vld [vmem:[#allocation12 + $0x508] sm:$0xff]
          %v1898 = vld [vmem:[#allocation12 + $0x510] sm:$0xff]
          %v1899 = vld [vmem:[#allocation12 + $0x518] sm:$0xff]
          %v1900 = vld [vmem:[#allocation12 + $0x520] sm:$0xff]
          %v1901 = vld [vmem:[#allocation12 + $0x528] sm:$0xff]
          %v1902 = vld [vmem:[#allocation12 + $0x530] sm:$0xff]
          %v1903 = vld [vmem:[#allocation12 + $0x538] sm:$0xff]
          %v1904 = vld [vmem:[#allocation12 + $0x540] sm:$0xff]
          %v1905 = vld [vmem:[#allocation12 + $0x548] sm:$0xff]
          %v1906 = vld [vmem:[#allocation12 + $0x550] sm:$0xff]
          %v1907 = vld [vmem:[#allocation12 + $0x558] sm:$0xff]
          %v1908 = vld [vmem:[#allocation12 + $0x560] sm:$0xff]
          %v1909 = vld [vmem:[#allocation12 + $0x568] sm:$0xff]
          %v1910 = vld [vmem:[#allocation12 + $0x570] sm:$0xff]
          %v1911 = vld [vmem:[#allocation12 + $0x578] sm:$0xff]
          %v1912 = vld [vmem:[#allocation12 + $0x580] sm:$0xff]
          %v1913 = vld [vmem:[#allocation12 + $0x588] sm:$0xff]
          %v1914 = vld [vmem:[#allocation12 + $0x590] sm:$0xff]
          %v1915 = vld [vmem:[#allocation12 + $0x598] sm:$0xff]
          %v1916 = vld [vmem:[#allocation12 + $0x5a0] sm:$0xff]
          %v1917 = vld [vmem:[#allocation12 + $0x5a8] sm:$0xff]
          %v1918 = vld [vmem:[#allocation12 + $0x5b0] sm:$0xff]
          %v1919 = vld [vmem:[#allocation12 + $0x5b8] sm:$0xff]
          %v1920 = vld [vmem:[#allocation12 + $0x5c0] sm:$0xff]
          %v1921 = vld [vmem:[#allocation12 + $0x5c8] sm:$0xff]
          %v1922 = vld [vmem:[#allocation12 + $0x5d0] sm:$0xff]
          %v1923 = vld [vmem:[#allocation12 + $0x5d8] sm:$0xff]
          %v1924 = vld [vmem:[#allocation12 + $0x5e0] sm:$0xff]
          %v1925 = vld [vmem:[#allocation12 + $0x5e8] sm:$0xff]
          %v1926 = vld [vmem:[#allocation12 + $0x5f0] sm:$0xff]
          %v1927 = vld [vmem:[#allocation12 + $0x5f8] sm:$0xff]
          %v1928 = vld [vmem:[#allocation12 + $0x600] sm:$0xff]
          %v1929 = vld [vmem:[#allocation12 + $0x608] sm:$0xff]
          %v1930 = vld [vmem:[#allocation12 + $0x610] sm:$0xff]
          %v1931 = vld [vmem:[#allocation12 + $0x618] sm:$0xff]
          %v1932 = vld [vmem:[#allocation12 + $0x620] sm:$0xff]
          %v1933 = vld [vmem:[#allocation12 + $0x628] sm:$0xff]
          %v1934 = vld [vmem:[#allocation12 + $0x630] sm:$0xff]
          %v1935 = vld [vmem:[#allocation12 + $0x638] sm:$0xff]
          %v1936 = vld [vmem:[#allocation12 + $0x640] sm:$0xff]
          %v1937 = vld [vmem:[#allocation12 + $0x648] sm:$0xff]
          %v1938 = vld [vmem:[#allocation12 + $0x650] sm:$0xff]
          %v1939 = vld [vmem:[#allocation12 + $0x658] sm:$0xff]
          %v1940 = vld [vmem:[#allocation12 + $0x660] sm:$0xff]
          %v1941 = vld [vmem:[#allocation12 + $0x668] sm:$0xff]
          %v1942 = vld [vmem:[#allocation12 + $0x670] sm:$0xff]
          %v1943 = vld [vmem:[#allocation12 + $0x678] sm:$0xff]
          %v1944 = vld [vmem:[#allocation12 + $0x680] sm:$0xff]
          %v1945 = vld [vmem:[#allocation12 + $0x688] sm:$0xff]
          %v1946 = vld [vmem:[#allocation12 + $0x690] sm:$0xff]
          %v1947 = vld [vmem:[#allocation12 + $0x698] sm:$0xff]
          %v1948 = vld [vmem:[#allocation12 + $0x6a0] sm:$0xff]
          %v1949 = vld [vmem:[#allocation12 + $0x6a8] sm:$0xff]
          %v1950 = vld [vmem:[#allocation12 + $0x6b0] sm:$0xff]
          %v1951 = vld [vmem:[#allocation12 + $0x6b8] sm:$0xff]
          %v1952 = vld [vmem:[#allocation12 + $0x6c0] sm:$0xff]
          %v1953 = vld [vmem:[#allocation12 + $0x6c8] sm:$0xff]
          %v1954 = vld [vmem:[#allocation12 + $0x6d0] sm:$0xff]
          %v1955 = vld [vmem:[#allocation12 + $0x6d8] sm:$0xff]
          %v1956 = vld [vmem:[#allocation12 + $0x6e0] sm:$0xff]
          %v1957 = vld [vmem:[#allocation12 + $0x6e8] sm:$0xff]
          %v1958 = vld [vmem:[#allocation12 + $0x6f0] sm:$0xff]
          %v1959 = vld [vmem:[#allocation12 + $0x6f8] sm:$0xff]
          %v1960 = vld [vmem:[#allocation12 + $0x700] sm:$0xff]
          %v1961 = vld [vmem:[#allocation12 + $0x708] sm:$0xff]
          %v1962 = vld [vmem:[#allocation12 + $0x710] sm:$0xff]
          %v1963 = vld [vmem:[#allocation12 + $0x718] sm:$0xff]
          %v1964 = vld [vmem:[#allocation12 + $0x720] sm:$0xff]
          %v1965 = vld [vmem:[#allocation12 + $0x728] sm:$0xff]
          %v1966 = vld [vmem:[#allocation12 + $0x730] sm:$0xff]
          %v1967 = vld [vmem:[#allocation12 + $0x738] sm:$0xff]
          %v1968 = vld [vmem:[#allocation12 + $0x740] sm:$0xff]
          %v1969 = vld [vmem:[#allocation12 + $0x748] sm:$0xff]
          %v1970 = vld [vmem:[#allocation12 + $0x750] sm:$0xff]
          %v1971 = vld [vmem:[#allocation12 + $0x758] sm:$0xff]
          %v1972 = vld [vmem:[#allocation12 + $0x760] sm:$0xff]
          %v1973 = vld [vmem:[#allocation12 + $0x768] sm:$0xff]
          %v1974 = vld [vmem:[#allocation12 + $0x770] sm:$0xff]
          %v1975 = vld [vmem:[#allocation12 + $0x778] sm:$0xff]
          %v1976 = vld [vmem:[#allocation12 + $0x780] sm:$0xff]
          %v1977 = vld [vmem:[#allocation12 + $0x788] sm:$0xff]
          %v1978 = vld [vmem:[#allocation12 + $0x790] sm:$0xff]
          %v1979 = vld [vmem:[#allocation12 + $0x798] sm:$0xff]
          %v1980 = vld [vmem:[#allocation12 + $0x7a0] sm:$0xff]
          %v1981 = vld [vmem:[#allocation12 + $0x7a8] sm:$0xff]
          %v1982 = vld [vmem:[#allocation12 + $0x7b0] sm:$0xff]
          %v1983 = vld [vmem:[#allocation12 + $0x7b8] sm:$0xff]
          %v1984 = vld [vmem:[#allocation12 + $0x7c0] sm:$0xff]
          %v1985 = vld [vmem:[#allocation12 + $0x7c8] sm:$0xff]
          %v1986 = vld [vmem:[#allocation12 + $0x7d0] sm:$0xff]
          %v1987 = vld [vmem:[#allocation12 + $0x7d8] sm:$0xff]
          %v1988 = vld [vmem:[#allocation12 + $0x7e0] sm:$0xff]
          %v1989 = vld [vmem:[#allocation12 + $0x7e8] sm:$0xff]
          %v1990 = vld [vmem:[#allocation12 + $0x7f0] sm:$0xff]
          %v1991 = vld [vmem:[#allocation12 + $0x7f8] sm:$0xff]
          %v1992 = vld [vmem:[%s5] sm:$0xff]
          %v1994 = vlaneseq
          %v1995 = vshrl.u32 %v1994, 7
          %v1996 = vsub.s32 0, %v1995
          %v1997 = vrot.slane %v1992, %v1996
          %v1998 = vlaneseq
          %v1999 = vshrl.u32 %v1998, 7
          %v2000 = vsub.s32 1, %v1999
          %v2001 = vrot.slane %v1992, %v2000
          %v2002 = vlaneseq
          %v2003 = vshrl.u32 %v2002, 7
          %v2004 = vsub.s32 2, %v2003
          %v2005 = vrot.slane %v1992, %v2004
          %v2006 = vlaneseq
          %v2007 = vshrl.u32 %v2006, 7
          %v2008 = vsub.s32 3, %v2007
          %v2009 = vrot.slane %v1992, %v2008
          %v2010 = vlaneseq
          %v2011 = vshrl.u32 %v2010, 7
          %v2012 = vsub.s32 4, %v2011
          %v2013 = vrot.slane %v1992, %v2012
          %v2014 = vlaneseq
          %v2015 = vshrl.u32 %v2014, 7
          %v2016 = vsub.s32 5, %v2015
          %v2017 = vrot.slane %v1992, %v2016
          %v2018 = vlaneseq
          %v2019 = vshrl.u32 %v2018, 7
          %v2020 = vsub.s32 6, %v2019
          %v2021 = vrot.slane %v1992, %v2020
          %v2022 = vlaneseq
          %v2023 = vshrl.u32 %v2022, 7
          %v2024 = vsub.s32 7, %v2023
          %v2025 = vrot.slane %v1992, %v2024
          %v2290 = vunpack.c.l.b16 %v1736
          %v2291 = vunpack.c.h.b16 %v1736
          %v2292 = vunpack.c.l.b16 %v1737
          %v2293 = vunpack.c.h.b16 %v1737
          %v2294 = vunpack.c.l.b16 %v1738
          %v2295 = vunpack.c.h.b16 %v1738
          %v2296 = vunpack.c.l.b16 %v1739
          %v2297 = vunpack.c.h.b16 %v1739
          %v2298 = vunpack.c.l.b16 %v1740
          %v2299 = vunpack.c.h.b16 %v1740
          %v2300 = vunpack.c.l.b16 %v1741
          %v2301 = vunpack.c.h.b16 %v1741
          %v2302 = vunpack.c.l.b16 %v1742
          %v2303 = vunpack.c.h.b16 %v1742
          %v2304 = vunpack.c.l.b16 %v1743
          %v2305 = vunpack.c.h.b16 %v1743
          %v2306 = vunpack.c.l.b16 %v1744
          %v2307 = vunpack.c.h.b16 %v1744
          %v2308 = vunpack.c.l.b16 %v1745
          %v2309 = vunpack.c.h.b16 %v1745
          %v2310 = vunpack.c.l.b16 %v1746
          %v2311 = vunpack.c.h.b16 %v1746
          %v2312 = vunpack.c.l.b16 %v1747
          %v2313 = vunpack.c.h.b16 %v1747
          %v2314 = vunpack.c.l.b16 %v1748
          %v2315 = vunpack.c.h.b16 %v1748
          %v2316 = vunpack.c.l.b16 %v1749
          %v2317 = vunpack.c.h.b16 %v1749
          %v2318 = vunpack.c.l.b16 %v1750
          %v2319 = vunpack.c.h.b16 %v1750
          %v2320 = vunpack.c.l.b16 %v1751
          %v2321 = vunpack.c.h.b16 %v1751
          %v2322 = vunpack.c.l.b16 %v1752
          %v2323 = vunpack.c.h.b16 %v1752
          %v2324 = vunpack.c.l.b16 %v1753
          %v2325 = vunpack.c.h.b16 %v1753
          %v2326 = vunpack.c.l.b16 %v1754
          %v2327 = vunpack.c.h.b16 %v1754
          %v2328 = vunpack.c.l.b16 %v1755
          %v2329 = vunpack.c.h.b16 %v1755
          %v2330 = vunpack.c.l.b16 %v1756
          %v2331 = vunpack.c.h.b16 %v1756
          %v2332 = vunpack.c.l.b16 %v1757
          %v2333 = vunpack.c.h.b16 %v1757
          %v2334 = vunpack.c.l.b16 %v1758
          %v2335 = vunpack.c.h.b16 %v1758
          %v2336 = vunpack.c.l.b16 %v1759
          %v2337 = vunpack.c.h.b16 %v1759
          %v2338 = vunpack.c.l.b16 %v1760
          %v2339 = vunpack.c.h.b16 %v1760
          %v2340 = vunpack.c.l.b16 %v1761
          %v2341 = vunpack.c.h.b16 %v1761
          %v2342 = vunpack.c.l.b16 %v1762
          %v2343 = vunpack.c.h.b16 %v1762
          %v2344 = vunpack.c.l.b16 %v1763
          %v2345 = vunpack.c.h.b16 %v1763
          %v2346 = vunpack.c.l.b16 %v1764
          %v2347 = vunpack.c.h.b16 %v1764
          %v2348 = vunpack.c.l.b16 %v1765
          %v2349 = vunpack.c.h.b16 %v1765
          %v2350 = vunpack.c.l.b16 %v1766
          %v2351 = vunpack.c.h.b16 %v1766
          %v2352 = vunpack.c.l.b16 %v1767
          %v2353 = vunpack.c.h.b16 %v1767
          %v2354 = vunpack.c.l.b16 %v1768
          %v2355 = vunpack.c.h.b16 %v1768
          %v2356 = vunpack.c.l.b16 %v1769
          %v2357 = vunpack.c.h.b16 %v1769
          %v2358 = vunpack.c.l.b16 %v1770
          %v2359 = vunpack.c.h.b16 %v1770
          %v2360 = vunpack.c.l.b16 %v1771
          %v2361 = vunpack.c.h.b16 %v1771
          %v2362 = vunpack.c.l.b16 %v1772
          %v2363 = vunpack.c.h.b16 %v1772
          %v2364 = vunpack.c.l.b16 %v1773
          %v2365 = vunpack.c.h.b16 %v1773
          %v2366 = vunpack.c.l.b16 %v1774
          %v2367 = vunpack.c.h.b16 %v1774
          %v2368 = vunpack.c.l.b16 %v1775
          %v2369 = vunpack.c.h.b16 %v1775
          %v2370 = vunpack.c.l.b16 %v1776
          %v2371 = vunpack.c.h.b16 %v1776
          %v2372 = vunpack.c.l.b16 %v1777
          %v2373 = vunpack.c.h.b16 %v1777
          %v2374 = vunpack.c.l.b16 %v1778
          %v2375 = vunpack.c.h.b16 %v1778
          %v2376 = vunpack.c.l.b16 %v1779
          %v2377 = vunpack.c.h.b16 %v1779
          %v2378 = vunpack.c.l.b16 %v1780
          %v2379 = vunpack.c.h.b16 %v1780
          %v2380 = vunpack.c.l.b16 %v1781
          %v2381 = vunpack.c.h.b16 %v1781
          %v2382 = vunpack.c.l.b16 %v1782
          %v2383 = vunpack.c.h.b16 %v1782
          %v2384 = vunpack.c.l.b16 %v1783
          %v2385 = vunpack.c.h.b16 %v1783
          %v2386 = vunpack.c.l.b16 %v1784
          %v2387 = vunpack.c.h.b16 %v1784
          %v2388 = vunpack.c.l.b16 %v1785
          %v2389 = vunpack.c.h.b16 %v1785
          %v2390 = vunpack.c.l.b16 %v1786
          %v2391 = vunpack.c.h.b16 %v1786
          %v2392 = vunpack.c.l.b16 %v1787
          %v2393 = vunpack.c.h.b16 %v1787
          %v2394 = vunpack.c.l.b16 %v1788
          %v2395 = vunpack.c.h.b16 %v1788
          %v2396 = vunpack.c.l.b16 %v1789
          %v2397 = vunpack.c.h.b16 %v1789
          %v2398 = vunpack.c.l.b16 %v1790
          %v2399 = vunpack.c.h.b16 %v1790
          %v2400 = vunpack.c.l.b16 %v1791
          %v2401 = vunpack.c.h.b16 %v1791
          %v2402 = vunpack.c.l.b16 %v1792
          %v2403 = vunpack.c.h.b16 %v1792
          %v2404 = vunpack.c.l.b16 %v1793
          %v2405 = vunpack.c.h.b16 %v1793
          %v2406 = vunpack.c.l.b16 %v1794
          %v2407 = vunpack.c.h.b16 %v1794
          %v2408 = vunpack.c.l.b16 %v1795
          %v2409 = vunpack.c.h.b16 %v1795
          %v2410 = vunpack.c.l.b16 %v1796
          %v2411 = vunpack.c.h.b16 %v1796
          %v2412 = vunpack.c.l.b16 %v1797
          %v2413 = vunpack.c.h.b16 %v1797
          %v2414 = vunpack.c.l.b16 %v1798
          %v2415 = vunpack.c.h.b16 %v1798
          %v2416 = vunpack.c.l.b16 %v1799
          %v2417 = vunpack.c.h.b16 %v1799
          %v2418 = vunpack.c.l.b16 %v1800
          %v2419 = vunpack.c.h.b16 %v1800
          %v2420 = vunpack.c.l.b16 %v1801
          %v2421 = vunpack.c.h.b16 %v1801
          %v2422 = vunpack.c.l.b16 %v1802
          %v2423 = vunpack.c.h.b16 %v1802
          %v2424 = vunpack.c.l.b16 %v1803
          %v2425 = vunpack.c.h.b16 %v1803
          %v2426 = vunpack.c.l.b16 %v1804
          %v2427 = vunpack.c.h.b16 %v1804
          %v2428 = vunpack.c.l.b16 %v1805
          %v2429 = vunpack.c.h.b16 %v1805
          %v2430 = vunpack.c.l.b16 %v1806
          %v2431 = vunpack.c.h.b16 %v1806
          %v2432 = vunpack.c.l.b16 %v1807
          %v2433 = vunpack.c.h.b16 %v1807
          %v2434 = vunpack.c.l.b16 %v1808
          %v2435 = vunpack.c.h.b16 %v1808
          %v2436 = vunpack.c.l.b16 %v1809
          %v2437 = vunpack.c.h.b16 %v1809
          %v2438 = vunpack.c.l.b16 %v1810
          %v2439 = vunpack.c.h.b16 %v1810
          %v2440 = vunpack.c.l.b16 %v1811
          %v2441 = vunpack.c.h.b16 %v1811
          %v2442 = vunpack.c.l.b16 %v1812
          %v2443 = vunpack.c.h.b16 %v1812
          %v2444 = vunpack.c.l.b16 %v1813
          %v2445 = vunpack.c.h.b16 %v1813
          %v2446 = vunpack.c.l.b16 %v1814
          %v2447 = vunpack.c.h.b16 %v1814
          %v2448 = vunpack.c.l.b16 %v1815
          %v2449 = vunpack.c.h.b16 %v1815
          %v2450 = vunpack.c.l.b16 %v1816
          %v2451 = vunpack.c.h.b16 %v1816
          %v2452 = vunpack.c.l.b16 %v1817
          %v2453 = vunpack.c.h.b16 %v1817
          %v2454 = vunpack.c.l.b16 %v1818
          %v2455 = vunpack.c.h.b16 %v1818
          %v2456 = vunpack.c.l.b16 %v1819
          %v2457 = vunpack.c.h.b16 %v1819
          %v2458 = vunpack.c.l.b16 %v1820
          %v2459 = vunpack.c.h.b16 %v1820
          %v2460 = vunpack.c.l.b16 %v1821
          %v2461 = vunpack.c.h.b16 %v1821
          %v2462 = vunpack.c.l.b16 %v1822
          %v2463 = vunpack.c.h.b16 %v1822
          %v2464 = vunpack.c.l.b16 %v1823
          %v2465 = vunpack.c.h.b16 %v1823
          %v2466 = vunpack.c.l.b16 %v1824
          %v2467 = vunpack.c.h.b16 %v1824
          %v2468 = vunpack.c.l.b16 %v1825
          %v2469 = vunpack.c.h.b16 %v1825
          %v2470 = vunpack.c.l.b16 %v1826
          %v2471 = vunpack.c.h.b16 %v1826
          %v2472 = vunpack.c.l.b16 %v1827
          %v2473 = vunpack.c.h.b16 %v1827
          %v2474 = vunpack.c.l.b16 %v1828
          %v2475 = vunpack.c.h.b16 %v1828
          %v2476 = vunpack.c.l.b16 %v1829
          %v2477 = vunpack.c.h.b16 %v1829
          %v2478 = vunpack.c.l.b16 %v1830
          %v2479 = vunpack.c.h.b16 %v1830
          %v2480 = vunpack.c.l.b16 %v1831
          %v2481 = vunpack.c.h.b16 %v1831
          %v2482 = vunpack.c.l.b16 %v1832
          %v2483 = vunpack.c.h.b16 %v1832
          %v2484 = vunpack.c.l.b16 %v1833
          %v2485 = vunpack.c.h.b16 %v1833
          %v2486 = vunpack.c.l.b16 %v1834
          %v2487 = vunpack.c.h.b16 %v1834
          %v2488 = vunpack.c.l.b16 %v1835
          %v2489 = vunpack.c.h.b16 %v1835
          %v2490 = vunpack.c.l.b16 %v1836
          %v2491 = vunpack.c.h.b16 %v1836
          %v2492 = vunpack.c.l.b16 %v1837
          %v2493 = vunpack.c.h.b16 %v1837
          %v2494 = vunpack.c.l.b16 %v1838
          %v2495 = vunpack.c.h.b16 %v1838
          %v2496 = vunpack.c.l.b16 %v1839
          %v2497 = vunpack.c.h.b16 %v1839
          %v2498 = vunpack.c.l.b16 %v1840
          %v2499 = vunpack.c.h.b16 %v1840
          %v2500 = vunpack.c.l.b16 %v1841
          %v2501 = vunpack.c.h.b16 %v1841
          %v2502 = vunpack.c.l.b16 %v1842
          %v2503 = vunpack.c.h.b16 %v1842
          %v2504 = vunpack.c.l.b16 %v1843
          %v2505 = vunpack.c.h.b16 %v1843
          %v2506 = vunpack.c.l.b16 %v1844
          %v2507 = vunpack.c.h.b16 %v1844
          %v2508 = vunpack.c.l.b16 %v1845
          %v2509 = vunpack.c.h.b16 %v1845
          %v2510 = vunpack.c.l.b16 %v1846
          %v2511 = vunpack.c.h.b16 %v1846
          %v2512 = vunpack.c.l.b16 %v1847
          %v2513 = vunpack.c.h.b16 %v1847
          %v2514 = vunpack.c.l.b16 %v1848
          %v2515 = vunpack.c.h.b16 %v1848
          %v2516 = vunpack.c.l.b16 %v1849
          %v2517 = vunpack.c.h.b16 %v1849
          %v2518 = vunpack.c.l.b16 %v1850
          %v2519 = vunpack.c.h.b16 %v1850
          %v2520 = vunpack.c.l.b16 %v1851
          %v2521 = vunpack.c.h.b16 %v1851
          %v2522 = vunpack.c.l.b16 %v1852
          %v2523 = vunpack.c.h.b16 %v1852
          %v2524 = vunpack.c.l.b16 %v1853
          %v2525 = vunpack.c.h.b16 %v1853
          %v2526 = vunpack.c.l.b16 %v1854
          %v2527 = vunpack.c.h.b16 %v1854
          %v2528 = vunpack.c.l.b16 %v1855
          %v2529 = vunpack.c.h.b16 %v1855
          %v2530 = vunpack.c.l.b16 %v1856
          %v2531 = vunpack.c.h.b16 %v1856
          %v2532 = vunpack.c.l.b16 %v1857
          %v2533 = vunpack.c.h.b16 %v1857
          %v2534 = vunpack.c.l.b16 %v1858
          %v2535 = vunpack.c.h.b16 %v1858
          %v2536 = vunpack.c.l.b16 %v1859
          %v2537 = vunpack.c.h.b16 %v1859
          %v2538 = vunpack.c.l.b16 %v1860
          %v2539 = vunpack.c.h.b16 %v1860
          %v2540 = vunpack.c.l.b16 %v1861
          %v2541 = vunpack.c.h.b16 %v1861
          %v2542 = vunpack.c.l.b16 %v1862
          %v2543 = vunpack.c.h.b16 %v1862
          %v2544 = vunpack.c.l.b16 %v1863
          %v2545 = vunpack.c.h.b16 %v1863
          %v2546 = vunpack.c.l.b16 %v1864
          %v2547 = vunpack.c.h.b16 %v1864
          %v2548 = vunpack.c.l.b16 %v1865
          %v2549 = vunpack.c.h.b16 %v1865
          %v2550 = vunpack.c.l.b16 %v1866
          %v2551 = vunpack.c.h.b16 %v1866
          %v2552 = vunpack.c.l.b16 %v1867
          %v2553 = vunpack.c.h.b16 %v1867
          %v2554 = vunpack.c.l.b16 %v1868
          %v2555 = vunpack.c.h.b16 %v1868
          %v2556 = vunpack.c.l.b16 %v1869
          %v2557 = vunpack.c.h.b16 %v1869
          %v2558 = vunpack.c.l.b16 %v1870
          %v2559 = vunpack.c.h.b16 %v1870
          %v2560 = vunpack.c.l.b16 %v1871
          %v2561 = vunpack.c.h.b16 %v1871
          %v2562 = vunpack.c.l.b16 %v1872
          %v2563 = vunpack.c.h.b16 %v1872
          %v2564 = vunpack.c.l.b16 %v1873
          %v2565 = vunpack.c.h.b16 %v1873
          %v2566 = vunpack.c.l.b16 %v1874
          %v2567 = vunpack.c.h.b16 %v1874
          %v2568 = vunpack.c.l.b16 %v1875
          %v2569 = vunpack.c.h.b16 %v1875
          %v2570 = vunpack.c.l.b16 %v1876
          %v2571 = vunpack.c.h.b16 %v1876
          %v2572 = vunpack.c.l.b16 %v1877
          %v2573 = vunpack.c.h.b16 %v1877
          %v2574 = vunpack.c.l.b16 %v1878
          %v2575 = vunpack.c.h.b16 %v1878
          %v2576 = vunpack.c.l.b16 %v1879
          %v2577 = vunpack.c.h.b16 %v1879
          %v2578 = vunpack.c.l.b16 %v1880
          %v2579 = vunpack.c.h.b16 %v1880
          %v2580 = vunpack.c.l.b16 %v1881
          %v2581 = vunpack.c.h.b16 %v1881
          %v2582 = vunpack.c.l.b16 %v1882
          %v2583 = vunpack.c.h.b16 %v1882
          %v2584 = vunpack.c.l.b16 %v1883
          %v2585 = vunpack.c.h.b16 %v1883
          %v2586 = vunpack.c.l.b16 %v1884
          %v2587 = vunpack.c.h.b16 %v1884
          %v2588 = vunpack.c.l.b16 %v1885
          %v2589 = vunpack.c.h.b16 %v1885
          %v2590 = vunpack.c.l.b16 %v1886
          %v2591 = vunpack.c.h.b16 %v1886
          %v2592 = vunpack.c.l.b16 %v1887
          %v2593 = vunpack.c.h.b16 %v1887
          %v2594 = vunpack.c.l.b16 %v1888
          %v2595 = vunpack.c.h.b16 %v1888
          %v2596 = vunpack.c.l.b16 %v1889
          %v2597 = vunpack.c.h.b16 %v1889
          %v2598 = vunpack.c.l.b16 %v1890
          %v2599 = vunpack.c.h.b16 %v1890
          %v2600 = vunpack.c.l.b16 %v1891
          %v2601 = vunpack.c.h.b16 %v1891
          %v2602 = vunpack.c.l.b16 %v1892
          %v2603 = vunpack.c.h.b16 %v1892
          %v2604 = vunpack.c.l.b16 %v1893
          %v2605 = vunpack.c.h.b16 %v1893
          %v2606 = vunpack.c.l.b16 %v1894
          %v2607 = vunpack.c.h.b16 %v1894
          %v2608 = vunpack.c.l.b16 %v1895
          %v2609 = vunpack.c.h.b16 %v1895
          %v2610 = vunpack.c.l.b16 %v1896
          %v2611 = vunpack.c.h.b16 %v1896
          %v2612 = vunpack.c.l.b16 %v1897
          %v2613 = vunpack.c.h.b16 %v1897
          %v2614 = vunpack.c.l.b16 %v1898
          %v2615 = vunpack.c.h.b16 %v1898
          %v2616 = vunpack.c.l.b16 %v1899
          %v2617 = vunpack.c.h.b16 %v1899
          %v2618 = vunpack.c.l.b16 %v1900
          %v2619 = vunpack.c.h.b16 %v1900
          %v2620 = vunpack.c.l.b16 %v1901
          %v2621 = vunpack.c.h.b16 %v1901
          %v2622 = vunpack.c.l.b16 %v1902
          %v2623 = vunpack.c.h.b16 %v1902
          %v2624 = vunpack.c.l.b16 %v1903
          %v2625 = vunpack.c.h.b16 %v1903
          %v2626 = vunpack.c.l.b16 %v1904
          %v2627 = vunpack.c.h.b16 %v1904
          %v2628 = vunpack.c.l.b16 %v1905
          %v2629 = vunpack.c.h.b16 %v1905
          %v2630 = vunpack.c.l.b16 %v1906
          %v2631 = vunpack.c.h.b16 %v1906
          %v2632 = vunpack.c.l.b16 %v1907
          %v2633 = vunpack.c.h.b16 %v1907
          %v2634 = vunpack.c.l.b16 %v1908
          %v2635 = vunpack.c.h.b16 %v1908
          %v2636 = vunpack.c.l.b16 %v1909
          %v2637 = vunpack.c.h.b16 %v1909
          %v2638 = vunpack.c.l.b16 %v1910
          %v2639 = vunpack.c.h.b16 %v1910
          %v2640 = vunpack.c.l.b16 %v1911
          %v2641 = vunpack.c.h.b16 %v1911
          %v2642 = vunpack.c.l.b16 %v1912
          %v2643 = vunpack.c.h.b16 %v1912
          %v2644 = vunpack.c.l.b16 %v1913
          %v2645 = vunpack.c.h.b16 %v1913
          %v2646 = vunpack.c.l.b16 %v1914
          %v2647 = vunpack.c.h.b16 %v1914
          %v2648 = vunpack.c.l.b16 %v1915
          %v2649 = vunpack.c.h.b16 %v1915
          %v2650 = vunpack.c.l.b16 %v1916
          %v2651 = vunpack.c.h.b16 %v1916
          %v2652 = vunpack.c.l.b16 %v1917
          %v2653 = vunpack.c.h.b16 %v1917
          %v2654 = vunpack.c.l.b16 %v1918
          %v2655 = vunpack.c.h.b16 %v1918
          %v2656 = vunpack.c.l.b16 %v1919
          %v2657 = vunpack.c.h.b16 %v1919
          %v2658 = vunpack.c.l.b16 %v1920
          %v2659 = vunpack.c.h.b16 %v1920
          %v2660 = vunpack.c.l.b16 %v1921
          %v2661 = vunpack.c.h.b16 %v1921
          %v2662 = vunpack.c.l.b16 %v1922
          %v2663 = vunpack.c.h.b16 %v1922
          %v2664 = vunpack.c.l.b16 %v1923
          %v2665 = vunpack.c.h.b16 %v1923
          %v2666 = vunpack.c.l.b16 %v1924
          %v2667 = vunpack.c.h.b16 %v1924
          %v2668 = vunpack.c.l.b16 %v1925
          %v2669 = vunpack.c.h.b16 %v1925
          %v2670 = vunpack.c.l.b16 %v1926
          %v2671 = vunpack.c.h.b16 %v1926
          %v2672 = vunpack.c.l.b16 %v1927
          %v2673 = vunpack.c.h.b16 %v1927
          %v2674 = vunpack.c.l.b16 %v1928
          %v2675 = vunpack.c.h.b16 %v1928
          %v2676 = vunpack.c.l.b16 %v1929
          %v2677 = vunpack.c.h.b16 %v1929
          %v2678 = vunpack.c.l.b16 %v1930
          %v2679 = vunpack.c.h.b16 %v1930
          %v2680 = vunpack.c.l.b16 %v1931
          %v2681 = vunpack.c.h.b16 %v1931
          %v2682 = vunpack.c.l.b16 %v1932
          %v2683 = vunpack.c.h.b16 %v1932
          %v2684 = vunpack.c.l.b16 %v1933
          %v2685 = vunpack.c.h.b16 %v1933
          %v2686 = vunpack.c.l.b16 %v1934
          %v2687 = vunpack.c.h.b16 %v1934
          %v2688 = vunpack.c.l.b16 %v1935
          %v2689 = vunpack.c.h.b16 %v1935
          %v2690 = vunpack.c.l.b16 %v1936
          %v2691 = vunpack.c.h.b16 %v1936
          %v2692 = vunpack.c.l.b16 %v1937
          %v2693 = vunpack.c.h.b16 %v1937
          %v2694 = vunpack.c.l.b16 %v1938
          %v2695 = vunpack.c.h.b16 %v1938
          %v2696 = vunpack.c.l.b16 %v1939
          %v2697 = vunpack.c.h.b16 %v1939
          %v2698 = vunpack.c.l.b16 %v1940
          %v2699 = vunpack.c.h.b16 %v1940
          %v2700 = vunpack.c.l.b16 %v1941
          %v2701 = vunpack.c.h.b16 %v1941
          %v2702 = vunpack.c.l.b16 %v1942
          %v2703 = vunpack.c.h.b16 %v1942
          %v2704 = vunpack.c.l.b16 %v1943
          %v2705 = vunpack.c.h.b16 %v1943
          %v2706 = vunpack.c.l.b16 %v1944
          %v2707 = vunpack.c.h.b16 %v1944
          %v2708 = vunpack.c.l.b16 %v1945
          %v2709 = vunpack.c.h.b16 %v1945
          %v2710 = vunpack.c.l.b16 %v1946
          %v2711 = vunpack.c.h.b16 %v1946
          %v2712 = vunpack.c.l.b16 %v1947
          %v2713 = vunpack.c.h.b16 %v1947
          %v2714 = vunpack.c.l.b16 %v1948
          %v2715 = vunpack.c.h.b16 %v1948
          %v2716 = vunpack.c.l.b16 %v1949
          %v2717 = vunpack.c.h.b16 %v1949
          %v2718 = vunpack.c.l.b16 %v1950
          %v2719 = vunpack.c.h.b16 %v1950
          %v2720 = vunpack.c.l.b16 %v1951
          %v2721 = vunpack.c.h.b16 %v1951
          %v2722 = vunpack.c.l.b16 %v1952
          %v2723 = vunpack.c.h.b16 %v1952
          %v2724 = vunpack.c.l.b16 %v1953
          %v2725 = vunpack.c.h.b16 %v1953
          %v2726 = vunpack.c.l.b16 %v1954
          %v2727 = vunpack.c.h.b16 %v1954
          %v2728 = vunpack.c.l.b16 %v1955
          %v2729 = vunpack.c.h.b16 %v1955
          %v2730 = vunpack.c.l.b16 %v1956
          %v2731 = vunpack.c.h.b16 %v1956
          %v2732 = vunpack.c.l.b16 %v1957
          %v2733 = vunpack.c.h.b16 %v1957
          %v2734 = vunpack.c.l.b16 %v1958
          %v2735 = vunpack.c.h.b16 %v1958
          %v2736 = vunpack.c.l.b16 %v1959
          %v2737 = vunpack.c.h.b16 %v1959
          %v2738 = vunpack.c.l.b16 %v1960
          %v2739 = vunpack.c.h.b16 %v1960
          %v2740 = vunpack.c.l.b16 %v1961
          %v2741 = vunpack.c.h.b16 %v1961
          %v2742 = vunpack.c.l.b16 %v1962
          %v2743 = vunpack.c.h.b16 %v1962
          %v2744 = vunpack.c.l.b16 %v1963
          %v2745 = vunpack.c.h.b16 %v1963
          %v2746 = vunpack.c.l.b16 %v1964
          %v2747 = vunpack.c.h.b16 %v1964
          %v2748 = vunpack.c.l.b16 %v1965
          %v2749 = vunpack.c.h.b16 %v1965
          %v2750 = vunpack.c.l.b16 %v1966
          %v2751 = vunpack.c.h.b16 %v1966
          %v2752 = vunpack.c.l.b16 %v1967
          %v2753 = vunpack.c.h.b16 %v1967
          %v2754 = vunpack.c.l.b16 %v1968
          %v2755 = vunpack.c.h.b16 %v1968
          %v2756 = vunpack.c.l.b16 %v1969
          %v2757 = vunpack.c.h.b16 %v1969
          %v2758 = vunpack.c.l.b16 %v1970
          %v2759 = vunpack.c.h.b16 %v1970
          %v2760 = vunpack.c.l.b16 %v1971
          %v2761 = vunpack.c.h.b16 %v1971
          %v2762 = vunpack.c.l.b16 %v1972
          %v2763 = vunpack.c.h.b16 %v1972
          %v2764 = vunpack.c.l.b16 %v1973
          %v2765 = vunpack.c.h.b16 %v1973
          %v2766 = vunpack.c.l.b16 %v1974
          %v2767 = vunpack.c.h.b16 %v1974
          %v2768 = vunpack.c.l.b16 %v1975
          %v2769 = vunpack.c.h.b16 %v1975
          %v2770 = vunpack.c.l.b16 %v1976
          %v2771 = vunpack.c.h.b16 %v1976
          %v2772 = vunpack.c.l.b16 %v1977
          %v2773 = vunpack.c.h.b16 %v1977
          %v2774 = vunpack.c.l.b16 %v1978
          %v2775 = vunpack.c.h.b16 %v1978
          %v2776 = vunpack.c.l.b16 %v1979
          %v2777 = vunpack.c.h.b16 %v1979
          %v2778 = vunpack.c.l.b16 %v1980
          %v2779 = vunpack.c.h.b16 %v1980
          %v2780 = vunpack.c.l.b16 %v1981
          %v2781 = vunpack.c.h.b16 %v1981
          %v2782 = vunpack.c.l.b16 %v1982
          %v2783 = vunpack.c.h.b16 %v1982
          %v2784 = vunpack.c.l.b16 %v1983
          %v2785 = vunpack.c.h.b16 %v1983
          %v2786 = vunpack.c.l.b16 %v1984
          %v2787 = vunpack.c.h.b16 %v1984
          %v2788 = vunpack.c.l.b16 %v1985
          %v2789 = vunpack.c.h.b16 %v1985
          %v2790 = vunpack.c.l.b16 %v1986
          %v2791 = vunpack.c.h.b16 %v1986
          %v2792 = vunpack.c.l.b16 %v1987
          %v2793 = vunpack.c.h.b16 %v1987
          %v2794 = vunpack.c.l.b16 %v1988
          %v2795 = vunpack.c.h.b16 %v1988
          %v2796 = vunpack.c.l.b16 %v1989
          %v2797 = vunpack.c.h.b16 %v1989
          %v2798 = vunpack.c.l.b16 %v1990
          %v2799 = vunpack.c.h.b16 %v1990
          %v2800 = vunpack.c.l.b16 %v1991
          %v2801 = vunpack.c.h.b16 %v1991
          %v2802 = vpack.c.b16 %v2298, %v2290
          %v2803 = vpack.c.b16 %v2299, %v2291
          %v2804 = vpack.c.b16 %v2300, %v2292
          %v2805 = vpack.c.b16 %v2301, %v2293
          %v2806 = vpack.c.b16 %v2302, %v2294
          %v2807 = vpack.c.b16 %v2303, %v2295
          %v2808 = vpack.c.b16 %v2304, %v2296
          %v2809 = vpack.c.b16 %v2305, %v2297
          %v2810 = vpack.c.b16 %v2314, %v2306
          %v2811 = vpack.c.b16 %v2315, %v2307
          %v2812 = vpack.c.b16 %v2316, %v2308
          %v2813 = vpack.c.b16 %v2317, %v2309
          %v2814 = vpack.c.b16 %v2318, %v2310
          %v2815 = vpack.c.b16 %v2319, %v2311
          %v2816 = vpack.c.b16 %v2320, %v2312
          %v2817 = vpack.c.b16 %v2321, %v2313
          %v2818 = vpack.c.b16 %v2330, %v2322
          %v2819 = vpack.c.b16 %v2331, %v2323
          %v2820 = vpack.c.b16 %v2332, %v2324
          %v2821 = vpack.c.b16 %v2333, %v2325
          %v2822 = vpack.c.b16 %v2334, %v2326
          %v2823 = vpack.c.b16 %v2335, %v2327
          %v2824 = vpack.c.b16 %v2336, %v2328
          %v2825 = vpack.c.b16 %v2337, %v2329
          %v2826 = vpack.c.b16 %v2346, %v2338
          %v2827 = vpack.c.b16 %v2347, %v2339
          %v2828 = vpack.c.b16 %v2348, %v2340
          %v2829 = vpack.c.b16 %v2349, %v2341
          %v2830 = vpack.c.b16 %v2350, %v2342
          %v2831 = vpack.c.b16 %v2351, %v2343
          %v2832 = vpack.c.b16 %v2352, %v2344
          %v2833 = vpack.c.b16 %v2353, %v2345
          %v2834 = vpack.c.b16 %v2362, %v2354
          %v2835 = vpack.c.b16 %v2363, %v2355
          %v2836 = vpack.c.b16 %v2364, %v2356
          %v2837 = vpack.c.b16 %v2365, %v2357
          %v2838 = vpack.c.b16 %v2366, %v2358
          %v2839 = vpack.c.b16 %v2367, %v2359
          %v2840 = vpack.c.b16 %v2368, %v2360
          %v2841 = vpack.c.b16 %v2369, %v2361
          %v2842 = vpack.c.b16 %v2378, %v2370
          %v2843 = vpack.c.b16 %v2379, %v2371
          %v2844 = vpack.c.b16 %v2380, %v2372
          %v2845 = vpack.c.b16 %v2381, %v2373
          %v2846 = vpack.c.b16 %v2382, %v2374
          %v2847 = vpack.c.b16 %v2383, %v2375
          %v2848 = vpack.c.b16 %v2384, %v2376
          %v2849 = vpack.c.b16 %v2385, %v2377
          %v2850 = vpack.c.b16 %v2394, %v2386
          %v2851 = vpack.c.b16 %v2395, %v2387
          %v2852 = vpack.c.b16 %v2396, %v2388
          %v2853 = vpack.c.b16 %v2397, %v2389
          %v2854 = vpack.c.b16 %v2398, %v2390
          %v2855 = vpack.c.b16 %v2399, %v2391
          %v2856 = vpack.c.b16 %v2400, %v2392
          %v2857 = vpack.c.b16 %v2401, %v2393
          %v2858 = vpack.c.b16 %v2410, %v2402
          %v2859 = vpack.c.b16 %v2411, %v2403
          %v2860 = vpack.c.b16 %v2412, %v2404
          %v2861 = vpack.c.b16 %v2413, %v2405
          %v2862 = vpack.c.b16 %v2414, %v2406
          %v2863 = vpack.c.b16 %v2415, %v2407
          %v2864 = vpack.c.b16 %v2416, %v2408
          %v2865 = vpack.c.b16 %v2417, %v2409
          %v2866 = vpack.c.b16 %v2426, %v2418
          %v2867 = vpack.c.b16 %v2427, %v2419
          %v2868 = vpack.c.b16 %v2428, %v2420
          %v2869 = vpack.c.b16 %v2429, %v2421
          %v2870 = vpack.c.b16 %v2430, %v2422
          %v2871 = vpack.c.b16 %v2431, %v2423
          %v2872 = vpack.c.b16 %v2432, %v2424
          %v2873 = vpack.c.b16 %v2433, %v2425
          %v2874 = vpack.c.b16 %v2442, %v2434
          %v2875 = vpack.c.b16 %v2443, %v2435
          %v2876 = vpack.c.b16 %v2444, %v2436
          %v2877 = vpack.c.b16 %v2445, %v2437
          %v2878 = vpack.c.b16 %v2446, %v2438
          %v2879 = vpack.c.b16 %v2447, %v2439
          %v2880 = vpack.c.b16 %v2448, %v2440
          %v2881 = vpack.c.b16 %v2449, %v2441
          %v2882 = vpack.c.b16 %v2458, %v2450
          %v2883 = vpack.c.b16 %v2459, %v2451
          %v2884 = vpack.c.b16 %v2460, %v2452
          %v2885 = vpack.c.b16 %v2461, %v2453
          %v2886 = vpack.c.b16 %v2462, %v2454
          %v2887 = vpack.c.b16 %v2463, %v2455
          %v2888 = vpack.c.b16 %v2464, %v2456
          %v2889 = vpack.c.b16 %v2465, %v2457
          %v2890 = vpack.c.b16 %v2474, %v2466
          %v2891 = vpack.c.b16 %v2475, %v2467
          %v2892 = vpack.c.b16 %v2476, %v2468
          %v2893 = vpack.c.b16 %v2477, %v2469
          %v2894 = vpack.c.b16 %v2478, %v2470
          %v2895 = vpack.c.b16 %v2479, %v2471
          %v2896 = vpack.c.b16 %v2480, %v2472
          %v2897 = vpack.c.b16 %v2481, %v2473
          %v2898 = vpack.c.b16 %v2490, %v2482
          %v2899 = vpack.c.b16 %v2491, %v2483
          %v2900 = vpack.c.b16 %v2492, %v2484
          %v2901 = vpack.c.b16 %v2493, %v2485
          %v2902 = vpack.c.b16 %v2494, %v2486
          %v2903 = vpack.c.b16 %v2495, %v2487
          %v2904 = vpack.c.b16 %v2496, %v2488
          %v2905 = vpack.c.b16 %v2497, %v2489
          %v2906 = vpack.c.b16 %v2506, %v2498
          %v2907 = vpack.c.b16 %v2507, %v2499
          %v2908 = vpack.c.b16 %v2508, %v2500
          %v2909 = vpack.c.b16 %v2509, %v2501
          %v2910 = vpack.c.b16 %v2510, %v2502
          %v2911 = vpack.c.b16 %v2511, %v2503
          %v2912 = vpack.c.b16 %v2512, %v2504
          %v2913 = vpack.c.b16 %v2513, %v2505
          %v2914 = vpack.c.b16 %v2522, %v2514
          %v2915 = vpack.c.b16 %v2523, %v2515
          %v2916 = vpack.c.b16 %v2524, %v2516
          %v2917 = vpack.c.b16 %v2525, %v2517
          %v2918 = vpack.c.b16 %v2526, %v2518
          %v2919 = vpack.c.b16 %v2527, %v2519
          %v2920 = vpack.c.b16 %v2528, %v2520
          %v2921 = vpack.c.b16 %v2529, %v2521
          %v2922 = vpack.c.b16 %v2538, %v2530
          %v2923 = vpack.c.b16 %v2539, %v2531
          %v2924 = vpack.c.b16 %v2540, %v2532
          %v2925 = vpack.c.b16 %v2541, %v2533
          %v2926 = vpack.c.b16 %v2542, %v2534
          %v2927 = vpack.c.b16 %v2543, %v2535
          %v2928 = vpack.c.b16 %v2544, %v2536
          %v2929 = vpack.c.b16 %v2545, %v2537
          %v2930 = vpack.c.b16 %v2554, %v2546
          %v2931 = vpack.c.b16 %v2555, %v2547
          %v2932 = vpack.c.b16 %v2556, %v2548
          %v2933 = vpack.c.b16 %v2557, %v2549
          %v2934 = vpack.c.b16 %v2558, %v2550
          %v2935 = vpack.c.b16 %v2559, %v2551
          %v2936 = vpack.c.b16 %v2560, %v2552
          %v2937 = vpack.c.b16 %v2561, %v2553
          %v2938 = vpack.c.b16 %v2570, %v2562
          %v2939 = vpack.c.b16 %v2571, %v2563
          %v2940 = vpack.c.b16 %v2572, %v2564
          %v2941 = vpack.c.b16 %v2573, %v2565
          %v2942 = vpack.c.b16 %v2574, %v2566
          %v2943 = vpack.c.b16 %v2575, %v2567
          %v2944 = vpack.c.b16 %v2576, %v2568
          %v2945 = vpack.c.b16 %v2577, %v2569
          %v2946 = vpack.c.b16 %v2586, %v2578
          %v2947 = vpack.c.b16 %v2587, %v2579
          %v2948 = vpack.c.b16 %v2588, %v2580
          %v2949 = vpack.c.b16 %v2589, %v2581
          %v2950 = vpack.c.b16 %v2590, %v2582
          %v2951 = vpack.c.b16 %v2591, %v2583
          %v2952 = vpack.c.b16 %v2592, %v2584
          %v2953 = vpack.c.b16 %v2593, %v2585
          %v2954 = vpack.c.b16 %v2602, %v2594
          %v2955 = vpack.c.b16 %v2603, %v2595
          %v2956 = vpack.c.b16 %v2604, %v2596
          %v2957 = vpack.c.b16 %v2605, %v2597
          %v2958 = vpack.c.b16 %v2606, %v2598
          %v2959 = vpack.c.b16 %v2607, %v2599
          %v2960 = vpack.c.b16 %v2608, %v2600
          %v2961 = vpack.c.b16 %v2609, %v2601
          %v2962 = vpack.c.b16 %v2618, %v2610
          %v2963 = vpack.c.b16 %v2619, %v2611
          %v2964 = vpack.c.b16 %v2620, %v2612
          %v2965 = vpack.c.b16 %v2621, %v2613
          %v2966 = vpack.c.b16 %v2622, %v2614
          %v2967 = vpack.c.b16 %v2623, %v2615
          %v2968 = vpack.c.b16 %v2624, %v2616
          %v2969 = vpack.c.b16 %v2625, %v2617
          %v2970 = vpack.c.b16 %v2634, %v2626
          %v2971 = vpack.c.b16 %v2635, %v2627
          %v2972 = vpack.c.b16 %v2636, %v2628
          %v2973 = vpack.c.b16 %v2637, %v2629
          %v2974 = vpack.c.b16 %v2638, %v2630
          %v2975 = vpack.c.b16 %v2639, %v2631
          %v2976 = vpack.c.b16 %v2640, %v2632
          %v2977 = vpack.c.b16 %v2641, %v2633
          %v2978 = vpack.c.b16 %v2650, %v2642
          %v2979 = vpack.c.b16 %v2651, %v2643
          %v2980 = vpack.c.b16 %v2652, %v2644
          %v2981 = vpack.c.b16 %v2653, %v2645
          %v2982 = vpack.c.b16 %v2654, %v2646
          %v2983 = vpack.c.b16 %v2655, %v2647
          %v2984 = vpack.c.b16 %v2656, %v2648
          %v2985 = vpack.c.b16 %v2657, %v2649
          %v2986 = vpack.c.b16 %v2666, %v2658
          %v2987 = vpack.c.b16 %v2667, %v2659
          %v2988 = vpack.c.b16 %v2668, %v2660
          %v2989 = vpack.c.b16 %v2669, %v2661
          %v2990 = vpack.c.b16 %v2670, %v2662
          %v2991 = vpack.c.b16 %v2671, %v2663
          %v2992 = vpack.c.b16 %v2672, %v2664
          %v2993 = vpack.c.b16 %v2673, %v2665
          %v2994 = vpack.c.b16 %v2682, %v2674
          %v2995 = vpack.c.b16 %v2683, %v2675
          %v2996 = vpack.c.b16 %v2684, %v2676
          %v2997 = vpack.c.b16 %v2685, %v2677
          %v2998 = vpack.c.b16 %v2686, %v2678
          %v2999 = vpack.c.b16 %v2687, %v2679
          %v3000 = vpack.c.b16 %v2688, %v2680
          %v3001 = vpack.c.b16 %v2689, %v2681
          %v3002 = vpack.c.b16 %v2698, %v2690
          %v3003 = vpack.c.b16 %v2699, %v2691
          %v3004 = vpack.c.b16 %v2700, %v2692
          %v3005 = vpack.c.b16 %v2701, %v2693
          %v3006 = vpack.c.b16 %v2702, %v2694
          %v3007 = vpack.c.b16 %v2703, %v2695
          %v3008 = vpack.c.b16 %v2704, %v2696
          %v3009 = vpack.c.b16 %v2705, %v2697
          %v3010 = vpack.c.b16 %v2714, %v2706
          %v3011 = vpack.c.b16 %v2715, %v2707
          %v3012 = vpack.c.b16 %v2716, %v2708
          %v3013 = vpack.c.b16 %v2717, %v2709
          %v3014 = vpack.c.b16 %v2718, %v2710
          %v3015 = vpack.c.b16 %v2719, %v2711
          %v3016 = vpack.c.b16 %v2720, %v2712
          %v3017 = vpack.c.b16 %v2721, %v2713
          %v3018 = vpack.c.b16 %v2730, %v2722
          %v3019 = vpack.c.b16 %v2731, %v2723
          %v3020 = vpack.c.b16 %v2732, %v2724
          %v3021 = vpack.c.b16 %v2733, %v2725
          %v3022 = vpack.c.b16 %v2734, %v2726
          %v3023 = vpack.c.b16 %v2735, %v2727
          %v3024 = vpack.c.b16 %v2736, %v2728
          %v3025 = vpack.c.b16 %v2737, %v2729
          %v3026 = vpack.c.b16 %v2746, %v2738
          %v3027 = vpack.c.b16 %v2747, %v2739
          %v3028 = vpack.c.b16 %v2748, %v2740
          %v3029 = vpack.c.b16 %v2749, %v2741
          %v3030 = vpack.c.b16 %v2750, %v2742
          %v3031 = vpack.c.b16 %v2751, %v2743
          %v3032 = vpack.c.b16 %v2752, %v2744
          %v3033 = vpack.c.b16 %v2753, %v2745
          %v3034 = vpack.c.b16 %v2762, %v2754
          %v3035 = vpack.c.b16 %v2763, %v2755
          %v3036 = vpack.c.b16 %v2764, %v2756
          %v3037 = vpack.c.b16 %v2765, %v2757
          %v3038 = vpack.c.b16 %v2766, %v2758
          %v3039 = vpack.c.b16 %v2767, %v2759
          %v3040 = vpack.c.b16 %v2768, %v2760
          %v3041 = vpack.c.b16 %v2769, %v2761
          %v3042 = vpack.c.b16 %v2778, %v2770
          %v3043 = vpack.c.b16 %v2779, %v2771
          %v3044 = vpack.c.b16 %v2780, %v2772
          %v3045 = vpack.c.b16 %v2781, %v2773
          %v3046 = vpack.c.b16 %v2782, %v2774
          %v3047 = vpack.c.b16 %v2783, %v2775
          %v3048 = vpack.c.b16 %v2784, %v2776
          %v3049 = vpack.c.b16 %v2785, %v2777
          %v3050 = vpack.c.b16 %v2794, %v2786
          %v3051 = vpack.c.b16 %v2795, %v2787
          %v3052 = vpack.c.b16 %v2796, %v2788
          %v3053 = vpack.c.b16 %v2797, %v2789
          %v3054 = vpack.c.b16 %v2798, %v2790
          %v3055 = vpack.c.b16 %v2799, %v2791
          %v3056 = vpack.c.b16 %v2800, %v2792
          %v3057 = vpack.c.b16 %v2801, %v2793
          %3314 = vmatprep.subr.bf16.mxu0 %v2803
          %3315 = vmatpush1.bf16.msra.mxu0 %v2802
          %3316 = vmatprep.subr.bf16.mxu0 %v2811
          %3317 = vmatpush1.bf16.msra.mxu0 %v2810
          %3318 = vmatprep.subr.bf16.mxu0 %v2819
          %3319 = vmatpush1.bf16.msra.mxu0 %v2818
          %3320 = vmatprep.subr.bf16.mxu0 %v2827
          %3321 = vmatpush1.bf16.msra.mxu0 %v2826
          %3322 = vmatprep.subr.bf16.mxu0 %v2835
          %3323 = vmatpush1.bf16.msra.mxu0 %v2834
          %3324 = vmatprep.subr.bf16.mxu0 %v2843
          %3325 = vmatpush1.bf16.msra.mxu0 %v2842
          %3326 = vmatprep.subr.bf16.mxu0 %v2851
          %3327 = vmatpush1.bf16.msra.mxu0 %v2850
          %3328 = vmatprep.subr.bf16.mxu0 %v2859
          %3329 = vmatpush1.bf16.msra.mxu0 %v2858
          %3330 = vmatprep.subr.bf16.mxu0 %v2867
          %3331 = vmatpush1.bf16.msra.mxu0 %v2866
          %3332 = vmatprep.subr.bf16.mxu0 %v2875
          %3333 = vmatpush1.bf16.msra.mxu0 %v2874
          %3334 = vmatprep.subr.bf16.mxu0 %v2883
          %3335 = vmatpush1.bf16.msra.mxu0 %v2882
          %3336 = vmatprep.subr.bf16.mxu0 %v2891
          %3337 = vmatpush1.bf16.msra.mxu0 %v2890
          %3338 = vmatprep.subr.bf16.mxu0 %v2899
          %3339 = vmatpush1.bf16.msra.mxu0 %v2898
          %3340 = vmatprep.subr.bf16.mxu0 %v2907
          %3341 = vmatpush1.bf16.msra.mxu0 %v2906
          %3342 = vmatprep.subr.bf16.mxu0 %v2915
          %3343 = vmatpush1.bf16.msra.mxu0 %v2914
          %3344 = vmatprep.subr.bf16.mxu0 %v2923
          %3345 = vmatpush1.bf16.msra.mxu0 %v2922
          %3346 = vmatprep.mubr.bf16.mxu0 %v1733
          %3347 = vmatmul.mubr.bf16.gmra.mrb[0].mxu0 %v1732
          %v3348 = vpop.f32.mrb[0].mxu0
          %v3349 = vadd.f32 %v1997, %v3348
          %v3350 = vpop.f32.mrb[0].mxu0
          %v3351 = vadd.f32 %v2001, %v3350
          %v3352 = vpop.f32.mrb[0].mxu0
          %v3353 = vpop.f32.mrb[0].mxu0
          %3354 = vdwg.mxu0
          %3355 = vmatprep.subr.bf16.mxu0 %v2931
          %3356 = vmatpush1.bf16.msra.mxu0 %v2930
          %3357 = vmatprep.subr.bf16.mxu0 %v2939
          %3358 = vmatpush1.bf16.msra.mxu0 %v2938
          %3359 = vmatprep.subr.bf16.mxu0 %v2947
          %3360 = vmatpush1.bf16.msra.mxu0 %v2946
          %3361 = vmatprep.subr.bf16.mxu0 %v2955
          %3362 = vmatpush1.bf16.msra.mxu0 %v2954
          %3363 = vmatprep.subr.bf16.mxu0 %v2963
          %3364 = vmatpush1.bf16.msra.mxu0 %v2962
          %3365 = vmatprep.subr.bf16.mxu0 %v2971
          %3366 = vmatpush1.bf16.msra.mxu0 %v2970
          %3367 = vmatprep.subr.bf16.mxu0 %v2979
          %3368 = vmatpush1.bf16.msra.mxu0 %v2978
          %3369 = vmatprep.subr.bf16.mxu0 %v2987
          %3370 = vmatpush1.bf16.msra.mxu0 %v2986
          %3371 = vmatprep.subr.bf16.mxu0 %v2995
          %3372 = vmatpush1.bf16.msra.mxu0 %v2994
          %3373 = vmatprep.subr.bf16.mxu0 %v3003
          %3374 = vmatpush1.bf16.msra.mxu0 %v3002
          %3375 = vmatprep.subr.bf16.mxu0 %v3011
          %3376 = vmatpush1.bf16.msra.mxu0 %v3010
          %3377 = vmatprep.subr.bf16.mxu0 %v3019
          %3378 = vmatpush1.bf16.msra.mxu0 %v3018
          %3379 = vmatprep.subr.bf16.mxu0 %v3027
          %3380 = vmatpush1.bf16.msra.mxu0 %v3026
          %3381 = vmatprep.subr.bf16.mxu0 %v3035
          %3382 = vmatpush1.bf16.msra.mxu0 %v3034
          %3383 = vmatprep.subr.bf16.mxu0 %v3043
          %3384 = vmatpush1.bf16.msra.mxu0 %v3042
          %3385 = vmatprep.subr.bf16.mxu0 %v3051
          %3386 = vmatpush1.bf16.msra.mxu0 %v3050
          %3387 = vmatprep.mubr.bf16.mxu0 %v1735
          %3388 = vmatmul.mubr.bf16.gmra.mrb[0].mxu0 %v1734
          %v3389 = vpop.f32.mrb[0].mxu0
          %v3390 = vadd.f32 %v3349, %v3389
          %v3391 = vpop.f32.mrb[0].mxu0
          %v3392 = vadd.f32 %v3351, %v3391
          %v3393 = vpop.f32.mrb[0].mxu0
          %v3394 = vpop.f32.mrb[0].mxu0
          %3395 = vdwg.mxu0
          %3396 = vmatprep.subr.bf16.mxu0 %v2805
          %3397 = vmatpush1.bf16.msra.mxu0 %v2804
          %3398 = vmatprep.subr.bf16.mxu0 %v2813
          %3399 = vmatpush1.bf16.msra.mxu0 %v2812
          %3400 = vmatprep.subr.bf16.mxu0 %v2821
          %3401 = vmatpush1.bf16.msra.mxu0 %v2820
          %3402 = vmatprep.subr.bf16.mxu0 %v2829
          %3403 = vmatpush1.bf16.msra.mxu0 %v2828
          %3404 = vmatprep.subr.bf16.mxu0 %v2837
          %3405 = vmatpush1.bf16.msra.mxu0 %v2836
          %3406 = vmatprep.subr.bf16.mxu0 %v2845
          %3407 = vmatpush1.bf16.msra.mxu0 %v2844
          %3408 = vmatprep.subr.bf16.mxu0 %v2853
          %3409 = vmatpush1.bf16.msra.mxu0 %v2852
          %3410 = vmatprep.subr.bf16.mxu0 %v2861
          %3411 = vmatpush1.bf16.msra.mxu0 %v2860
          %3412 = vmatprep.subr.bf16.mxu0 %v2869
          %3413 = vmatpush1.bf16.msra.mxu0 %v2868
          %3414 = vmatprep.subr.bf16.mxu0 %v2877
          %3415 = vmatpush1.bf16.msra.mxu0 %v2876
          %3416 = vmatprep.subr.bf16.mxu0 %v2885
          %3417 = vmatpush1.bf16.msra.mxu0 %v2884
          %3418 = vmatprep.subr.bf16.mxu0 %v2893
          %3419 = vmatpush1.bf16.msra.mxu0 %v2892
          %3420 = vmatprep.subr.bf16.mxu0 %v2901
          %3421 = vmatpush1.bf16.msra.mxu0 %v2900
          %3422 = vmatprep.subr.bf16.mxu0 %v2909
          %3423 = vmatpush1.bf16.msra.mxu0 %v2908
          %3424 = vmatprep.subr.bf16.mxu0 %v2917
          %3425 = vmatpush1.bf16.msra.mxu0 %v2916
          %3426 = vmatprep.subr.bf16.mxu0 %v2925
          %3427 = vmatpush1.bf16.msra.mxu0 %v2924
          %3428 = vmatprep.mubr.bf16.mxu0 %v1733
          %3429 = vmatmul.mubr.bf16.gmra.mrb[0].mxu0 %v1732
          %v3430 = vpop.f32.mrb[0].mxu0
          %v3431 = vadd.f32 %v2005, %v3430
          %v3432 = vpop.f32.mrb[0].mxu0
          %v3433 = vadd.f32 %v2009, %v3432
          %v3434 = vpop.f32.mrb[0].mxu0
          %v3435 = vpop.f32.mrb[0].mxu0
          %3436 = vdwg.mxu0
          %3437 = vmatprep.subr.bf16.mxu0 %v2933
          %3438 = vmatpush1.bf16.msra.mxu0 %v2932
          %3439 = vmatprep.subr.bf16.mxu0 %v2941
          %3440 = vmatpush1.bf16.msra.mxu0 %v2940
          %3441 = vmatprep.subr.bf16.mxu0 %v2949
          %3442 = vmatpush1.bf16.msra.mxu0 %v2948
          %3443 = vmatprep.subr.bf16.mxu0 %v2957
          %3444 = vmatpush1.bf16.msra.mxu0 %v2956
          %3445 = vmatprep.subr.bf16.mxu0 %v2965
          %3446 = vmatpush1.bf16.msra.mxu0 %v2964
          %3447 = vmatprep.subr.bf16.mxu0 %v2973
          %3448 = vmatpush1.bf16.msra.mxu0 %v2972
          %3449 = vmatprep.subr.bf16.mxu0 %v2981
          %3450 = vmatpush1.bf16.msra.mxu0 %v2980
          %3451 = vmatprep.subr.bf16.mxu0 %v2989
          %3452 = vmatpush1.bf16.msra.mxu0 %v2988
          %3453 = vmatprep.subr.bf16.mxu0 %v2997
          %3454 = vmatpush1.bf16.msra.mxu0 %v2996
          %3455 = vmatprep.subr.bf16.mxu0 %v3005
          %3456 = vmatpush1.bf16.msra.mxu0 %v3004
          %3457 = vmatprep.subr.bf16.mxu0 %v3013
          %3458 = vmatpush1.bf16.msra.mxu0 %v3012
          %3459 = vmatprep.subr.bf16.mxu0 %v3021
          %3460 = vmatpush1.bf16.msra.mxu0 %v3020
          %3461 = vmatprep.subr.bf16.mxu0 %v3029
          %3462 = vmatpush1.bf16.msra.mxu0 %v3028
          %3463 = vmatprep.subr.bf16.mxu0 %v3037
          %3464 = vmatpush1.bf16.msra.mxu0 %v3036
          %3465 = vmatprep.subr.bf16.mxu0 %v3045
          %3466 = vmatpush1.bf16.msra.mxu0 %v3044
          %3467 = vmatprep.subr.bf16.mxu0 %v3053
          %3468 = vmatpush1.bf16.msra.mxu0 %v3052
          %3469 = vmatprep.mubr.bf16.mxu0 %v1735
          %3470 = vmatmul.mubr.bf16.gmra.mrb[0].mxu0 %v1734
          %v3471 = vpop.f32.mrb[0].mxu0
          %v3472 = vadd.f32 %v3431, %v3471
          %v3473 = vpop.f32.mrb[0].mxu0
          %v3474 = vadd.f32 %v3433, %v3473
          %v3475 = vpop.f32.mrb[0].mxu0
          %v3476 = vpop.f32.mrb[0].mxu0
          %3477 = vdwg.mxu0
          %3478 = vmatprep.subr.bf16.mxu0 %v2807
          %3479 = vmatpush1.bf16.msra.mxu0 %v2806
          %3480 = vmatprep.subr.bf16.mxu0 %v2815
          %3481 = vmatpush1.bf16.msra.mxu0 %v2814
          %3482 = vmatprep.subr.bf16.mxu0 %v2823
          %3483 = vmatpush1.bf16.msra.mxu0 %v2822
          %3484 = vmatprep.subr.bf16.mxu0 %v2831
          %3485 = vmatpush1.bf16.msra.mxu0 %v2830
          %3486 = vmatprep.subr.bf16.mxu0 %v2839
          %3487 = vmatpush1.bf16.msra.mxu0 %v2838
          %3488 = vmatprep.subr.bf16.mxu0 %v2847
          %3489 = vmatpush1.bf16.msra.mxu0 %v2846
          %3490 = vmatprep.subr.bf16.mxu0 %v2855
          %3491 = vmatpush1.bf16.msra.mxu0 %v2854
          %3492 = vmatprep.subr.bf16.mxu0 %v2863
          %3493 = vmatpush1.bf16.msra.mxu0 %v2862
          %3494 = vmatprep.subr.bf16.mxu0 %v2871
          %3495 = vmatpush1.bf16.msra.mxu0 %v2870
          %3496 = vmatprep.subr.bf16.mxu0 %v2879
          %3497 = vmatpush1.bf16.msra.mxu0 %v2878
          %3498 = vmatprep.subr.bf16.mxu0 %v2887
          %3499 = vmatpush1.bf16.msra.mxu0 %v2886
          %3500 = vmatprep.subr.bf16.mxu0 %v2895
          %3501 = vmatpush1.bf16.msra.mxu0 %v2894
          %3502 = vmatprep.subr.bf16.mxu0 %v2903
          %3503 = vmatpush1.bf16.msra.mxu0 %v2902
          %3504 = vmatprep.subr.bf16.mxu0 %v2911
          %3505 = vmatpush1.bf16.msra.mxu0 %v2910
          %3506 = vmatprep.subr.bf16.mxu0 %v2919
          %3507 = vmatpush1.bf16.msra.mxu0 %v2918
          %3508 = vmatprep.subr.bf16.mxu0 %v2927
          %3509 = vmatpush1.bf16.msra.mxu0 %v2926
          %3510 = vmatprep.mubr.bf16.mxu0 %v1733
          %3511 = vmatmul.mubr.bf16.gmra.mrb[0].mxu0 %v1732
          %v3512 = vpop.f32.mrb[0].mxu0
          %v3513 = vadd.f32 %v2013, %v3512
          %v3514 = vpop.f32.mrb[0].mxu0
          %v3515 = vadd.f32 %v2017, %v3514
          %v3516 = vpop.f32.mrb[0].mxu0
          %v3517 = vpop.f32.mrb[0].mxu0
          %3518 = vdwg.mxu0
          %3519 = vmatprep.subr.bf16.mxu0 %v2935
          %3520 = vmatpush1.bf16.msra.mxu0 %v2934
          %3521 = vmatprep.subr.bf16.mxu0 %v2943
          %3522 = vmatpush1.bf16.msra.mxu0 %v2942
          %3523 = vmatprep.subr.bf16.mxu0 %v2951
          %3524 = vmatpush1.bf16.msra.mxu0 %v2950
          %3525 = vmatprep.subr.bf16.mxu0 %v2959
          %3526 = vmatpush1.bf16.msra.mxu0 %v2958
          %3527 = vmatprep.subr.bf16.mxu0 %v2967
          %3528 = vmatpush1.bf16.msra.mxu0 %v2966
          %3529 = vmatprep.subr.bf16.mxu0 %v2975
          %3530 = vmatpush1.bf16.msra.mxu0 %v2974
          %3531 = vmatprep.subr.bf16.mxu0 %v2983
          %3532 = vmatpush1.bf16.msra.mxu0 %v2982
          %3533 = vmatprep.subr.bf16.mxu0 %v2991
          %3534 = vmatpush1.bf16.msra.mxu0 %v2990
          %3535 = vmatprep.subr.bf16.mxu0 %v2999
          %3536 = vmatpush1.bf16.msra.mxu0 %v2998
          %3537 = vmatprep.subr.bf16.mxu0 %v3007
          %3538 = vmatpush1.bf16.msra.mxu0 %v3006
          %3539 = vmatprep.subr.bf16.mxu0 %v3015
          %3540 = vmatpush1.bf16.msra.mxu0 %v3014
          %3541 = vmatprep.subr.bf16.mxu0 %v3023
          %3542 = vmatpush1.bf16.msra.mxu0 %v3022
          %3543 = vmatprep.subr.bf16.mxu0 %v3031
          %3544 = vmatpush1.bf16.msra.mxu0 %v3030
          %3545 = vmatprep.subr.bf16.mxu0 %v3039
          %3546 = vmatpush1.bf16.msra.mxu0 %v3038
          %3547 = vmatprep.subr.bf16.mxu0 %v3047
          %3548 = vmatpush1.bf16.msra.mxu0 %v3046
          %3549 = vmatprep.subr.bf16.mxu0 %v3055
          %3550 = vmatpush1.bf16.msra.mxu0 %v3054
          %3551 = vmatprep.mubr.bf16.mxu0 %v1735
          %3552 = vmatmul.mubr.bf16.gmra.mrb[0].mxu0 %v1734
          %v3553 = vpop.f32.mrb[0].mxu0
          %v3554 = vadd.f32 %v3513, %v3553
          %v3555 = vpop.f32.mrb[0].mxu0
          %v3556 = vadd.f32 %v3515, %v3555
          %v3557 = vpop.f32.mrb[0].mxu0
          %v3558 = vpop.f32.mrb[0].mxu0
          %3559 = vdwg.mxu0
          %3560 = vmatprep.subr.bf16.mxu0 %v2809
          %3561 = vmatpush1.bf16.msra.mxu0 %v2808
          %3562 = vmatprep.subr.bf16.mxu0 %v2817
          %3563 = vmatpush1.bf16.msra.mxu0 %v2816
          %3564 = vmatprep.subr.bf16.mxu0 %v2825
          %3565 = vmatpush1.bf16.msra.mxu0 %v2824
          %3566 = vmatprep.subr.bf16.mxu0 %v2833
          %3567 = vmatpush1.bf16.msra.mxu0 %v2832
          %3568 = vmatprep.subr.bf16.mxu0 %v2841
          %3569 = vmatpush1.bf16.msra.mxu0 %v2840
          %3570 = vmatprep.subr.bf16.mxu0 %v2849
          %3571 = vmatpush1.bf16.msra.mxu0 %v2848
          %3572 = vmatprep.subr.bf16.mxu0 %v2857
          %3573 = vmatpush1.bf16.msra.mxu0 %v2856
          %3574 = vmatprep.subr.bf16.mxu0 %v2865
          %3575 = vmatpush1.bf16.msra.mxu0 %v2864
          %3576 = vmatprep.subr.bf16.mxu0 %v2873
          %3577 = vmatpush1.bf16.msra.mxu0 %v2872
          %3578 = vmatprep.subr.bf16.mxu0 %v2881
          %3579 = vmatpush1.bf16.msra.mxu0 %v2880
          %3580 = vmatprep.subr.bf16.mxu0 %v2889
          %3581 = vmatpush1.bf16.msra.mxu0 %v2888
          %3582 = vmatprep.subr.bf16.mxu0 %v2897
          %3583 = vmatpush1.bf16.msra.mxu0 %v2896
          %3584 = vmatprep.subr.bf16.mxu0 %v2905
          %3585 = vmatpush1.bf16.msra.mxu0 %v2904
          %3586 = vmatprep.subr.bf16.mxu0 %v2913
          %3587 = vmatpush1.bf16.msra.mxu0 %v2912
          %3588 = vmatprep.subr.bf16.mxu0 %v2921
          %3589 = vmatpush1.bf16.msra.mxu0 %v2920
          %3590 = vmatprep.subr.bf16.mxu0 %v2929
          %3591 = vmatpush1.bf16.msra.mxu0 %v2928
          %3592 = vmatprep.mubr.bf16.mxu0 %v1733
          %3593 = vmatmul.mubr.bf16.gmra.mrb[0].mxu0 %v1732
          %v3594 = vpop.f32.mrb[0].mxu0
          %v3595 = vadd.f32 %v2021, %v3594
          %v3596 = vpop.f32.mrb[0].mxu0
          %v3597 = vadd.f32 %v2025, %v3596
          %v3598 = vpop.f32.mrb[0].mxu0
          %v3599 = vpop.f32.mrb[0].mxu0
          %3600 = vdwg.mxu0
          %3601 = vmatprep.subr.bf16.mxu0 %v2937
          %3602 = vmatpush1.bf16.msra.mxu0 %v2936
          %3603 = vmatprep.subr.bf16.mxu0 %v2945
          %3604 = vmatpush1.bf16.msra.mxu0 %v2944
          %3605 = vmatprep.subr.bf16.mxu0 %v2953
          %3606 = vmatpush1.bf16.msra.mxu0 %v2952
          %3607 = vmatprep.subr.bf16.mxu0 %v2961
          %3608 = vmatpush1.bf16.msra.mxu0 %v2960
          %3609 = vmatprep.subr.bf16.mxu0 %v2969
          %3610 = vmatpush1.bf16.msra.mxu0 %v2968
          %3611 = vmatprep.subr.bf16.mxu0 %v2977
          %3612 = vmatpush1.bf16.msra.mxu0 %v2976
          %3613 = vmatprep.subr.bf16.mxu0 %v2985
          %3614 = vmatpush1.bf16.msra.mxu0 %v2984
          %3615 = vmatprep.subr.bf16.mxu0 %v2993
          %3616 = vmatpush1.bf16.msra.mxu0 %v2992
          %3617 = vmatprep.subr.bf16.mxu0 %v3001
          %3618 = vmatpush1.bf16.msra.mxu0 %v3000
          %3619 = vmatprep.subr.bf16.mxu0 %v3009
          %3620 = vmatpush1.bf16.msra.mxu0 %v3008
          %3621 = vmatprep.subr.bf16.mxu0 %v3017
          %3622 = vmatpush1.bf16.msra.mxu0 %v3016
          %3623 = vmatprep.subr.bf16.mxu0 %v3025
          %3624 = vmatpush1.bf16.msra.mxu0 %v3024
          %3625 = vmatprep.subr.bf16.mxu0 %v3033
          %3626 = vmatpush1.bf16.msra.mxu0 %v3032
          %3627 = vmatprep.subr.bf16.mxu0 %v3041
          %3628 = vmatpush1.bf16.msra.mxu0 %v3040
          %3629 = vmatprep.subr.bf16.mxu0 %v3049
          %3630 = vmatpush1.bf16.msra.mxu0 %v3048
          %3631 = vmatprep.subr.bf16.mxu0 %v3057
          %3632 = vmatpush1.bf16.msra.mxu0 %v3056
          %3633 = vmatprep.mubr.bf16.mxu0 %v1735
          %3634 = vmatmul.mubr.bf16.gmra.mrb[0].mxu0 %v1734
          %v3635 = vpop.f32.mrb[0].mxu0
          %v3636 = vadd.f32 %v3595, %v3635
          %v3637 = vpop.f32.mrb[0].mxu0
          %v3638 = vadd.f32 %v3597, %v3637
          %v3639 = vpop.f32.mrb[0].mxu0
          %v3640 = vpop.f32.mrb[0].mxu0
          %3641 = vdwg.mxu0
          %v3642 = vtanh.pop %v3390
          %v3643 = vtanh.pop %v3392
          %v3644 = vtanh.pop %v3472
          %v3645 = vtanh.pop %v3474
          %v3646 = vtanh.pop %v3554
          %v3647 = vtanh.pop %v3556
          %v3648 = vtanh.pop %v3636
          %v3649 = vtanh.pop %v3638
          %3650 = vst [vmem:[%s334] sm:$0xff] %v3642
          %3651 = vst [vmem:[%s334 + $0x8] sm:$0xff] %v3643
          %3652 = vst [vmem:[%s334 + $0x10] sm:$0xff] %v3644
          %3653 = vst [vmem:[%s334 + $0x18] sm:$0xff] %v3645
          %3654 = vst [vmem:[%s334 + $0x20] sm:$0xff] %v3646
          %3655 = vst [vmem:[%s334 + $0x28] sm:$0xff] %v3647
          %3656 = vst [vmem:[%s334 + $0x30] sm:$0xff] %v3648
          %3657 = vst [vmem:[%s334 + $0x38] sm:$0xff] %v3649
        $region76: #{tpu_custom_call.1} parent=43 // pred_fallthru
          _
        %s3658 = sand.u32 %s176, 1
        %s3659 = scalar_lea.sflag [#allocation6], %s3658
        %s3660 = sand.u32 %s176, 1
        %s3661 = smul.addr %s3660, 64
        %s3662 = scalar_lea.vmem [#allocation13], %s3661
        // Predicated region
        $region77: #{tpu_custom_call.1} parent=43 // pred_check
          %p3663 = pneg %p186
        $region78: #{tpu_custom_call.1} parent=43 // pred_check_branch
          %3665 = sbr.rel (%p3663) target = $region80
        $region79: #{tpu_custom_call.1} parent=43 // pred_region
          %s3667 = ssub.s32 1024, 1024
          %3668 = vsyncadd %s3659, %s3667
          %s3669 = smul.addr %s30, 8
          %s3670 = smul.addr %s3669, 128
          %s3671 = scalar_lea.hbm %s6, %s3670
          %s3673 = sshll.u32 %s3662, 4
          %s3674 = int_to_ptr.vmem [resolvable:$true] %s3673
          %3676 = dma.vmem_to_hbm [thread:$0]  %s3674, 1024, %s3671, %s3659
        $region80: #{tpu_custom_call.1} parent=43 // pred_fallthru
          _
      $region44: #{tpu_custom_call.1} parent=5 // pred_fallthru
        _
      %p3677 = scmp.le.s32.totalorder 2, %s20
      // Predicated region
      $region81: #{tpu_custom_call.1} parent=5 // pred_check
        %p3678 = pneg %p3677
      $region82: #{tpu_custom_call.1} parent=5 // pred_check_branch
        %3680 = sbr.rel (%p3678) target = $region84
      $region83: #{tpu_custom_call.1} parent=5 // pred_region
        %s3681 = ssub.s32 %s20, 2
        // Predicated region
        $region85: #{tpu_custom_call.1} parent=83 // pred_check
          %p3682 = pneg %p192
        $region86: #{tpu_custom_call.1} parent=83 // pred_check_branch
          %3684 = sbr.rel (%p3682) target = $region88
        $region87: #{tpu_custom_call.1} parent=83 // pred_region
          %s3685 = sand.u32 %s177, 1
          %s3686 = scalar_lea.sflag [#allocation6], %s3685
          %s3687 = sand.u32 %s177, 1
          %s3688 = smul.addr %s3687, 64
          %s3689 = scalar_lea.vmem [#allocation13], %s3688
          %3690 = dma.done %s3686, 1024
        $region88: #{tpu_custom_call.1} parent=83 // pred_fallthru
          _
      $region84: #{tpu_custom_call.1} parent=5 // pred_fallthru
        _
    $region6: #{tpu_custom_call.1} parent=1 // loop_footer
      %s24 = sadd.s32 1, %s20
    $region7: #{tpu_custom_call.1} parent=1 // loop_footer_branch
      %19 = sbr.rel target = $region3
    $region8: #{tpu_custom_call.1} parent=1 // loop_exit
      _
    %3691 = vsyncpa [#allocation5], 1
    %s3692 = scalar_lea.sflag [#allocation5], 1
    %3693 = vsyncpa %s3692, 1
    %3694 = vsyncpa [#allocation8], 1
    %3695 = vsyncpa [#allocation11], 1
    %3696 = vsyncpa [#allocation6], 1
    %s3697 = scalar_lea.sflag [#allocation6], 1
    %3698 = vsyncpa %s3697, 1

</llo_original>
